<compile_context>
chip_gen: v5e
topology: v5e:2x2
jax: 0.10.0
libtpu: 0.0.40
codegen_flags: <defaults>
</compile_context>

<pallas_src>
import functools
import math

import jax
import jax.numpy as jnp
from jax.experimental import pallas as pl
from jax.experimental.pallas import tpu as pltpu


MASK_TOKEN_ID = 32                      # <mask> in the 33-token ESM2 vocabulary
TOKEN_DROPOUT_TRAIN_RATIO = 0.15 * 0.8  # ESM2 token_dropout rescale factor


# ----------------------------- helpers --------------------------------------

def _pick_tile(dim, candidates):
    """Largest candidate that divides dim, else the full dim (always a legal block)."""
    for c in candidates:
        if dim % c == 0:
            return c
    return dim


@functools.lru_cache(maxsize=None)
def _vmem_limit_bytes():
    """Scoped-VMEM budget ~= 60% of physical VMEM (v5e/v6e: ~76 MiB, v7x: ~38 MiB),
    never below the 32 MiB default."""
    cap = 64 * 1024 * 1024
    try:
        cap = int(getattr(pltpu.get_tpu_info(), "vmem_capacity_bytes", cap)) or cap
    except Exception:
        pass
    return max(int(cap * 0.6), 32 * 1024 * 1024)


def _heads_per_group(num_heads, head_dim):
    """Heads per attention grid step: slab width hpg*head_dim is a multiple of 128 lanes
    when possible (ESM2-650M: dh=64 -> head pairs), else all heads (tiny models)."""
    if head_dim % 128 == 0:
        return 1
    if (num_heads * head_dim) % 128 == 0 and 128 % head_dim == 0:
        hpg = 128 // head_dim
        if num_heads % hpg == 0:
            return hpg
    return num_heads


def _erf_approx(x):
    # Abramowitz & Stegun 7.1.26 (max abs err ~1.5e-7): exact-GELU without a lax.erf lowering.
    a1, a2, a3, a4, a5 = 0.254829592, -0.284496736, 1.421413741, -1.453152027, 1.061405429
    p = 0.3275911
    sgn = jnp.where(x >= 0, 1.0, -1.0)
    ax = jnp.abs(x)
    t = 1.0 / (1.0 + p * ax)
    poly = ((((a5 * t + a4) * t + a3) * t + a2) * t + a1) * t
    return sgn * (1.0 - poly * jnp.exp(-ax * ax))


def _gelu_exact(x):
    # erf-GELU (matches torch.nn.functional.gelu default), fused into the matmul epilogue.
    return 0.5 * x * (1.0 + _erf_approx(x * 0.7071067811865476))


# ----------------------------- Pallas kernels -------------------------------

def _ln_matmul_kernel(x_ref, g_ref, b_ref, w_ref, bias_ref, o_ref, xn_ref,
                      *, eps, activation):
    """o = act(LayerNorm(x) @ w + bias).  LN is computed ONCE per M tile (j == 0) into a
    bf16 VMEM scratch and reused across all N tiles; matmul runs bf16 on the MXU, f32 acc."""
    @pl.when(pl.program_id(1) == 0)
    def _():
        x = x_ref[...].astype(jnp.float32)                       # (tm, K) full row for LN
        mean = jnp.mean(x, axis=-1, keepdims=True)
        var = jnp.mean(jnp.square(x - mean), axis=-1, keepdims=True)
        xn = (x - mean) * jax.lax.rsqrt(var + eps)
        xn_ref[...] = (xn * g_ref[...] + b_ref[...]).astype(jnp.bfloat16)

    y = jnp.dot(xn_ref[...], w_ref[...], preferred_element_type=jnp.float32)
    y = y + bias_ref[...]
    if activation == "gelu":
        y = _gelu_exact(y)
    elif activation == "relu":
        y = jnp.maximum(y, 0.0)
    o_ref[...] = y.astype(o_ref.dtype)


def fused_ln_matmul(x, g, b, w, bias, *, activation="none",
                    out_dtype=jnp.bfloat16, eps=1e-5):
    """x: (M, K) f32 residual stream, w: (K, N) bf16.  Grid (M/tm, N/tn); K whole (LN row)."""
    M, K = x.shape
    N = w.shape[1]
    tm = _pick_tile(M, (512, 256, 128))            # cap at 512: (tm,K) f32 tile stays v7x-safe
    tn = _pick_tile(N, (640, 512, 1024, 256, 128))  # ESM2: 3D/4D are multiples of 640
    return pl.pallas_call(
        functools.partial(_ln_matmul_kernel, eps=eps, activation=activation),
        out_shape=jax.ShapeDtypeStruct((M, N), out_dtype),
        grid=(M // tm, N // tn),
        in_specs=[
            pl.BlockSpec((tm, K), lambda i, j: (i, 0)),
            pl.BlockSpec((1, K), lambda i, j: (0, 0)),
            pl.BlockSpec((1, K), lambda i, j: (0, 0)),
            pl.BlockSpec((K, tn), lambda i, j: (0, j)),
            pl.BlockSpec((1, tn), lambda i, j: (0, j)),
        ],
        out_specs=pl.BlockSpec((tm, tn), lambda i, j: (i, j)),
        scratch_shapes=[pltpu.VMEM((tm, K), jnp.bfloat16)],
        compiler_params=pltpu.CompilerParams(
            dimension_semantics=("parallel", "arbitrary"),   # N axis reuses the LN scratch
            vmem_limit_bytes=_vmem_limit_bytes()),
    )(x, g.reshape(1, K), b.reshape(1, K), w, bias.reshape(1, N))


def _matmul_res_kernel(x_ref, w_ref, bias_ref, res_ref, o_ref, acc_ref):
    """K-tiled o = x @ w + bias + residual with f32 VMEM accumulator."""
    @pl.when(pl.program_id(2) == 0)
    def _():
        acc_ref[...] = jnp.zeros_like(acc_ref)

    acc_ref[...] += jnp.dot(x_ref[...], w_ref[...],
                            preferred_element_type=jnp.float32)

    @pl.when(pl.program_id(2) == pl.num_programs(2) - 1)
    def _():
        o_ref[...] = (acc_ref[...] + bias_ref[...]
                      + res_ref[...].astype(jnp.float32)).astype(o_ref.dtype)


def matmul_bias_residual(x, w, bias, residual, *, out_dtype=jnp.float32):
    """x: (M, K) bf16, w: (K, N) bf16, residual: (M, N) f32."""
    M, K = x.shape
    N = w.shape[1]
    tm = _pick_tile(M, (512, 256, 128))
    tn = _pick_tile(N, (640, 512, 256, 128))
    tk = _pick_tile(K, (1280, 640, 512, 256, 128))
    return pl.pallas_call(
        _matmul_res_kernel,
        out_shape=jax.ShapeDtypeStruct((M, N), out_dtype),
        grid=(M // tm, N // tn, K // tk),
        in_specs=[
            pl.BlockSpec((tm, tk), lambda i, j, k: (i, k)),
            pl.BlockSpec((tk, tn), lambda i, j, k: (k, j)),
            pl.BlockSpec((1, tn), lambda i, j, k: (0, j)),
            pl.BlockSpec((tm, tn), lambda i, j, k: (i, j)),
        ],
        out_specs=pl.BlockSpec((tm, tn), lambda i, j, k: (i, j)),
        scratch_shapes=[pltpu.VMEM((tm, tn), jnp.float32)],
        compiler_params=pltpu.CompilerParams(
            dimension_semantics=("parallel", "parallel", "arbitrary"),
            vmem_limit_bytes=_vmem_limit_bytes()),
    )(x, w, bias.reshape(1, N), residual)


def _attention_kernel(qkv_ref, bias_ref, cos_ref, sin_ref, rot_ref, o_ref,
                      *, heads_per_group, head_dim, scale):
    """One batch x one head-group per grid step.  Block holds the contiguous packed
    [q|k|v] slab (1, S, 3W), W = heads_per_group*head_dim.  RoPE is applied lane-dense on
    the whole slab: q_rot = q*cos + (q @ R)*sin where R is the per-head +-1 rotate-half
    matrix (tiny MXU matmul, no narrow slices).  One bf16 (S,dh)x(dh,S) score contraction
    per head, softmax in f32, p@v in bf16, single full-width output store."""
    W = heads_per_group * head_dim
    qf = qkv_ref[0, :, :W].astype(jnp.float32) * scale            # (S, W)
    kf = qkv_ref[0, :, W:2 * W].astype(jnp.float32)
    v = qkv_ref[0, :, 2 * W:3 * W]                                 # (S, W) bf16
    cos = cos_ref[...]                                             # (S, W) f32
    sin = sin_ref[...]
    rot = rot_ref[...]                                             # (W, W) bf16, +-1 entries
    bias = bias_ref[0]                                             # (1, S) additive key mask

    q_rh = jnp.dot(qf.astype(jnp.bfloat16), rot, preferred_element_type=jnp.float32)
    k_rh = jnp.dot(kf.astype(jnp.bfloat16), rot, preferred_element_type=jnp.float32)
    q_rot = (qf * cos + q_rh * sin).astype(jnp.bfloat16)
    k_rot = (kf * cos + k_rh * sin).astype(jnp.bfloat16)

    ctx_parts = []
    for h in range(heads_per_group):
        a, b = h * head_dim, (h + 1) * head_dim
        s = jax.lax.dot_general(q_rot[:, a:b], k_rot[:, a:b],
                                (((1,), (1,)), ((), ())),
                                preferred_element_type=jnp.float32)      # (S, S) f32
        s = s + bias
        m = jnp.max(s, axis=-1, keepdims=True)
        p = jnp.exp(s - m)
        p = p * pl.reciprocal(jnp.sum(p, axis=-1, keepdims=True), approx=True)
        ctx_parts.append(jnp.dot(p.astype(v.dtype), v[:, a:b],
                                 preferred_element_type=jnp.float32))
    o_ref[0] = jnp.concatenate(ctx_parts, axis=-1).astype(o_ref.dtype)


def attention(qkv, bias, cos_t, sin_t, rot, num_heads, heads_per_group):
    """qkv: (B, S, 3D) bf16 packed per head-group as [q_g | k_g | v_g]; bias: (B, 1, S) f32.
    TODO(synk): switch to flash-style key tiling (online softmax) for S >~ 1k so the (S,S)
    score matrix is never materialized."""
    B, S, threeD = qkv.shape
    D = threeD // 3
    dh = D // num_heads
    W = heads_per_group * dh
    n_groups = num_heads // heads_per_group
    scale = 1.0 / math.sqrt(dh)
    return pl.pallas_call(
        functools.partial(_attention_kernel, heads_per_group=heads_per_group,
                          head_dim=dh, scale=scale),
        out_shape=jax.ShapeDtypeStruct((B, S, D), jnp.bfloat16),
        grid=(B, n_groups),
        in_specs=[pl.BlockSpec((1, S, 3 * W), lambda b, g: (b, 0, g)),
                  pl.BlockSpec((1, 1, S), lambda b, g: (b, 0, 0)),
                  pl.BlockSpec((S, W), lambda b, g: (0, 0)),
                  pl.BlockSpec((S, W), lambda b, g: (0, 0)),
                  pl.BlockSpec((W, W), lambda b, g: (0, 0))],
        out_specs=pl.BlockSpec((1, S, W), lambda b, g: (b, 0, g)),
        compiler_params=pltpu.CompilerParams(
            dimension_semantics=("parallel", "parallel"),
            vmem_limit_bytes=_vmem_limit_bytes()),
    )(qkv, bias, cos_t, sin_t, rot)


def _heads_kernel(x_ref, g_ref, b_ref, w1_ref, b1_ref, w2_ref, b2_ref, o_ref, *, eps):
    """Final LayerNorm (per-row, CLS rows only) + all three MLP heads in one kernel.
    nn.Dropout(0.3) is identity at inference."""
    x = x_ref[...].astype(jnp.float32)                 # (B, D)
    mean = jnp.mean(x, axis=-1, keepdims=True)
    var = jnp.mean(jnp.square(x - mean), axis=-1, keepdims=True)
    xn = (x - mean) * jax.lax.rsqrt(var + eps)
    xn = xn * g_ref[...] + b_ref[...]
    h1 = jnp.dot(xn.astype(jnp.bfloat16), w1_ref[...],
                 preferred_element_type=jnp.float32) + b1_ref[...]
    h1 = jnp.maximum(h1, 0.0)
    out = jnp.dot(h1.astype(jnp.bfloat16), w2_ref[...],
                  preferred_element_type=jnp.float32) + b2_ref[...]
    o_ref[...] = out.astype(o_ref.dtype)


def fused_heads(pooled, g, b, w1, b1, w2, b2):
    B, D = pooled.shape
    Hd = w1.shape[1]
    O = w2.shape[1]
    return pl.pallas_call(
        functools.partial(_heads_kernel, eps=1e-5),
        out_shape=jax.ShapeDtypeStruct((B, O), jnp.float32),
        grid=(1,),
        in_specs=[pl.BlockSpec((B, D), lambda i: (0, 0)),
                  pl.BlockSpec((1, D), lambda i: (0, 0)),
                  pl.BlockSpec((1, D), lambda i: (0, 0)),
                  pl.BlockSpec((D, Hd), lambda i: (0, 0)),
                  pl.BlockSpec((1, Hd), lambda i: (0, 0)),
                  pl.BlockSpec((Hd, O), lambda i: (0, 0)),
                  pl.BlockSpec((1, O), lambda i: (0, 0))],
        out_specs=pl.BlockSpec((B, O), lambda i: (0, 0)),
    )(pooled, g.reshape(1, D), b.reshape(1, D), w1, b1.reshape(1, Hd),
      w2, b2.reshape(1, O))


# ----------------------------- parameter packing (done ONCE, outside jit) ---

def pack_qkv(wq, bq, wk, bk, wv, bv, num_heads, heads_per_group):
    """Reorder QKV output columns so each head-group g owns a contiguous [q_g|k_g|v_g] slab."""
    D = wq.shape[0]
    dh = D // num_heads
    W = heads_per_group * dh
    ng = num_heads // heads_per_group
    w_parts, b_parts = [], []
    for g in range(ng):
        sl = slice(g * W, (g + 1) * W)
        w_parts += [wq[:, sl], wk[:, sl], wv[:, sl]]
        b_parts += [bq[sl], bk[sl], bv[sl]]
    return jnp.concatenate(w_parts, axis=1), jnp.concatenate(b_parts, axis=0)


def pack_heads(host, vir, rec):
    """Concatenate first layers; block-diagonal second layer -> one tiny fused heads matmul."""
    hid = host["w1"].shape[1]
    n_h, n_v, n_r = host["w2"].shape[1], vir["w2"].shape[1], rec["w2"].shape[1]
    w1 = jnp.concatenate([host["w1"], vir["w1"], rec["w1"]], axis=1)
    b1 = jnp.concatenate([host["b1"], vir["b1"], rec["b1"]], axis=0)
    z = lambda r, c: jnp.zeros((r, c), host["w2"].dtype)
    w2 = jnp.concatenate([
        jnp.concatenate([host["w2"], z(hid, n_v), z(hid, n_r)], axis=1),
        jnp.concatenate([z(hid, n_h), vir["w2"], z(hid, n_r)], axis=1),
        jnp.concatenate([z(hid, n_h), z(hid, n_v), rec["w2"]], axis=1)], axis=0)
    b2 = jnp.concatenate([host["b2"], vir["b2"], rec["b2"]], axis=0)
    return dict(w1=w1, b1=b1, w2=w2, b2=b2)


def rope_tables(seq_len, head_dim, heads_per_group):
    """Lane-dense rotary tables for a head-group slab of width W = heads_per_group*head_dim:
    cos/sin tiled per head (S, W) and the per-head +-1 rotate-half matrix R (W, W) with
    (x @ R)[l] = -x[l+half] for first-half lanes, +x[l-half] for second-half lanes."""
    half = head_dim // 2
    inv_freq = 1.0 / (10000.0 ** (jnp.arange(0, head_dim, 2, dtype=jnp.float32) / head_dim))
    t = jnp.arange(seq_len, dtype=jnp.float32)
    freqs = jnp.outer(t, inv_freq)                                      # (S, half)
    cos_h = jnp.concatenate([jnp.cos(freqs), jnp.cos(freqs)], axis=-1)  # (S, dh)
    sin_h = jnp.concatenate([jnp.sin(freqs), jnp.sin(freqs)], axis=-1)
    cos_t = jnp.tile(cos_h, (1, heads_per_group))                       # (S, W)
    sin_t = jnp.tile(sin_h, (1, heads_per_group))

    W = head_dim * heads_per_group
    j = jnp.arange(W)[:, None]      # input lane
    l = jnp.arange(W)[None, :]      # output lane
    l_first = (l % head_dim) < half
    rot = (jnp.where(l_first & (j == l + half), -1.0, 0.0)
           + jnp.where((~l_first) & (j == l - half), 1.0, 0.0))
    return cos_t, sin_t, rot.astype(jnp.bfloat16)


# ----------------------------- ESM2 model (glue + kernels) ------------------

def esm_layer(h, p, bias, cos_t, sin_t, rot, num_heads, hpg, B, S):
    M, D = h.shape

    # --- self attention (pre-LN, HF EsmAttention): LN1 fused into the (D, 3D) QKV matmul;
    # packed qkv goes straight to the attention kernel (no XLA split / HBM round trip).
    qkv = fused_ln_matmul(h, p["ln1_g"], p["ln1_b"], p["wqkv"], p["bqkv"],
                          out_dtype=jnp.bfloat16)                      # (M, 3D) bf16
    ctx = attention(qkv.reshape(B, S, 3 * D), bias, cos_t, sin_t, rot,
                    num_heads, hpg)                                    # (B, S, D) bf16
    h = matmul_bias_residual(ctx.reshape(M, D), p["wo"], p["bo"], h)   # EsmSelfOutput + residual

    # --- feed forward (pre-LN): LN2 + up-proj + exact GELU fused; down-proj + residual fused
    inter = fused_ln_matmul(h, p["ln2_g"], p["ln2_b"], p["wi"], p["bi"],
                            activation="gelu", out_dtype=jnp.bfloat16)  # (M, 4D) bf16
    h = matmul_bias_residual(inter, p["wo2"], p["bo2"], h)
    return h


def esm_encoder(params, input_ids, attention_mask, num_heads):
    B, S = input_ids.shape
    D = params["word_emb"].shape[1]
    dh = D // num_heads
    hpg = _heads_per_group(num_heads, dh)
    amask = attention_mask.astype(jnp.float32)

    # TODO(synk): EsmEmbeddings token gather + token_dropout rescale stay in JAX glue
    # (data-dependent gather; tiny vs. the encoder).
    emb = params["word_emb"][input_ids]                    # (B, S, D)
    is_mask = (input_ids == MASK_TOKEN_ID)
    emb = jnp.where(is_mask[..., None], 0.0, emb)
    src_len = jnp.sum(amask, axis=-1)
    mask_ratio_obs = jnp.sum(is_mask.astype(jnp.float32) * amask, axis=-1) / src_len
    emb = emb * ((1.0 - TOKEN_DROPOUT_TRAIN_RATIO) / (1.0 - mask_ratio_obs))[:, None, None]
    emb = emb * amask[..., None]

    bias = ((1.0 - amask) * -1e9)[:, None, :]              # (B, 1, S) additive key mask
    cos_t, sin_t, rot = rope_tables(S, dh, hpg)

    h = emb.reshape(B * S, D).astype(jnp.float32)          # residual stream kept in f32
    for p in params["layers"]:
        h = esm_layer(h, p, bias, cos_t, sin_t, rot, num_heads, hpg, B, S)
    return h                                               # (B*S, D), pre-final-LayerNorm


def multitask_esm2_forward(params, input_ids, attention_mask, num_heads):
    B, S = input_ids.shape
    D = params["word_emb"].shape[1]
    h = esm_encoder(params, input_ids, attention_mask, num_heads)

    # last_hidden_state[:, 0]: final LayerNorm is per-row, applied to CLS rows only
    # (fused inside the heads kernel).
    pooled = h.reshape(B, S, D)[:, 0, :]                   # (B, D) f32

    hp = params["heads_pack"]
    out = fused_heads(pooled, params["final_ln_g"], params["final_ln_b"],
                      hp["w1"], hp["b1"], hp["w2"], hp["b2"])
    n_h = params["host_head"]["w2"].shape[1]
    n_v = params["virulence_head"]["w2"].shape[1]
    return {
        "host": out[:, :n_h],
        "virulence": out[:, n_h:n_h + n_v],
        "receptor": out[:, n_h + n_v:],
    }


# ----------------------------- deterministic init ---------------------------

def init_params(key, vocab, hidden, n_layers, n_heads, intermediate):
    keys = iter(jax.random.split(key, 12 * n_layers + 16))
    hpg = _heads_per_group(n_heads, hidden // n_heads)

    def w(shape, scale=0.02, dtype=jnp.bfloat16):
        return (scale * jax.random.normal(next(keys), shape)).astype(dtype)

    zeros = lambda s: jnp.zeros(s, jnp.float32)
    ones = lambda s: jnp.ones(s, jnp.float32)

    layers = []
    for _ in range(n_layers):
        wq, wk, wv = w((hidden, hidden)), w((hidden, hidden)), w((hidden, hidden))
        bq, bk, bv = zeros((hidden,)), zeros((hidden,)), zeros((hidden,))
        wqkv, bqkv = pack_qkv(wq, bq, wk, bk, wv, bv, n_heads, hpg)
        layers.append(dict(
            ln1_g=ones((hidden,)), ln1_b=zeros((hidden,)),
            wqkv=wqkv, bqkv=bqkv,
            wo=w((hidden, hidden)), bo=zeros((hidden,)),
            ln2_g=ones((hidden,)), ln2_b=zeros((hidden,)),
            wi=w((hidden, intermediate)), bi=zeros((intermediate,)),
            wo2=w((intermediate, hidden)), bo2=zeros((hidden,)),
        ))

    def head(out_dim):
        return dict(w1=w((hidden, 256)), b1=zeros((256,)),
                    w2=w((256, out_dim)), b2=zeros((out_dim,)))

    host_head, virulence_head, receptor_head = head(3), head(1), head(1)
    return dict(
        word_emb=w((vocab, hidden), dtype=jnp.float32),
        layers=layers,
        final_ln_g=ones((hidden,)), final_ln_b=zeros((hidden,)),
        host_head=host_head, virulence_head=virulence_head, receptor_head=receptor_head,
        heads_pack=pack_heads(host_head, virulence_head, receptor_head),
    )


# ----------------------------- main ------------------------------------------

if __name__ == "__main__":
    VOCAB, HIDDEN, LAYERS, HEADS, INTER = 33, 32, 2, 4, 64
    B, S = 2, 8

    key = jax.random.PRNGKey(0)
    pkey, idkey = jax.random.split(key)
    params = init_params(pkey, VOCAB, HIDDEN, LAYERS, HEADS, INTER)

    input_ids = jax.random.randint(idkey, (B, S), 4, 24, dtype=jnp.int32)
    attention_mask = jnp.ones((B, S), dtype=jnp.int32).at[1, -2:].set(0)  # some padding

    fwd = jax.jit(functools.partial(multitask_esm2_forward, num_heads=HEADS))
    out = jax.block_until_ready(fwd(params, input_ids, attention_mask))

    assert out["host"].shape == (B, 3)
    assert out["virulence"].shape == (B, 1)
    assert out["receptor"].shape == (B, 1)
    assert all(bool(jnp.all(jnp.isfinite(v))) for v in out.values())
    print("KERNEL_OK")
</pallas_src>

<mosaic_0001>
module attributes {stable_mosaic.version = 11 : i64} {
  func.func @_matmul_res_kernel(%arg0: i32, %arg1: i32, %arg2: i32, %arg3: memref<16x32xbf16, #tpu.memory_space<vmem>>, %arg4: memref<32x32xbf16, #tpu.memory_space<vmem>>, %arg5: memref<1x32xf32, #tpu.memory_space<vmem>>, %arg6: memref<16x32xf32, #tpu.memory_space<vmem>>, %arg7: memref<16x32xf32, #tpu.memory_space<vmem>>, %arg8: memref<16x32xf32, #tpu.memory_space<vmem>>) attributes {dimension_semantics = [#tpu.dimension_semantics<parallel>, #tpu.dimension_semantics<parallel>, #tpu.dimension_semantics<arbitrary>], iteration_bounds = array<i64: 1, 1, 1>, scalar_prefetch = 0 : i64, scratch_operands = 1 : i64, tpu.core_type = #tpu.core_type<tc>, window_params = [{transform_indices = @transform_0, window_bounds = array<i64: 16, 32>}, {transform_indices = @transform_1, window_bounds = array<i64: 32, 32>}, {transform_indices = @transform_2, window_bounds = array<i64: 1, 32>}, {transform_indices = @transform_3, window_bounds = array<i64: 16, 32>}, {transform_indices = @transform_4, window_bounds = array<i64: 16, 32>}]} {
    %c0_i32 = arith.constant 0 : i32
    %0 = arith.cmpi eq, %arg2, %c0_i32 : i32
    %1 = arith.extui %0 : i1 to i32
    %c0_i32_0 = arith.constant 0 : i32
    %2 = arith.cmpi ne, %1, %c0_i32_0 : i32
    scf.if %2 {
      %cst_10 = arith.constant 0.000000e+00 : f32
      %12 = vector.broadcast %cst_10 : f32 to vector<16x32xf32>
      %c0_11 = arith.constant 0 : index
      %c0_12 = arith.constant 0 : index
      %13 = vector.load %arg8[%c0_11, %c0_12] : memref<16x32xf32, #tpu.memory_space<vmem>>, vector<16x32xf32>
      tpu.vector_store %arg8[%c0_11, %c0_12], %12 {strides = array<i32>} : memref<16x32xf32, #tpu.memory_space<vmem>>, vector<16x32xf32>,
    } else {
    }
    %c0 = arith.constant 0 : index
    %c0_1 = arith.constant 0 : index
    %3 = vector.load %arg8[%c0, %c0_1] : memref<16x32xf32, #tpu.memory_space<vmem>>, vector<16x32xf32>
    %c0_2 = arith.constant 0 : index
    %c0_3 = arith.constant 0 : index
    %4 = vector.load %arg3[%c0_2, %c0_3] : memref<16x32xbf16, #tpu.memory_space<vmem>>, vector<16x32xbf16>
    %c0_4 = arith.constant 0 : index
    %c0_5 = arith.constant 0 : index
    %5 = vector.load %arg4[%c0_4, %c0_5] : memref<32x32xbf16, #tpu.memory_space<vmem>>, vector<32x32xbf16>
    %cst = arith.constant dense<0.000000e+00> : vector<16x32xf32>
    %6 = tpu.matmul %4, %5, %cst {dimension_numbers = #tpu.dot_dimension_numbers<[1], [0], [0], [1], [0, 0, 1, 1], [], []>} : vector<16x32xbf16>, vector<32x32xbf16>, vector<16x32xf32> -> vector<16x32xf32>
    %7 = arith.addf %3, %6 : vector<16x32xf32>
    %c0_6 = arith.constant 0 : index
    %c0_7 = arith.constant 0 : index
    %8 = vector.load %arg8[%c0_6, %c0_7] : memref<16x32xf32, #tpu.memory_space<vmem>>, vector<16x32xf32>
    tpu.vector_store %arg8[%c0_6, %c0_7], %7 {strides = array<i32>} : memref<16x32xf32, #tpu.memory_space<vmem>>, vector<16x32xf32>,
    %c0_i32_8 = arith.constant 0 : i32
    %9 = arith.cmpi eq, %arg2, %c0_i32_8 : i32
    %10 = arith.extui %9 : i1 to i32
    %c0_i32_9 = arith.constant 0 : i32
    %11 = arith.cmpi ne, %10, %c0_i32_9 : i32
    scf.if %11 {
      %c0_10 = arith.constant 0 : index
      %c0_11 = arith.constant 0 : index
      %12 = vector.load %arg8[%c0_10, %c0_11] : memref<16x32xf32, #tpu.memory_space<vmem>>, vector<16x32xf32>
      %c0_12 = arith.constant 0 : index
      %c0_13 = arith.constant 0 : index
      %13 = vector.load %arg5[%c0_12, %c0_13] : memref<1x32xf32, #tpu.memory_space<vmem>>, vector<1x32xf32>
      %14 = vector.broadcast %13 : vector<1x32xf32> to vector<16x32xf32>
      %15 = arith.addf %12, %14 : vector<16x32xf32>
      %c0_14 = arith.constant 0 : index
      %c0_15 = arith.constant 0 : index
      %16 = vector.load %arg6[%c0_14, %c0_15] : memref<16x32xf32, #tpu.memory_space<vmem>>, vector<16x32xf32>
      %17 = arith.addf %15, %16 : vector<16x32xf32>
      %c0_16 = arith.constant 0 : index
      %c0_17 = arith.constant 0 : index
      %18 = vector.load %arg7[%c0_16, %c0_17] : memref<16x32xf32, #tpu.memory_space<vmem>>, vector<16x32xf32>
      tpu.vector_store %arg7[%c0_16, %c0_17], %17 {strides = array<i32>} : memref<16x32xf32, #tpu.memory_space<vmem>>, vector<16x32xf32>,
    } else {
    }
    return
  }
  func.func @transform_0(%arg0: i32, %arg1: i32, %arg2: i32) -> (i32, i32) {
    %c0_i32 = arith.constant 0 : i32
    return %arg0, %arg2 : i32, i32
  }
  func.func @transform_1(%arg0: i32, %arg1: i32, %arg2: i32) -> (i32, i32) {
    %c0_i32 = arith.constant 0 : i32
    return %arg2, %arg1 : i32, i32
  }
  func.func @transform_2(%arg0: i32, %arg1: i32, %arg2: i32) -> (i32, i32) {
    %c0_i32 = arith.constant 0 : i32
    %c0_i32_0 = arith.constant 0 : i32
    return %c0_i32, %arg1 : i32, i32
  }
  func.func @transform_3(%arg0: i32, %arg1: i32, %arg2: i32) -> (i32, i32) {
    %c0_i32 = arith.constant 0 : i32
    return %arg0, %arg1 : i32, i32
  }
  func.func @transform_4(%arg0: i32, %arg1: i32, %arg2: i32) -> (i32, i32) {
    %c0_i32 = arith.constant 0 : i32
    return %arg0, %arg1 : i32, i32
  }
}

module attributes {stable_mosaic.version = 11 : i64} {
  func.func @_ln_matmul_kernel(%arg0: i32, %arg1: i32, %arg2: memref<16x32xf32, #tpu.memory_space<vmem>>, %arg3: memref<1x32xf32, #tpu.memory_space<vmem>>, %arg4: memref<1x32xf32, #tpu.memory_space<vmem>>, %arg5: memref<32x96xbf16, #tpu.memory_space<vmem>>, %arg6: memref<1x96xf32, #tpu.memory_space<vmem>>, %arg7: memref<16x96xbf16, #tpu.memory_space<vmem>>, %arg8: memref<16x32xbf16, #tpu.memory_space<vmem>>) attributes {dimension_semantics = [#tpu.dimension_semantics<parallel>, #tpu.dimension_semantics<arbitrary>], iteration_bounds = array<i64: 1, 1>, scalar_prefetch = 0 : i64, scratch_operands = 1 : i64, tpu.core_type = #tpu.core_type<tc>, window_params = [{transform_indices = @transform_0, window_bounds = array<i64: 16, 32>}, {pipeline_mode = #tpu.pipeline_mode<synchronous>, transform_indices = @transform_1, window_bounds = array<i64: 1, 32>}, {pipeline_mode = #tpu.pipeline_mode<synchronous>, transform_indices = @transform_2, window_bounds = array<i64: 1, 32>}, {transform_indices = @transform_3, window_bounds = array<i64: 32, 96>}, {transform_indices = @transform_4, window_bounds = array<i64: 1, 96>}, {transform_indices = @transform_5, window_bounds = array<i64: 16, 96>}]} {
    %c0_i32 = arith.constant 0 : i32
    %0 = arith.cmpi eq, %arg1, %c0_i32 : i32
    %1 = arith.extui %0 : i1 to i32
    %c0_i32_0 = arith.constant 0 : i32
    %2 = arith.cmpi ne, %1, %c0_i32_0 : i32
    scf.if %2 {
      %c0_8 = arith.constant 0 : index
      %c0_9 = arith.constant 0 : index
      %11 = vector.load %arg2[%c0_8, %c0_9] : memref<16x32xf32, #tpu.memory_space<vmem>>, vector<16x32xf32>
      %cst_10 = arith.constant dense<0.000000e+00> : vector<16xf32>
      %12 = vector.multi_reduction <add>, %11, %cst_10 [1] : vector<16x32xf32> to vector<16xf32>
      %13 = vector.shape_cast %12 : vector<16xf32> to vector<16x1xf32>
      %cst_11 = arith.constant 3.200000e+01 : f32
      %14 = vector.broadcast %cst_11 : f32 to vector<16x1xf32>
      %15 = arith.divf %13, %14 : vector<16x1xf32>
      %16 = vector.broadcast %15 : vector<16x1xf32> to vector<16x32xf32>
      %17 = arith.subf %11, %16 : vector<16x32xf32>
      %18 = arith.mulf %17, %17 : vector<16x32xf32>
      %cst_12 = arith.constant dense<0.000000e+00> : vector<16xf32>
      %19 = vector.multi_reduction <add>, %18, %cst_12 [1] : vector<16x32xf32> to vector<16xf32>
      %20 = vector.shape_cast %19 : vector<16xf32> to vector<16x1xf32>
      %cst_13 = arith.constant 3.200000e+01 : f32
      %21 = vector.broadcast %cst_13 : f32 to vector<16x1xf32>
      %22 = arith.divf %20, %21 : vector<16x1xf32>
      %23 = vector.broadcast %15 : vector<16x1xf32> to vector<16x32xf32>
      %24 = arith.subf %11, %23 : vector<16x32xf32>
      %cst_14 = arith.constant 9.99999974E-6 : f32
      %25 = vector.broadcast %cst_14 : f32 to vector<16x1xf32>
      %26 = arith.addf %22, %25 : vector<16x1xf32>
      %27 = math.rsqrt %26 : vector<16x1xf32>
      %28 = vector.broadcast %27 : vector<16x1xf32> to vector<16x32xf32>
      %29 = arith.mulf %24, %28 : vector<16x32xf32>
      %c0_15 = arith.constant 0 : index
      %c0_16 = arith.constant 0 : index
      %30 = vector.load %arg3[%c0_15, %c0_16] : memref<1x32xf32, #tpu.memory_space<vmem>>, vector<1x32xf32>
      %31 = vector.broadcast %30 : vector<1x32xf32> to vector<16x32xf32>
      %32 = arith.mulf %29, %31 : vector<16x32xf32>
      %c0_17 = arith.constant 0 : index
      %c0_18 = arith.constant 0 : index
      %33 = vector.load %arg4[%c0_17, %c0_18] : memref<1x32xf32, #tpu.memory_space<vmem>>, vector<1x32xf32>
      %34 = vector.broadcast %33 : vector<1x32xf32> to vector<16x32xf32>
      %35 = arith.addf %32, %34 : vector<16x32xf32>
      %36 = arith.truncf %35 : vector<16x32xf32> to vector<16x32xbf16>
      %c0_19 = arith.constant 0 : index
      %c0_20 = arith.constant 0 : index
      %37 = vector.load %arg8[%c0_19, %c0_20] : memref<16x32xbf16, #tpu.memory_space<vmem>>, vector<16x32xbf16>
      tpu.vector_store %arg8[%c0_19, %c0_20], %36 {strides = array<i32>} : memref<16x32xbf16, #tpu.memory_space<vmem>>, vector<16x32xbf16>,
    } else {
    }
    %c0 = arith.constant 0 : index
    %c0_1 = arith.constant 0 : index
    %3 = vector.load %arg8[%c0, %c0_1] : memref<16x32xbf16, #tpu.memory_space<vmem>>, vector<16x32xbf16>
    %c0_2 = arith.constant 0 : index
    %c0_3 = arith.constant 0 : index
    %4 = vector.load %arg5[%c0_2, %c0_3] : memref<32x96xbf16, #tpu.memory_space<vmem>>, vector<32x96xbf16>
    %cst = arith.constant dense<0.000000e+00> : vector<16x96xf32>
    %5 = tpu.matmul %3, %4, %cst {dimension_numbers = #tpu.dot_dimension_numbers<[1], [0], [0], [1], [0, 0, 1, 1], [], []>} : vector<16x32xbf16>, vector<32x96xbf16>, vector<16x96xf32> -> vector<16x96xf32>
    %c0_4 = arith.constant 0 : index
    %c0_5 = arith.constant 0 : index
    %6 = vector.load %arg6[%c0_4, %c0_5] : memref<1x96xf32, #tpu.memory_space<vmem>>, vector<1x96xf32>
    %7 = vector.broadcast %6 : vector<1x96xf32> to vector<16x96xf32>
    %8 = arith.addf %5, %7 : vector<16x96xf32>
    %9 = arith.truncf %8 : vector<16x96xf32> to vector<16x96xbf16>
    %c0_6 = arith.constant 0 : index
    %c0_7 = arith.constant 0 : index
    %10 = vector.load %arg7[%c0_6, %c0_7] : memref<16x96xbf16, #tpu.memory_space<vmem>>, vector<16x96xbf16>
    tpu.vector_store %arg7[%c0_6, %c0_7], %9 {strides = array<i32>} : memref<16x96xbf16, #tpu.memory_space<vmem>>, vector<16x96xbf16>,
    return
  }
  func.func @transform_0(%arg0: i32, %arg1: i32) -> (i32, i32) {
    %c0_i32 = arith.constant 0 : i32
    %c0_i32_0 = arith.constant 0 : i32
    return %arg0, %c0_i32 : i32, i32
  }
  func.func @transform_1(%arg0: i32, %arg1: i32) -> (i32, i32) {
    %c0_i32 = arith.constant 0 : i32
    %c0_i32_0 = arith.constant 0 : i32
    %c0_i32_1 = arith.constant 0 : i32
    return %c0_i32, %c0_i32_0 : i32, i32
  }
  func.func @transform_2(%arg0: i32, %arg1: i32) -> (i32, i32) {
    %c0_i32 = arith.constant 0 : i32
    %c0_i32_0 = arith.constant 0 : i32
    %c0_i32_1 = arith.constant 0 : i32
    return %c0_i32, %c0_i32_0 : i32, i32
  }
  func.func @transform_3(%arg0: i32, %arg1: i32) -> (i32, i32) {
    %c0_i32 = arith.constant 0 : i32
    %c0_i32_0 = arith.constant 0 : i32
    return %c0_i32, %arg1 : i32, i32
  }
  func.func @transform_4(%arg0: i32, %arg1: i32) -> (i32, i32) {
    %c0_i32 = arith.constant 0 : i32
    %c0_i32_0 = arith.constant 0 : i32
    return %c0_i32, %arg1 : i32, i32
  }
  func.func @transform_5(%arg0: i32, %arg1: i32) -> (i32, i32) {
    %c0_i32 = arith.constant 0 : i32
    return %arg0, %arg1 : i32, i32
  }
}

module attributes {stable_mosaic.version = 11 : i64} {
  func.func @_ln_matmul_kernel(%arg0: i32, %arg1: i32, %arg2: memref<16x32xf32, #tpu.memory_space<vmem>>, %arg3: memref<1x32xf32, #tpu.memory_space<vmem>>, %arg4: memref<1x32xf32, #tpu.memory_space<vmem>>, %arg5: memref<32x64xbf16, #tpu.memory_space<vmem>>, %arg6: memref<1x64xf32, #tpu.memory_space<vmem>>, %arg7: memref<16x64xbf16, #tpu.memory_space<vmem>>, %arg8: memref<16x32xbf16, #tpu.memory_space<vmem>>) attributes {dimension_semantics = [#tpu.dimension_semantics<parallel>, #tpu.dimension_semantics<arbitrary>], iteration_bounds = array<i64: 1, 1>, scalar_prefetch = 0 : i64, scratch_operands = 1 : i64, tpu.core_type = #tpu.core_type<tc>, window_params = [{transform_indices = @transform_0, window_bounds = array<i64: 16, 32>}, {pipeline_mode = #tpu.pipeline_mode<synchronous>, transform_indices = @transform_1, window_bounds = array<i64: 1, 32>}, {pipeline_mode = #tpu.pipeline_mode<synchronous>, transform_indices = @transform_2, window_bounds = array<i64: 1, 32>}, {transform_indices = @transform_3, window_bounds = array<i64: 32, 64>}, {transform_indices = @transform_4, window_bounds = array<i64: 1, 64>}, {transform_indices = @transform_5, window_bounds = array<i64: 16, 64>}]} {
    %c0_i32 = arith.constant 0 : i32
    %0 = arith.cmpi eq, %arg1, %c0_i32 : i32
    %1 = arith.extui %0 : i1 to i32
    %c0_i32_0 = arith.constant 0 : i32
    %2 = arith.cmpi ne, %1, %c0_i32_0 : i32
    scf.if %2 {
      %c0_24 = arith.constant 0 : index
      %c0_25 = arith.constant 0 : index
      %52 = vector.load %arg2[%c0_24, %c0_25] : memref<16x32xf32, #tpu.memory_space<vmem>>, vector<16x32xf32>
      %cst_26 = arith.constant dense<0.000000e+00> : vector<16xf32>
      %53 = vector.multi_reduction <add>, %52, %cst_26 [1] : vector<16x32xf32> to vector<16xf32>
      %54 = vector.shape_cast %53 : vector<16xf32> to vector<16x1xf32>
      %cst_27 = arith.constant 3.200000e+01 : f32
      %55 = vector.broadcast %cst_27 : f32 to vector<16x1xf32>
      %56 = arith.divf %54, %55 : vector<16x1xf32>
      %57 = vector.broadcast %56 : vector<16x1xf32> to vector<16x32xf32>
      %58 = arith.subf %52, %57 : vector<16x32xf32>
      %59 = arith.mulf %58, %58 : vector<16x32xf32>
      %cst_28 = arith.constant dense<0.000000e+00> : vector<16xf32>
      %60 = vector.multi_reduction <add>, %59, %cst_28 [1] : vector<16x32xf32> to vector<16xf32>
      %61 = vector.shape_cast %60 : vector<16xf32> to vector<16x1xf32>
      %cst_29 = arith.constant 3.200000e+01 : f32
      %62 = vector.broadcast %cst_29 : f32 to vector<16x1xf32>
      %63 = arith.divf %61, %62 : vector<16x1xf32>
      %64 = vector.broadcast %56 : vector<16x1xf32> to vector<16x32xf32>
      %65 = arith.subf %52, %64 : vector<16x32xf32>
      %cst_30 = arith.constant 9.99999974E-6 : f32
      %66 = vector.broadcast %cst_30 : f32 to vector<16x1xf32>
      %67 = arith.addf %63, %66 : vector<16x1xf32>
      %68 = math.rsqrt %67 : vector<16x1xf32>
      %69 = vector.broadcast %68 : vector<16x1xf32> to vector<16x32xf32>
      %70 = arith.mulf %65, %69 : vector<16x32xf32>
      %c0_31 = arith.constant 0 : index
      %c0_32 = arith.constant 0 : index
      %71 = vector.load %arg3[%c0_31, %c0_32] : memref<1x32xf32, #tpu.memory_space<vmem>>, vector<1x32xf32>
      %72 = vector.broadcast %71 : vector<1x32xf32> to vector<16x32xf32>
      %73 = arith.mulf %70, %72 : vector<16x32xf32>
      %c0_33 = arith.constant 0 : index
      %c0_34 = arith.constant 0 : index
      %74 = vector.load %arg4[%c0_33, %c0_34] : memref<1x32xf32, #tpu.memory_space<vmem>>, vector<1x32xf32>
      %75 = vector.broadcast %74 : vector<1x32xf32> to vector<16x32xf32>
      %76 = arith.addf %73, %75 : vector<16x32xf32>
      %77 = arith.truncf %76 : vector<16x32xf32> to vector<16x32xbf16>
      %c0_35 = arith.constant 0 : index
      %c0_36 = arith.constant 0 : index
      %78 = vector.load %arg8[%c0_35, %c0_36] : memref<16x32xbf16, #tpu.memory_space<vmem>>, vector<16x32xbf16>
      tpu.vector_store %arg8[%c0_35, %c0_36], %77 {strides = array<i32>} : memref<16x32xbf16, #tpu.memory_space<vmem>>, vector<16x32xbf16>,
    } else {
    }
    %c0 = arith.constant 0 : index
    %c0_1 = arith.constant 0 : index
    %3 = vector.load %arg8[%c0, %c0_1] : memref<16x32xbf16, #tpu.memory_space<vmem>>, vector<16x32xbf16>
    %c0_2 = arith.constant 0 : index
    %c0_3 = arith.constant 0 : index
    %4 = vector.load %arg5[%c0_2, %c0_3] : memref<32x64xbf16, #tpu.memory_space<vmem>>, vector<32x64xbf16>
    %cst = arith.constant dense<0.000000e+00> : vector<16x64xf32>
    %5 = tpu.matmul %3, %4, %cst {dimension_numbers = #tpu.dot_dimension_numbers<[1], [0], [0], [1], [0, 0, 1, 1], [], []>} : vector<16x32xbf16>, vector<32x64xbf16>, vector<16x64xf32> -> vector<16x64xf32>
    %c0_4 = arith.constant 0 : index
    %c0_5 = arith.constant 0 : index
    %6 = vector.load %arg6[%c0_4, %c0_5] : memref<1x64xf32, #tpu.memory_space<vmem>>, vector<1x64xf32>
    %7 = vector.broadcast %6 : vector<1x64xf32> to vector<16x64xf32>
    %8 = arith.addf %5, %7 : vector<16x64xf32>
    %cst_6 = arith.constant 5.000000e-01 : f32
    %9 = vector.broadcast %cst_6 : f32 to vector<16x64xf32>
    %10 = arith.mulf %9, %8 : vector<16x64xf32>
    %cst_7 = arith.constant 0.707106769 : f32
    %11 = vector.broadcast %cst_7 : f32 to vector<16x64xf32>
    %12 = arith.mulf %8, %11 : vector<16x64xf32>
    %cst_8 = arith.constant 0.000000e+00 : f32
    %13 = vector.broadcast %cst_8 : f32 to vector<16x64xf32>
    %14 = arith.cmpf oge, %12, %13 : vector<16x64xf32>
    %cst_9 = arith.constant 1.000000e+00 : f32
    %cst_10 = arith.constant -1.000000e+00 : f32
    %15 = vector.broadcast %cst_9 : f32 to vector<16x64xf32>
    %16 = vector.broadcast %cst_10 : f32 to vector<16x64xf32>
    %17 = arith.select %14, %15, %16 : vector<16x64xi1>, vector<16x64xf32>
    %18 = math.absf %12 : vector<16x64xf32>
    %cst_11 = arith.constant 0.327591091 : f32
    %19 = vector.broadcast %cst_11 : f32 to vector<16x64xf32>
    %20 = arith.mulf %19, %18 : vector<16x64xf32>
    %cst_12 = arith.constant 1.000000e+00 : f32
    %21 = vector.broadcast %cst_12 : f32 to vector<16x64xf32>
    %22 = arith.addf %21, %20 : vector<16x64xf32>
    %cst_13 = arith.constant 1.000000e+00 : f32
    %23 = vector.broadcast %cst_13 : f32 to vector<16x64xf32>
    %24 = arith.divf %23, %22 : vector<16x64xf32>
    %cst_14 = arith.constant 1.06140542 : f32
    %25 = vector.broadcast %cst_14 : f32 to vector<16x64xf32>
    %26 = arith.mulf %25, %24 : vector<16x64xf32>
    %cst_15 = arith.constant -1.45315206 : f32
    %27 = vector.broadcast %cst_15 : f32 to vector<16x64xf32>
    %28 = arith.addf %26, %27 : vector<16x64xf32>
    %29 = arith.mulf %28, %24 : vector<16x64xf32>
    %cst_16 = arith.constant 1.42141378 : f32
    %30 = vector.broadcast %cst_16 : f32 to vector<16x64xf32>
    %31 = arith.addf %29, %30 : vector<16x64xf32>
    %32 = arith.mulf %31, %24 : vector<16x64xf32>
    %cst_17 = arith.constant -0.284496725 : f32
    %33 = vector.broadcast %cst_17 : f32 to vector<16x64xf32>
    %34 = arith.addf %32, %33 : vector<16x64xf32>
    %35 = arith.mulf %34, %24 : vector<16x64xf32>
    %cst_18 = arith.constant 0.254829586 : f32
    %36 = vector.broadcast %cst_18 : f32 to vector<16x64xf32>
    %37 = arith.addf %35, %36 : vector<16x64xf32>
    %38 = arith.mulf %37, %24 : vector<16x64xf32>
    %cst_19 = arith.constant 0.000000e+00 : f32
    %39 = vector.broadcast %cst_19 : f32 to vector<16x64xf32>
    %40 = arith.subf %39, %18 : vector<16x64xf32>
    %41 = arith.mulf %40, %18 : vector<16x64xf32>
    %42 = math.exp %41 : vector<16x64xf32>
    %43 = arith.mulf %38, %42 : vector<16x64xf32>
    %cst_20 = arith.constant 1.000000e+00 : f32
    %44 = vector.broadcast %cst_20 : f32 to vector<16x64xf32>
    %45 = arith.subf %44, %43 : vector<16x64xf32>
    %46 = arith.mulf %17, %45 : vector<16x64xf32>
    %cst_21 = arith.constant 1.000000e+00 : f32
    %47 = vector.broadcast %cst_21 : f32 to vector<16x64xf32>
    %48 = arith.addf %47, %46 : vector<16x64xf32>
    %49 = arith.mulf %10, %48 : vector<16x64xf32>
    %50 = arith.truncf %49 : vector<16x64xf32> to vector<16x64xbf16>
    %c0_22 = arith.constant 0 : index
    %c0_23 = arith.constant 0 : index
    %51 = vector.load %arg7[%c0_22, %c0_23] : memref<16x64xbf16, #tpu.memory_space<vmem>>, vector<16x64xbf16>
    tpu.vector_store %arg7[%c0_22, %c0_23], %50 {strides = array<i32>} : memref<16x64xbf16, #tpu.memory_space<vmem>>, vector<16x64xbf16>,
    return
  }
  func.func @transform_0(%arg0: i32, %arg1: i32) -> (i32, i32) {
    %c0_i32 = arith.constant 0 : i32
    %c0_i32_0 = arith.constant 0 : i32
    return %arg0, %c0_i32 : i32, i32
  }
  func.func @transform_1(%arg0: i32, %arg1: i32) -> (i32, i32) {
    %c0_i32 = arith.constant 0 : i32
    %c0_i32_0 = arith.constant 0 : i32
    %c0_i32_1 = arith.constant 0 : i32
    return %c0_i32, %c0_i32_0 : i32, i32
  }
  func.func @transform_2(%arg0: i32, %arg1: i32) -> (i32, i32) {
    %c0_i32 = arith.constant 0 : i32
    %c0_i32_0 = arith.constant 0 : i32
    %c0_i32_1 = arith.constant 0 : i32
    return %c0_i32, %c0_i32_0 : i32, i32
  }
  func.func @transform_3(%arg0: i32, %arg1: i32) -> (i32, i32) {
    %c0_i32 = arith.constant 0 : i32
    %c0_i32_0 = arith.constant 0 : i32
    return %c0_i32, %arg1 : i32, i32
  }
  func.func @transform_4(%arg0: i32, %arg1: i32) -> (i32, i32) {
    %c0_i32 = arith.constant 0 : i32
    %c0_i32_0 = arith.constant 0 : i32
    return %c0_i32, %arg1 : i32, i32
  }
  func.func @transform_5(%arg0: i32, %arg1: i32) -> (i32, i32) {
    %c0_i32 = arith.constant 0 : i32
    return %arg0, %arg1 : i32, i32
  }
}

module attributes {stable_mosaic.version = 11 : i64} {
  func.func @_attention_kernel(%arg0: i32, %arg1: i32, %arg2: memref<1x8x96xbf16, #tpu.memory_space<vmem>>, %arg3: memref<1x1x8xf32, #tpu.memory_space<vmem>>, %arg4: memref<8x32xf32, #tpu.memory_space<vmem>>, %arg5: memref<8x32xf32, #tpu.memory_space<vmem>>, %arg6: memref<32x32xbf16, #tpu.memory_space<vmem>>, %arg7: memref<1x8x32xbf16, #tpu.memory_space<vmem>>) attributes {dimension_semantics = [#tpu.dimension_semantics<parallel>, #tpu.dimension_semantics<parallel>], iteration_bounds = array<i64: 2, 1>, scalar_prefetch = 0 : i64, scratch_operands = 0 : i64, tpu.core_type = #tpu.core_type<tc>, window_params = [{transform_indices = @transform_0, window_bounds = array<i64: 1, 8, 96>}, {transform_indices = @transform_1, window_bounds = array<i64: 1, 1, 8>}, {pipeline_mode = #tpu.pipeline_mode<synchronous>, transform_indices = @transform_2, window_bounds = array<i64: 8, 32>}, {pipeline_mode = #tpu.pipeline_mode<synchronous>, transform_indices = @transform_3, window_bounds = array<i64: 8, 32>}, {pipeline_mode = #tpu.pipeline_mode<synchronous>, transform_indices = @transform_4, window_bounds = array<i64: 32, 32>}, {transform_indices = @transform_5, window_bounds = array<i64: 1, 8, 32>}]} {
    %c0 = arith.constant 0 : index
    %c0_0 = arith.constant 0 : index
    %c0_1 = arith.constant 0 : index
    %0 = vector.load %arg2[%c0, %c0_0, %c0_1] : memref<1x8x96xbf16, #tpu.memory_space<vmem>>, vector<1x8x32xbf16>
    %1 = vector.shape_cast %0 : vector<1x8x32xbf16> to vector<8x32xbf16>
    %2 = arith.extf %1 : vector<8x32xbf16> to vector<8x32xf32>
    %cst = arith.constant 0.353553385 : f32
    %3 = vector.broadcast %cst : f32 to vector<8x32xf32>
    %4 = arith.mulf %2, %3 : vector<8x32xf32>
    %c0_2 = arith.constant 0 : index
    %c0_3 = arith.constant 0 : index
    %c32 = arith.constant 32 : index
    %5 = vector.load %arg2[%c0_2, %c0_3, %c32] : memref<1x8x96xbf16, #tpu.memory_space<vmem>>, vector<1x8x32xbf16>
    %6 = vector.shape_cast %5 : vector<1x8x32xbf16> to vector<8x32xbf16>
    %7 = arith.extf %6 : vector<8x32xbf16> to vector<8x32xf32>
    %c0_4 = arith.constant 0 : index
    %c0_5 = arith.constant 0 : index
    %c64 = arith.constant 64 : index
    %8 = vector.load %arg2[%c0_4, %c0_5, %c64] : memref<1x8x96xbf16, #tpu.memory_space<vmem>>, vector<1x8x32xbf16>
    %9 = vector.shape_cast %8 : vector<1x8x32xbf16> to vector<8x32xbf16>
    %c0_6 = arith.constant 0 : index
    %c0_7 = arith.constant 0 : index
    %10 = vector.load %arg4[%c0_6, %c0_7] : memref<8x32xf32, #tpu.memory_space<vmem>>, vector<8x32xf32>
    %c0_8 = arith.constant 0 : index
    %c0_9 = arith.constant 0 : index
    %11 = vector.load %arg5[%c0_8, %c0_9] : memref<8x32xf32, #tpu.memory_space<vmem>>, vector<8x32xf32>
    %c0_10 = arith.constant 0 : index
    %c0_11 = arith.constant 0 : index
    %12 = vector.load %arg6[%c0_10, %c0_11] : memref<32x32xbf16, #tpu.memory_space<vmem>>, vector<32x32xbf16>
    %c0_12 = arith.constant 0 : index
    %c0_13 = arith.constant 0 : index
    %c0_14 = arith.constant 0 : index
    %13 = vector.load %arg3[%c0_12, %c0_13, %c0_14] : memref<1x1x8xf32, #tpu.memory_space<vmem>>, vector<1x1x8xf32>
    %14 = vector.shape_cast %13 : vector<1x1x8xf32> to vector<1x8xf32>
    %15 = arith.truncf %4 : vector<8x32xf32> to vector<8x32xbf16>
    %cst_15 = arith.constant dense<0.000000e+00> : vector<8x32xf32>
    %16 = tpu.matmul %15, %12, %cst_15 {dimension_numbers = #tpu.dot_dimension_numbers<[1], [0], [0], [1], [0, 0, 1, 1], [], []>} : vector<8x32xbf16>, vector<32x32xbf16>, vector<8x32xf32> -> vector<8x32xf32>
    %17 = arith.truncf %7 : vector<8x32xf32> to vector<8x32xbf16>
    %cst_16 = arith.constant dense<0.000000e+00> : vector<8x32xf32>
    %18 = tpu.matmul %17, %12, %cst_16 {dimension_numbers = #tpu.dot_dimension_numbers<[1], [0], [0], [1], [0, 0, 1, 1], [], []>} : vector<8x32xbf16>, vector<32x32xbf16>, vector<8x32xf32> -> vector<8x32xf32>
    %19 = arith.mulf %4, %10 : vector<8x32xf32>
    %20 = arith.mulf %16, %11 : vector<8x32xf32>
    %21 = arith.addf %19, %20 : vector<8x32xf32>
    %22 = arith.truncf %21 : vector<8x32xf32> to vector<8x32xbf16>
    %23 = arith.mulf %7, %10 : vector<8x32xf32>
    %24 = arith.mulf %18, %11 : vector<8x32xf32>
    %25 = arith.addf %23, %24 : vector<8x32xf32>
    %26 = arith.truncf %25 : vector<8x32xf32> to vector<8x32xbf16>
    %27 = vector.extract_strided_slice %22 {offsets = [0, 0], sizes = [8, 8], strides = [1, 1]} : vector<8x32xbf16> to vector<8x8xbf16>
    %28 = vector.extract_strided_slice %26 {offsets = [0, 0], sizes = [8, 8], strides = [1, 1]} : vector<8x32xbf16> to vector<8x8xbf16>
    %cst_17 = arith.constant dense<0.000000e+00> : vector<8x8xf32>
    %29 = tpu.matmul %27, %28, %cst_17 {dimension_numbers = #tpu.dot_dimension_numbers<[1], [1], [0], [0], [0, 0, 1, 0], [], []>} : vector<8x8xbf16>, vector<8x8xbf16>, vector<8x8xf32> -> vector<8x8xf32>
    %30 = vector.broadcast %14 : vector<1x8xf32> to vector<8x8xf32>
    %31 = arith.addf %29, %30 : vector<8x8xf32>
    %cst_18 = arith.constant dense<0xFF800000> : vector<8xf32>
    %32 = vector.multi_reduction <maximumf>, %31, %cst_18 [1] : vector<8x8xf32> to vector<8xf32>
    %33 = vector.shape_cast %32 : vector<8xf32> to vector<8x1xf32>
    %34 = vector.broadcast %33 : vector<8x1xf32> to vector<8x8xf32>
    %35 = arith.subf %31, %34 : vector<8x8xf32>
    %36 = math.exp %35 : vector<8x8xf32>
    %cst_19 = arith.constant dense<0.000000e+00> : vector<8xf32>
    %37 = vector.multi_reduction <add>, %36, %cst_19 [1] : vector<8x8xf32> to vector<8xf32>
    %38 = vector.shape_cast %37 : vector<8xf32> to vector<8x1xf32>
    %39 = tpu.reciprocal %38 {approx = true} : vector<8x1xf32> -> vector<8x1xf32>
    %40 = vector.broadcast %39 : vector<8x1xf32> to vector<8x8xf32>
    %41 = arith.mulf %36, %40 : vector<8x8xf32>
    %42 = arith.truncf %41 : vector<8x8xf32> to vector<8x8xbf16>
    %43 = vector.extract_strided_slice %9 {offsets = [0, 0], sizes = [8, 8], strides = [1, 1]} : vector<8x32xbf16> to vector<8x8xbf16>
    %cst_20 = arith.constant dense<0.000000e+00> : vector<8x8xf32>
    %44 = tpu.matmul %42, %43, %cst_20 {dimension_numbers = #tpu.dot_dimension_numbers<[1], [0], [0], [1], [0, 0, 1, 1], [], []>} : vector<8x8xbf16>, vector<8x8xbf16>, vector<8x8xf32> -> vector<8x8xf32>
    %45 = vector.extract_strided_slice %22 {offsets = [0, 8], sizes = [8, 8], strides = [1, 1]} : vector<8x32xbf16> to vector<8x8xbf16>
    %46 = vector.extract_strided_slice %26 {offsets = [0, 8], sizes = [8, 8], strides = [1, 1]} : vector<8x32xbf16> to vector<8x8xbf16>
    %cst_21 = arith.constant dense<0.000000e+00> : vector<8x8xf32>
    %47 = tpu.matmul %45, %46, %cst_21 {dimension_numbers = #tpu.dot_dimension_numbers<[1], [1], [0], [0], [0, 0, 1, 0], [], []>} : vector<8x8xbf16>, vector<8x8xbf16>, vector<8x8xf32> -> vector<8x8xf32>
    %48 = vector.broadcast %14 : vector<1x8xf32> to vector<8x8xf32>
    %49 = arith.addf %47, %48 : vector<8x8xf32>
    %cst_22 = arith.constant dense<0xFF800000> : vector<8xf32>
    %50 = vector.multi_reduction <maximumf>, %49, %cst_22 [1] : vector<8x8xf32> to vector<8xf32>
    %51 = vector.shape_cast %50 : vector<8xf32> to vector<8x1xf32>
    %52 = vector.broadcast %51 : vector<8x1xf32> to vector<8x8xf32>
    %53 = arith.subf %49, %52 : vector<8x8xf32>
    %54 = math.exp %53 : vector<8x8xf32>
    %cst_23 = arith.constant dense<0.000000e+00> : vector<8xf32>
    %55 = vector.multi_reduction <add>, %54, %cst_23 [1] : vector<8x8xf32> to vector<8xf32>
    %56 = vector.shape_cast %55 : vector<8xf32> to vector<8x1xf32>
    %57 = tpu.reciprocal %56 {approx = true} : vector<8x1xf32> -> vector<8x1xf32>
    %58 = vector.broadcast %57 : vector<8x1xf32> to vector<8x8xf32>
    %59 = arith.mulf %54, %58 : vector<8x8xf32>
    %60 = arith.truncf %59 : vector<8x8xf32> to vector<8x8xbf16>
    %61 = vector.extract_strided_slice %9 {offsets = [0, 8], sizes = [8, 8], strides = [1, 1]} : vector<8x32xbf16> to vector<8x8xbf16>
    %cst_24 = arith.constant dense<0.000000e+00> : vector<8x8xf32>
    %62 = tpu.matmul %60, %61, %cst_24 {dimension_numbers = #tpu.dot_dimension_numbers<[1], [0], [0], [1], [0, 0, 1, 1], [], []>} : vector<8x8xbf16>, vector<8x8xbf16>, vector<8x8xf32> -> vector<8x8xf32>
    %63 = vector.extract_strided_slice %22 {offsets = [0, 16], sizes = [8, 8], strides = [1, 1]} : vector<8x32xbf16> to vector<8x8xbf16>
    %64 = vector.extract_strided_slice %26 {offsets = [0, 16], sizes = [8, 8], strides = [1, 1]} : vector<8x32xbf16> to vector<8x8xbf16>
    %cst_25 = arith.constant dense<0.000000e+00> : vector<8x8xf32>
    %65 = tpu.matmul %63, %64, %cst_25 {dimension_numbers = #tpu.dot_dimension_numbers<[1], [1], [0], [0], [0, 0, 1, 0], [], []>} : vector<8x8xbf16>, vector<8x8xbf16>, vector<8x8xf32> -> vector<8x8xf32>
    %66 = vector.broadcast %14 : vector<1x8xf32> to vector<8x8xf32>
    %67 = arith.addf %65, %66 : vector<8x8xf32>
    %cst_26 = arith.constant dense<0xFF800000> : vector<8xf32>
    %68 = vector.multi_reduction <maximumf>, %67, %cst_26 [1] : vector<8x8xf32> to vector<8xf32>
    %69 = vector.shape_cast %68 : vector<8xf32> to vector<8x1xf32>
    %70 = vector.broadcast %69 : vector<8x1xf32> to vector<8x8xf32>
    %71 = arith.subf %67, %70 : vector<8x8xf32>
    %72 = math.exp %71 : vector<8x8xf32>
    %cst_27 = arith.constant dense<0.000000e+00> : vector<8xf32>
    %73 = vector.multi_reduction <add>, %72, %cst_27 [1] : vector<8x8xf32> to vector<8xf32>
    %74 = vector.shape_cast %73 : vector<8xf32> to vector<8x1xf32>
    %75 = tpu.reciprocal %74 {approx = true} : vector<8x1xf32> -> vector<8x1xf32>
    %76 = vector.broadcast %75 : vector<8x1xf32> to vector<8x8xf32>
    %77 = arith.mulf %72, %76 : vector<8x8xf32>
    %78 = arith.truncf %77 : vector<8x8xf32> to vector<8x8xbf16>
    %79 = vector.extract_strided_slice %9 {offsets = [0, 16], sizes = [8, 8], strides = [1, 1]} : vector<8x32xbf16> to vector<8x8xbf16>
    %cst_28 = arith.constant dense<0.000000e+00> : vector<8x8xf32>
    %80 = tpu.matmul %78, %79, %cst_28 {dimension_numbers = #tpu.dot_dimension_numbers<[1], [0], [0], [1], [0, 0, 1, 1], [], []>} : vector<8x8xbf16>, vector<8x8xbf16>, vector<8x8xf32> -> vector<8x8xf32>
    %81 = vector.extract_strided_slice %22 {offsets = [0, 24], sizes = [8, 8], strides = [1, 1]} : vector<8x32xbf16> to vector<8x8xbf16>
    %82 = vector.extract_strided_slice %26 {offsets = [0, 24], sizes = [8, 8], strides = [1, 1]} : vector<8x32xbf16> to vector<8x8xbf16>
    %cst_29 = arith.constant dense<0.000000e+00> : vector<8x8xf32>
    %83 = tpu.matmul %81, %82, %cst_29 {dimension_numbers = #tpu.dot_dimension_numbers<[1], [1], [0], [0], [0, 0, 1, 0], [], []>} : vector<8x8xbf16>, vector<8x8xbf16>, vector<8x8xf32> -> vector<8x8xf32>
    %84 = vector.broadcast %14 : vector<1x8xf32> to vector<8x8xf32>
    %85 = arith.addf %83, %84 : vector<8x8xf32>
    %cst_30 = arith.constant dense<0xFF800000> : vector<8xf32>
    %86 = vector.multi_reduction <maximumf>, %85, %cst_30 [1] : vector<8x8xf32> to vector<8xf32>
    %87 = vector.shape_cast %86 : vector<8xf32> to vector<8x1xf32>
    %88 = vector.broadcast %87 : vector<8x1xf32> to vector<8x8xf32>
    %89 = arith.subf %85, %88 : vector<8x8xf32>
    %90 = math.exp %89 : vector<8x8xf32>
    %cst_31 = arith.constant dense<0.000000e+00> : vector<8xf32>
    %91 = vector.multi_reduction <add>, %90, %cst_31 [1] : vector<8x8xf32> to vector<8xf32>
    %92 = vector.shape_cast %91 : vector<8xf32> to vector<8x1xf32>
    %93 = tpu.reciprocal %92 {approx = true} : vector<8x1xf32> -> vector<8x1xf32>
    %94 = vector.broadcast %93 : vector<8x1xf32> to vector<8x8xf32>
    %95 = arith.mulf %90, %94 : vector<8x8xf32>
    %96 = arith.truncf %95 : vector<8x8xf32> to vector<8x8xbf16>
    %97 = vector.extract_strided_slice %9 {offsets = [0, 24], sizes = [8, 8], strides = [1, 1]} : vector<8x32xbf16> to vector<8x8xbf16>
    %cst_32 = arith.constant dense<0.000000e+00> : vector<8x8xf32>
    %98 = tpu.matmul %96, %97, %cst_32 {dimension_numbers = #tpu.dot_dimension_numbers<[1], [0], [0], [1], [0, 0, 1, 1], [], []>} : vector<8x8xbf16>, vector<8x8xbf16>, vector<8x8xf32> -> vector<8x8xf32>
    %99 = tpu.concatenate %44, %62, %80, %98 in 1 : vector<8x8xf32>, vector<8x8xf32>, vector<8x8xf32>, vector<8x8xf32> -> vector<8x32xf32>
    %100 = arith.truncf %99 : vector<8x32xf32> to vector<8x32xbf16>
    %c0_33 = arith.constant 0 : index
    %c0_34 = arith.constant 0 : index
    %c0_35 = arith.constant 0 : index
    %101 = vector.load %arg7[%c0_33, %c0_34, %c0_35] : memref<1x8x32xbf16, #tpu.memory_space<vmem>>, vector<1x8x32xbf16>
    %102 = vector.shape_cast %101 : vector<1x8x32xbf16> to vector<8x32xbf16>
    %103 = vector.shape_cast %100 : vector<8x32xbf16> to vector<1x8x32xbf16>
    tpu.vector_store %arg7[%c0_33, %c0_34, %c0_35], %103 {strides = array<i32>} : memref<1x8x32xbf16, #tpu.memory_space<vmem>>, vector<1x8x32xbf16>,
    return
  }
  func.func @transform_0(%arg0: i32, %arg1: i32) -> (i32, i32, i32) {
    %c0_i32 = arith.constant 0 : i32
    %c0_i32_0 = arith.constant 0 : i32
    return %arg0, %c0_i32, %arg1 : i32, i32, i32
  }
  func.func @transform_1(%arg0: i32, %arg1: i32) -> (i32, i32, i32) {
    %c0_i32 = arith.constant 0 : i32
    %c0_i32_0 = arith.constant 0 : i32
    %c0_i32_1 = arith.constant 0 : i32
    return %arg0, %c0_i32, %c0_i32_0 : i32, i32, i32
  }
  func.func @transform_2(%arg0: i32, %arg1: i32) -> (i32, i32) {
    %c0_i32 = arith.constant 0 : i32
    %c0_i32_0 = arith.constant 0 : i32
    %c0_i32_1 = arith.constant 0 : i32
    return %c0_i32, %c0_i32_0 : i32, i32
  }
  func.func @transform_3(%arg0: i32, %arg1: i32) -> (i32, i32) {
    %c0_i32 = arith.constant 0 : i32
    %c0_i32_0 = arith.constant 0 : i32
    %c0_i32_1 = arith.constant 0 : i32
    return %c0_i32, %c0_i32_0 : i32, i32
  }
  func.func @transform_4(%arg0: i32, %arg1: i32) -> (i32, i32) {
    %c0_i32 = arith.constant 0 : i32
    %c0_i32_0 = arith.constant 0 : i32
    %c0_i32_1 = arith.constant 0 : i32
    return %c0_i32, %c0_i32_0 : i32, i32
  }
  func.func @transform_5(%arg0: i32, %arg1: i32) -> (i32, i32, i32) {
    %c0_i32 = arith.constant 0 : i32
    %c0_i32_0 = arith.constant 0 : i32
    return %arg0, %c0_i32, %arg1 : i32, i32, i32
  }
}

module attributes {stable_mosaic.version = 11 : i64} {
  func.func @_matmul_res_kernel(%arg0: i32, %arg1: i32, %arg2: i32, %arg3: memref<16x64xbf16, #tpu.memory_space<vmem>>, %arg4: memref<64x32xbf16, #tpu.memory_space<vmem>>, %arg5: memref<1x32xf32, #tpu.memory_space<vmem>>, %arg6: memref<16x32xf32, #tpu.memory_space<vmem>>, %arg7: memref<16x32xf32, #tpu.memory_space<vmem>>, %arg8: memref<16x32xf32, #tpu.memory_space<vmem>>) attributes {dimension_semantics = [#tpu.dimension_semantics<parallel>, #tpu.dimension_semantics<parallel>, #tpu.dimension_semantics<arbitrary>], iteration_bounds = array<i64: 1, 1, 1>, scalar_prefetch = 0 : i64, scratch_operands = 1 : i64, tpu.core_type = #tpu.core_type<tc>, window_params = [{transform_indices = @transform_0, window_bounds = array<i64: 16, 64>}, {transform_indices = @transform_1, window_bounds = array<i64: 64, 32>}, {transform_indices = @transform_2, window_bounds = array<i64: 1, 32>}, {transform_indices = @transform_3, window_bounds = array<i64: 16, 32>}, {transform_indices = @transform_4, window_bounds = array<i64: 16, 32>}]} {
    %c0_i32 = arith.constant 0 : i32
    %0 = arith.cmpi eq, %arg2, %c0_i32 : i32
    %1 = arith.extui %0 : i1 to i32
    %c0_i32_0 = arith.constant 0 : i32
    %2 = arith.cmpi ne, %1, %c0_i32_0 : i32
    scf.if %2 {
      %cst_10 = arith.constant 0.000000e+00 : f32
      %12 = vector.broadcast %cst_10 : f32 to vector<16x32xf32>
      %c0_11 = arith.constant 0 : index
      %c0_12 = arith.constant 0 : index
      %13 = vector.load %arg8[%c0_11, %c0_12] : memref<16x32xf32, #tpu.memory_space<vmem>>, vector<16x32xf32>
      tpu.vector_store %arg8[%c0_11, %c0_12], %12 {strides = array<i32>} : memref<16x32xf32, #tpu.memory_space<vmem>>, vector<16x32xf32>,
    } else {
    }
    %c0 = arith.constant 0 : index
    %c0_1 = arith.constant 0 : index
    %3 = vector.load %arg8[%c0, %c0_1] : memref<16x32xf32, #tpu.memory_space<vmem>>, vector<16x32xf32>
    %c0_2 = arith.constant 0 : index
    %c0_3 = arith.constant 0 : index
    %4 = vector.load %arg3[%c0_2, %c0_3] : memref<16x64xbf16, #tpu.memory_space<vmem>>, vector<16x64xbf16>
    %c0_4 = arith.constant 0 : index
    %c0_5 = arith.constant 0 : index
    %5 = vector.load %arg4[%c0_4, %c0_5] : memref<64x32xbf16, #tpu.memory_space<vmem>>, vector<64x32xbf16>
    %cst = arith.constant dense<0.000000e+00> : vector<16x32xf32>
    %6 = tpu.matmul %4, %5, %cst {dimension_numbers = #tpu.dot_dimension_numbers<[1], [0], [0], [1], [0, 0, 1, 1], [], []>} : vector<16x64xbf16>, vector<64x32xbf16>, vector<16x32xf32> -> vector<16x32xf32>
    %7 = arith.addf %3, %6 : vector<16x32xf32>
    %c0_6 = arith.constant 0 : index
    %c0_7 = arith.constant 0 : index
    %8 = vector.load %arg8[%c0_6, %c0_7] : memref<16x32xf32, #tpu.memory_space<vmem>>, vector<16x32xf32>
    tpu.vector_store %arg8[%c0_6, %c0_7], %7 {strides = array<i32>} : memref<16x32xf32, #tpu.memory_space<vmem>>, vector<16x32xf32>,
    %c0_i32_8 = arith.constant 0 : i32
    %9 = arith.cmpi eq, %arg2, %c0_i32_8 : i32
    %10 = arith.extui %9 : i1 to i32
    %c0_i32_9 = arith.constant 0 : i32
    %11 = arith.cmpi ne, %10, %c0_i32_9 : i32
    scf.if %11 {
      %c0_10 = arith.constant 0 : index
      %c0_11 = arith.constant 0 : index
      %12 = vector.load %arg8[%c0_10, %c0_11] : memref<16x32xf32, #tpu.memory_space<vmem>>, vector<16x32xf32>
      %c0_12 = arith.constant 0 : index
      %c0_13 = arith.constant 0 : index
      %13 = vector.load %arg5[%c0_12, %c0_13] : memref<1x32xf32, #tpu.memory_space<vmem>>, vector<1x32xf32>
      %14 = vector.broadcast %13 : vector<1x32xf32> to vector<16x32xf32>
      %15 = arith.addf %12, %14 : vector<16x32xf32>
      %c0_14 = arith.constant 0 : index
      %c0_15 = arith.constant 0 : index
      %16 = vector.load %arg6[%c0_14, %c0_15] : memref<16x32xf32, #tpu.memory_space<vmem>>, vector<16x32xf32>
      %17 = arith.addf %15, %16 : vector<16x32xf32>
      %c0_16 = arith.constant 0 : index
      %c0_17 = arith.constant 0 : index
      %18 = vector.load %arg7[%c0_16, %c0_17] : memref<16x32xf32, #tpu.memory_space<vmem>>, vector<16x32xf32>
      tpu.vector_store %arg7[%c0_16, %c0_17], %17 {strides = array<i32>} : memref<16x32xf32, #tpu.memory_space<vmem>>, vector<16x32xf32>,
    } else {
    }
    return
  }
  func.func @transform_0(%arg0: i32, %arg1: i32, %arg2: i32) -> (i32, i32) {
    %c0_i32 = arith.constant 0 : i32
    return %arg0, %arg2 : i32, i32
  }
  func.func @transform_1(%arg0: i32, %arg1: i32, %arg2: i32) -> (i32, i32) {
    %c0_i32 = arith.constant 0 : i32
    return %arg2, %arg1 : i32, i32
  }
  func.func @transform_2(%arg0: i32, %arg1: i32, %arg2: i32) -> (i32, i32) {
    %c0_i32 = arith.constant 0 : i32
    %c0_i32_0 = arith.constant 0 : i32
    return %c0_i32, %arg1 : i32, i32
  }
  func.func @transform_3(%arg0: i32, %arg1: i32, %arg2: i32) -> (i32, i32) {
    %c0_i32 = arith.constant 0 : i32
    return %arg0, %arg1 : i32, i32
  }
  func.func @transform_4(%arg0: i32, %arg1: i32, %arg2: i32) -> (i32, i32) {
    %c0_i32 = arith.constant 0 : i32
    return %arg0, %arg1 : i32, i32
  }
}

module attributes {stable_mosaic.version = 11 : i64} {
  func.func @_heads_kernel(%arg0: i32, %arg1: memref<2x32xf32, #tpu.memory_space<vmem>>, %arg2: memref<1x32xf32, #tpu.memory_space<vmem>>, %arg3: memref<1x32xf32, #tpu.memory_space<vmem>>, %arg4: memref<32x768xbf16, #tpu.memory_space<vmem>>, %arg5: memref<1x768xf32, #tpu.memory_space<vmem>>, %arg6: memref<768x5xbf16, #tpu.memory_space<vmem>>, %arg7: memref<1x5xf32, #tpu.memory_space<vmem>>, %arg8: memref<2x5xf32, #tpu.memory_space<vmem>>) attributes {dimension_semantics = [#tpu.dimension_semantics<arbitrary>], iteration_bounds = array<i64: 1>, scalar_prefetch = 0 : i64, scratch_operands = 0 : i64, tpu.core_type = #tpu.core_type<tc>, window_params = [{pipeline_mode = #tpu.pipeline_mode<synchronous>, transform_indices = @transform_0, window_bounds = array<i64: 2, 32>}, {pipeline_mode = #tpu.pipeline_mode<synchronous>, transform_indices = @transform_1, window_bounds = array<i64: 1, 32>}, {pipeline_mode = #tpu.pipeline_mode<synchronous>, transform_indices = @transform_2, window_bounds = array<i64: 1, 32>}, {pipeline_mode = #tpu.pipeline_mode<synchronous>, transform_indices = @transform_3, window_bounds = array<i64: 32, 768>}, {pipeline_mode = #tpu.pipeline_mode<synchronous>, transform_indices = @transform_4, window_bounds = array<i64: 1, 768>}, {pipeline_mode = #tpu.pipeline_mode<synchronous>, transform_indices = @transform_5, window_bounds = array<i64: 768, 5>}, {pipeline_mode = #tpu.pipeline_mode<synchronous>, transform_indices = @transform_6, window_bounds = array<i64: 1, 5>}, {pipeline_mode = #tpu.pipeline_mode<synchronous>, transform_indices = @transform_7, window_bounds = array<i64: 2, 5>}]} {
    %c0 = arith.constant 0 : index
    %c0_0 = arith.constant 0 : index
    %0 = vector.load %arg1[%c0, %c0_0] : memref<2x32xf32, #tpu.memory_space<vmem>>, vector<2x32xf32>
    %cst = arith.constant dense<0.000000e+00> : vector<2xf32>
    %1 = vector.multi_reduction <add>, %0, %cst [1] : vector<2x32xf32> to vector<2xf32>
    %2 = vector.shape_cast %1 : vector<2xf32> to vector<2x1xf32>
    %cst_1 = arith.constant 3.200000e+01 : f32
    %3 = vector.broadcast %cst_1 : f32 to vector<2x1xf32>
    %4 = arith.divf %2, %3 : vector<2x1xf32>
    %5 = vector.broadcast %4 : vector<2x1xf32> to vector<2x32xf32>
    %6 = arith.subf %0, %5 : vector<2x32xf32>
    %7 = arith.mulf %6, %6 : vector<2x32xf32>
    %cst_2 = arith.constant dense<0.000000e+00> : vector<2xf32>
    %8 = vector.multi_reduction <add>, %7, %cst_2 [1] : vector<2x32xf32> to vector<2xf32>
    %9 = vector.shape_cast %8 : vector<2xf32> to vector<2x1xf32>
    %cst_3 = arith.constant 3.200000e+01 : f32
    %10 = vector.broadcast %cst_3 : f32 to vector<2x1xf32>
    %11 = arith.divf %9, %10 : vector<2x1xf32>
    %12 = vector.broadcast %4 : vector<2x1xf32> to vector<2x32xf32>
    %13 = arith.subf %0, %12 : vector<2x32xf32>
    %cst_4 = arith.constant 9.99999974E-6 : f32
    %14 = vector.broadcast %cst_4 : f32 to vector<2x1xf32>
    %15 = arith.addf %11, %14 : vector<2x1xf32>
    %16 = math.rsqrt %15 : vector<2x1xf32>
    %17 = vector.broadcast %16 : vector<2x1xf32> to vector<2x32xf32>
    %18 = arith.mulf %13, %17 : vector<2x32xf32>
    %c0_5 = arith.constant 0 : index
    %c0_6 = arith.constant 0 : index
    %19 = vector.load %arg2[%c0_5, %c0_6] : memref<1x32xf32, #tpu.memory_space<vmem>>, vector<1x32xf32>
    %20 = vector.broadcast %19 : vector<1x32xf32> to vector<2x32xf32>
    %21 = arith.mulf %18, %20 : vector<2x32xf32>
    %c0_7 = arith.constant 0 : index
    %c0_8 = arith.constant 0 : index
    %22 = vector.load %arg3[%c0_7, %c0_8] : memref<1x32xf32, #tpu.memory_space<vmem>>, vector<1x32xf32>
    %23 = vector.broadcast %22 : vector<1x32xf32> to vector<2x32xf32>
    %24 = arith.addf %21, %23 : vector<2x32xf32>
    %25 = arith.truncf %24 : vector<2x32xf32> to vector<2x32xbf16>
    %c0_9 = arith.constant 0 : index
    %c0_10 = arith.constant 0 : index
    %26 = vector.load %arg4[%c0_9, %c0_10] : memref<32x768xbf16, #tpu.memory_space<vmem>>, vector<32x768xbf16>
    %cst_11 = arith.constant dense<0.000000e+00> : vector<2x768xf32>
    %27 = tpu.matmul %25, %26, %cst_11 {dimension_numbers = #tpu.dot_dimension_numbers<[1], [0], [0], [1], [0, 0, 1, 1], [], []>} : vector<2x32xbf16>, vector<32x768xbf16>, vector<2x768xf32> -> vector<2x768xf32>
    %c0_12 = arith.constant 0 : index
    %c0_13 = arith.constant 0 : index
    %28 = vector.load %arg5[%c0_12, %c0_13] : memref<1x768xf32, #tpu.memory_space<vmem>>, vector<1x768xf32>
    %29 = vector.broadcast %28 : vector<1x768xf32> to vector<2x768xf32>
    %30 = arith.addf %27, %29 : vector<2x768xf32>
    %cst_14 = arith.constant 0.000000e+00 : f32
    %31 = vector.broadcast %cst_14 : f32 to vector<2x768xf32>
    %32 = arith.maximumf %30, %31 : vector<2x768xf32>
    %33 = arith.truncf %32 : vector<2x768xf32> to vector<2x768xbf16>
    %c0_15 = arith.constant 0 : index
    %c0_16 = arith.constant 0 : index
    %34 = vector.load %arg6[%c0_15, %c0_16] : memref<768x5xbf16, #tpu.memory_space<vmem>>, vector<768x5xbf16>
    %cst_17 = arith.constant dense<0.000000e+00> : vector<2x5xf32>
    %35 = tpu.matmul %33, %34, %cst_17 {dimension_numbers = #tpu.dot_dimension_numbers<[1], [0], [0], [1], [0, 0, 1, 1], [], []>} : vector<2x768xbf16>, vector<768x5xbf16>, vector<2x5xf32> -> vector<2x5xf32>
    %c0_18 = arith.constant 0 : index
    %c0_19 = arith.constant 0 : index
    %36 = vector.load %arg7[%c0_18, %c0_19] : memref<1x5xf32, #tpu.memory_space<vmem>>, vector<1x5xf32>
    %37 = vector.broadcast %36 : vector<1x5xf32> to vector<2x5xf32>
    %38 = arith.addf %35, %37 : vector<2x5xf32>
    %c0_20 = arith.constant 0 : index
    %c0_21 = arith.constant 0 : index
    %39 = vector.load %arg8[%c0_20, %c0_21] : memref<2x5xf32, #tpu.memory_space<vmem>>, vector<2x5xf32>
    tpu.vector_store %arg8[%c0_20, %c0_21], %38 {strides = array<i32>} : memref<2x5xf32, #tpu.memory_space<vmem>>, vector<2x5xf32>,
    return
  }
  func.func @transform_0(%arg0: i32) -> (i32, i32) {
    %c0_i32 = arith.constant 0 : i32
    %c0_i32_0 = arith.constant 0 : i32
    %c0_i32_1 = arith.constant 0 : i32
    return %c0_i32, %c0_i32_0 : i32, i32
  }
  func.func @transform_1(%arg0: i32) -> (i32, i32) {
    %c0_i32 = arith.constant 0 : i32
    %c0_i32_0 = arith.constant 0 : i32
    %c0_i32_1 = arith.constant 0 : i32
    return %c0_i32, %c0_i32_0 : i32, i32
  }
  func.func @transform_2(%arg0: i32) -> (i32, i32) {
    %c0_i32 = arith.constant 0 : i32
    %c0_i32_0 = arith.constant 0 : i32
    %c0_i32_1 = arith.constant 0 : i32
    return %c0_i32, %c0_i32_0 : i32, i32
  }
  func.func @transform_3(%arg0: i32) -> (i32, i32) {
    %c0_i32 = arith.constant 0 : i32
    %c0_i32_0 = arith.constant 0 : i32
    %c0_i32_1 = arith.constant 0 : i32
    return %c0_i32, %c0_i32_0 : i32, i32
  }
  func.func @transform_4(%arg0: i32) -> (i32, i32) {
    %c0_i32 = arith.constant 0 : i32
    %c0_i32_0 = arith.constant 0 : i32
    %c0_i32_1 = arith.constant 0 : i32
    return %c0_i32, %c0_i32_0 : i32, i32
  }
  func.func @transform_5(%arg0: i32) -> (i32, i32) {
    %c0_i32 = arith.constant 0 : i32
    %c0_i32_0 = arith.constant 0 : i32
    %c0_i32_1 = arith.constant 0 : i32
    return %c0_i32, %c0_i32_0 : i32, i32
  }
  func.func @transform_6(%arg0: i32) -> (i32, i32) {
    %c0_i32 = arith.constant 0 : i32
    %c0_i32_0 = arith.constant 0 : i32
    %c0_i32_1 = arith.constant 0 : i32
    return %c0_i32, %c0_i32_0 : i32, i32
  }
  func.func @transform_7(%arg0: i32) -> (i32, i32) {
    %c0_i32 = arith.constant 0 : i32
    %c0_i32_0 = arith.constant 0 : i32
    %c0_i32_1 = arith.constant 0 : i32
    return %c0_i32, %c0_i32_0 : i32, i32
  }
}

</mosaic_0001>

<llo_original>
// kernel: tile.14
$region0: #{tile.14}
  %s0 = inlined_call_operand.vmem [shape: f32[8,4,8], index: 0, kind: input, shape index: {}]
  %s1 = inlined_call_operand.vmem [shape: f32[8,32], index: 1, kind: output, shape index: {}]
  $region1: #{tile.14} parent=0
    #allocation0 [shape = 'u8[32768]{0}', space=vmem, size = 0x8000, scoped, tag = 'scoped mem for input reshape']
    %s3 = ssub.s32 16, 1
    %s4 = scalar_lea.vmem %s0, 28
    %v5 = vld [vmem:[%s4] sm:%s3]
    %s6 = scalar_lea.vmem [#allocation0], 56
    %7 = vst [vmem:[%s6] sm:%s3] %v5
    %s8 = scalar_lea.vmem %s0, 24
    %v9 = vld [vmem:[%s8] sm:%s3]
    %s10 = scalar_lea.vmem [#allocation0], 48
    %11 = vst [vmem:[%s10] sm:%s3] %v9
    %s12 = scalar_lea.vmem %s0, 20
    %v13 = vld [vmem:[%s12] sm:%s3]
    %s14 = scalar_lea.vmem [#allocation0], 40
    %15 = vst [vmem:[%s14] sm:%s3] %v13
    %s16 = scalar_lea.vmem %s0, 16
    %v17 = vld [vmem:[%s16] sm:%s3]
    %s18 = scalar_lea.vmem [#allocation0], 32
    %19 = vst [vmem:[%s18] sm:%s3] %v17
    %s20 = scalar_lea.vmem %s0, 12
    %v21 = vld [vmem:[%s20] sm:%s3]
    %s22 = scalar_lea.vmem [#allocation0], 24
    %23 = vst [vmem:[%s22] sm:%s3] %v21
    %s24 = scalar_lea.vmem %s0, 8
    %v25 = vld [vmem:[%s24] sm:%s3]
    %s26 = scalar_lea.vmem [#allocation0], 16
    %27 = vst [vmem:[%s26] sm:%s3] %v25
    %s28 = scalar_lea.vmem %s0, 4
    %v29 = vld [vmem:[%s28] sm:%s3]
    %s30 = scalar_lea.vmem [#allocation0], 8
    %31 = vst [vmem:[%s30] sm:%s3] %v29
    %v32 = vld [vmem:[%s0] sm:%s3]
    %33 = vst [vmem:[#allocation0] sm:%s3] %v32
    %v34 = vld [vmem:[#allocation0] ss:$8 sm:$0xf]
    %v35 = vld [vmem:[#allocation0] ss:$8 sm:$0xf0]
    %vm36 = vcmask 1047556
    %v37 = vsel %vm36, %v35, %v34
    %vm38 = vcmask 64512
    %39 = vst.msk [vmem:[%s1] sm:$0xff] %vm38, %v37
    %s40 = scalar_lea.vmem [#allocation0], 3
    %v41 = vld [vmem:[%s40] ss:$8 sm:$0xf]
    %s42 = scalar_lea.vmem [#allocation0], 3
    %v43 = vld [vmem:[%s42] ss:$8 sm:$0xf0]
    %vm44 = vcmask 1047556
    %v45 = vsel %vm44, %v43, %v41
    %46 = vrot.lane.b32.xlu0 %v45, 24
    %v47 = vpop.permute.xlu0 %46
    %vm48 = vcmask 261312
    %49 = vst.msk [vmem:[%s1] sm:$0xff] %vm48, %v47
    %s50 = scalar_lea.vmem [#allocation0], 2
    %v51 = vld [vmem:[%s50] ss:$8 sm:$0xf]
    %s52 = scalar_lea.vmem [#allocation0], 2
    %v53 = vld [vmem:[%s52] ss:$8 sm:$0xf0]
    %vm54 = vcmask 1047556
    %v55 = vsel %vm54, %v53, %v51
    %56 = vrot.lane.b32.xlu0 %v55, 16
    %v57 = vpop.permute.xlu0 %56
    %vm58 = vcmask 195712
    %59 = vst.msk [vmem:[%s1] sm:$0xff] %vm58, %v57
    %s60 = scalar_lea.vmem [#allocation0], 1
    %v61 = vld [vmem:[%s60] ss:$8 sm:$0xf]
    %s62 = scalar_lea.vmem [#allocation0], 1
    %v63 = vld [vmem:[%s62] ss:$8 sm:$0xf0]
    %vm64 = vcmask 1047556
    %v65 = vsel %vm64, %v63, %v61
    %66 = vrot.lane.b32.xlu0 %v65, 8
    %v67 = vpop.permute.xlu0 %66
    %vm68 = vcmask 130112
    %69 = vst.msk [vmem:[%s1] sm:$0xff] %vm68, %v67

// kernel: multitask_esm2_forward.13
$region0: #{multitask_esm2_forward.13}
  #allocation0 [shape = 'u32[]', space=smem, size = 0x4, offset = 0x4, fixed_abs, tag = 'smem constant byte address 0x4 - core index']
  #allocation1 [shape = 'u32[72,128]{1,0:T(1,128)}', space=vmem, size = 0x9000, scoped, tag = 'internal scratch']
  #allocation2 [shape = 'f32[16,32]{1,0:T(8,128)}', space=vmem, size = 0x2000, scoped, tag = 'scratch operand']
  %s0 = inlined_call_operand.vmem [shape: bf16[16,32], index: 0, kind: input, shape index: {}]
  %s1 = inlined_call_operand.vmem [shape: bf16[32,32], index: 1, kind: input, shape index: {}]
  %s2 = inlined_call_operand.vmem [shape: f32[1,32], index: 2, kind: input, shape index: {}]
  %s3 = inlined_call_operand.vmem [shape: f32[16,32], index: 3, kind: input, shape index: {}]
  %s4 = inlined_call_operand.vmem [shape: f32[16,32], index: 4, kind: output, shape index: {}]
  %s5 = sld [smem:[#allocation0]]
  $region34: #{multitask_esm2_forward.13} parent=0
    _
  %s7 = ssub.s32 1, %s5
  %s8 = scalar_select 0, %s7, %s5
  // Predicated region
  $region2: #{multitask_esm2_forward.13} parent=0 // pred_check
    _
  $region3: #{multitask_esm2_forward.13} parent=0 // pred_check_branch
    %10 = sbr.rel (0) target = $region5
  $region4: #{multitask_esm2_forward.13} parent=0 // pred_region
    _
  $region5: #{multitask_esm2_forward.13} parent=0 // pred_fallthru
    _
  // Predicated region
  $region6: #{multitask_esm2_forward.13} parent=0 // pred_check
    _
  $region7: #{multitask_esm2_forward.13} parent=0 // pred_check_branch
    %12 = sbr.rel (0) target = $region9
  $region8: #{multitask_esm2_forward.13} parent=0 // pred_region
    _
  $region9: #{multitask_esm2_forward.13} parent=0 // pred_fallthru
    _
  // Predicated region
  $region10: #{multitask_esm2_forward.13} parent=0 // pred_check
    _
  $region11: #{multitask_esm2_forward.13} parent=0 // pred_check_branch
    %14 = sbr.rel (0) target = $region13
  $region12: #{multitask_esm2_forward.13} parent=0 // pred_region
    _
  $region13: #{multitask_esm2_forward.13} parent=0 // pred_fallthru
    _
  // Predicated region
  $region14: #{multitask_esm2_forward.13} parent=0 // pred_check
    _
  $region15: #{multitask_esm2_forward.13} parent=0 // pred_check_branch
    %16 = sbr.rel (0) target = $region17
  $region16: #{multitask_esm2_forward.13} parent=0 // pred_region
    _
  $region17: #{multitask_esm2_forward.13} parent=0 // pred_fallthru
    _
  %p18 = scmp.eq.s32.totalorder 0, 0
  // Predicated region
  $region18: #{multitask_esm2_forward.13} parent=0 // pred_check
    %p19 = pneg %p18
  $region19: #{multitask_esm2_forward.13} parent=0 // pred_check_branch
    %21 = sbr.rel (%p19) target = $region21
  $region20: #{multitask_esm2_forward.13} parent=0 // pred_region
    %vm22 = vcmask 261120
    %23 = vst.msk [vmem:[#allocation2] sm:$0xff] %vm22, 0.0
    %24 = vst.msk [vmem:[#allocation2 + $0x8] sm:$0xff] %vm22, 0.0
  $region21: #{multitask_esm2_forward.13} parent=0 // pred_fallthru
    _
  %v25 = vld [vmem:[#allocation2] sm:$0xff]
  %v26 = vld [vmem:[#allocation2 + $0x8] sm:$0xff]
  %v27 = vld [vmem:[%s0] sm:$0xf]
  %v28 = vld [vmem:[%s0 + $0x4] sm:$0xf]
  %v29 = vld [vmem:[%s1] sm:$0xf]
  %v30 = vld [vmem:[%s1 + $0x4] sm:$0xf]
  %v31 = vld [vmem:[%s1 + $0x8] sm:$0xf]
  %v32 = vld [vmem:[%s1 + $0xc] sm:$0xf]
  %v35 = vunpack.c.l.b16 %v27
  %v36 = vunpack.c.l.b16 %v28
  %v37 = vpack.c.b16 %v36, %v35
  %v42 = vunpack.c.l.b16 %v29
  %v43 = vunpack.c.l.b16 %v30
  %v44 = vunpack.c.l.b16 %v31
  %v45 = vunpack.c.l.b16 %v32
  %v46 = vpack.c.b16 %v43, %v42
  %v47 = vpack.c.b16 %v45, %v44
  %vm50 = vcmask 261120
  %v52 = vsel %vm50, %v37, 0
  %54 = vmatpush.bf16.msra.mxu0 0
  %55 = vmatpush.bf16.msra.mxu0 0
  %56 = vmatpush.bf16.msra.mxu0 0
  %57 = vmatpush.bf16.msra.mxu0 0
  %58 = vmatpush.bf16.msra.mxu0 0
  %59 = vmatpush.bf16.msra.mxu0 0
  %60 = vmatpush.bf16.msra.mxu0 %v47
  %61 = vmatpush.bf16.msra.mxu0 %v46
  %62 = vmatmul.bf16.gmra.mxu0 %v52
  %v63 = vpop.f32.mrf.mxu0
  %v64 = vadd.f32 0.0, %v63
  %v65 = vpop.f32.mrf.mxu0
  %v66 = vadd.f32 0.0, %v65
  %67 = vdwg.mxu0
  %v68 = vadd.f32 %v25, %v64
  %v69 = vadd.f32 %v26, %v66
  %70 = vst.msk [vmem:[#allocation2] sm:$0xff] %vm50, %v68
  %71 = vst.msk [vmem:[#allocation2 + $0x8] sm:$0xff] %vm50, %v69
  // Predicated region
  $region22: #{multitask_esm2_forward.13} parent=0 // pred_check
    %p72 = pneg %p18
  $region23: #{multitask_esm2_forward.13} parent=0 // pred_check_branch
    %74 = sbr.rel (%p72) target = $region25
  $region24: #{multitask_esm2_forward.13} parent=0 // pred_region
    %v75 = vld [vmem:[#allocation2] sm:$0xff]
    %v76 = vld [vmem:[#allocation2 + $0x8] sm:$0xff]
    %v77 = vld [vmem:[%s2] sm:$0x1]
    %v79 = vperm.slane %v77, 0
    %v81 = vadd.f32 %v75, %v79
    %v82 = vadd.f32 %v76, %v79
    %v83 = vld [vmem:[%s3] sm:$0xff]
    %v84 = vld [vmem:[%s3 + $0x8] sm:$0xff]
    %v85 = vadd.f32 %v81, %v83
    %v86 = vadd.f32 %v82, %v84
    %87 = vst.msk [vmem:[%s4] sm:$0xff] %vm50, %v85
    %88 = vst.msk [vmem:[%s4 + $0x8] sm:$0xff] %vm50, %v86
  $region25: #{multitask_esm2_forward.13} parent=0 // pred_fallthru
    _
  // Predicated region
  $region26: #{multitask_esm2_forward.13} parent=0 // pred_check
    _
  $region27: #{multitask_esm2_forward.13} parent=0 // pred_check_branch
    %90 = sbr.rel (0) target = $region29
  $region28: #{multitask_esm2_forward.13} parent=0 // pred_region
    _
  $region29: #{multitask_esm2_forward.13} parent=0 // pred_fallthru
    _
  // Predicated region
  $region30: #{multitask_esm2_forward.13} parent=0 // pred_check
    _
  $region31: #{multitask_esm2_forward.13} parent=0 // pred_check_branch
    %92 = sbr.rel (0) target = $region33
  $region32: #{multitask_esm2_forward.13} parent=0 // pred_region
    _
  $region33: #{multitask_esm2_forward.13} parent=0 // pred_fallthru
    _

// kernel: multitask_esm2_forward.11
$region0: #{multitask_esm2_forward.11}
  #allocation0 [shape = 'u32[]', space=smem, size = 0x4, offset = 0x4, fixed_abs, tag = 'smem constant byte address 0x4 - core index']
  #allocation1 [shape = 'u32[72,128]{1,0:T(1,128)}', space=vmem, size = 0x9000, scoped, tag = 'internal scratch']
  #allocation2 [shape = 'bf16[16,32]{1,0:T(8,128)(2,1)}', space=vmem, size = 0x1000, scoped, tag = 'scratch operand']
  %s0 = inlined_call_operand.vmem [shape: f32[16,32], index: 0, kind: input, shape index: {}]
  %s1 = inlined_call_operand.vmem [shape: f32[1,32], index: 1, kind: input, shape index: {}]
  %s2 = inlined_call_operand.vmem [shape: f32[1,32], index: 2, kind: input, shape index: {}]
  %s3 = inlined_call_operand.vmem [shape: bf16[32,96], index: 3, kind: input, shape index: {}]
  %s4 = inlined_call_operand.vmem [shape: f32[1,96], index: 4, kind: input, shape index: {}]
  %s5 = inlined_call_operand.vmem [shape: bf16[16,96], index: 5, kind: output, shape index: {}]
  %s6 = sld [smem:[#allocation0]]
  $region34: #{multitask_esm2_forward.11} parent=0
    _
  %s8 = ssub.s32 1, %s6
  %s9 = scalar_select 0, %s8, %s6
  // Predicated region
  $region2: #{multitask_esm2_forward.11} parent=0 // pred_check
    _
  $region3: #{multitask_esm2_forward.11} parent=0 // pred_check_branch
    %11 = sbr.rel (0) target = $region5
  $region4: #{multitask_esm2_forward.11} parent=0 // pred_region
    _
  $region5: #{multitask_esm2_forward.11} parent=0 // pred_fallthru
    _
  // Predicated region
  $region6: #{multitask_esm2_forward.11} parent=0 // pred_check
    _
  $region7: #{multitask_esm2_forward.11} parent=0 // pred_check_branch
    %13 = sbr.rel (0) target = $region9
  $region8: #{multitask_esm2_forward.11} parent=0 // pred_region
    _
  $region9: #{multitask_esm2_forward.11} parent=0 // pred_fallthru
    _
  // Predicated region
  $region10: #{multitask_esm2_forward.11} parent=0 // pred_check
    _
  $region11: #{multitask_esm2_forward.11} parent=0 // pred_check_branch
    %15 = sbr.rel (0) target = $region13
  $region12: #{multitask_esm2_forward.11} parent=0 // pred_region
    _
  $region13: #{multitask_esm2_forward.11} parent=0 // pred_fallthru
    _
  // Predicated region
  $region14: #{multitask_esm2_forward.11} parent=0 // pred_check
    _
  $region15: #{multitask_esm2_forward.11} parent=0 // pred_check_branch
    %17 = sbr.rel (0) target = $region17
  $region16: #{multitask_esm2_forward.11} parent=0 // pred_region
    _
  $region17: #{multitask_esm2_forward.11} parent=0 // pred_fallthru
    _
  // Predicated region
  $region18: #{multitask_esm2_forward.11} parent=0 // pred_check
    _
  $region19: #{multitask_esm2_forward.11} parent=0 // pred_check_branch
    %19 = sbr.rel (0) target = $region21
  $region20: #{multitask_esm2_forward.11} parent=0 // pred_region
    _
  $region21: #{multitask_esm2_forward.11} parent=0 // pred_fallthru
    _
  %p21 = scmp.eq.s32.totalorder 0, 0
  // Predicated region
  $region22: #{multitask_esm2_forward.11} parent=0 // pred_check
    %p22 = pneg %p21
  $region23: #{multitask_esm2_forward.11} parent=0 // pred_check_branch
    %24 = sbr.rel (%p22) target = $region25
  $region24: #{multitask_esm2_forward.11} parent=0 // pred_region
    %v25 = vld [vmem:[%s0] sm:$0xff]
    %v26 = vld [vmem:[%s0 + $0x8] sm:$0xff]
    %vm27 = vcmask 261120
    %v28 = vsel %vm27, %v25, 0.0
    %29 = vadd.xlane.f32.xlu0 %v28
    %v30 = vpop.xlane.xlu0 %29
    %v31 = vsel %vm27, %v26, 0.0
    %32 = vadd.xlane.f32.xlu0 %v31
    %v33 = vpop.xlane.xlu0 %32
    %v34 = vrcp.pop 32.0
    %v35 = vmul.f32 32.0, %v34
    %v36 = vsub.f32 1.0, %v35
    %v37 = vmul.f32 %v34, %v36
    %v38 = vadd.f32 %v34, %v37
    %vm39 = vweird.f32 %v34
    %v40 = vsel %vm39, %v34, %v38
    %v41 = vmul.f32 %v30, %v40
    %v42 = vmul.f32 %v33, %v40
    %v43 = vsub.f32 %v25, %v41
    %v44 = vsub.f32 %v26, %v42
    %v45 = vmul.f32 %v43, %v43
    %v46 = vmul.f32 %v44, %v44
    %v47 = vsel %vm27, %v45, 0.0
    %48 = vadd.xlane.f32.xlu0 %v47
    %v49 = vpop.xlane.xlu0 %48
    %v50 = vsel %vm27, %v46, 0.0
    %51 = vadd.xlane.f32.xlu0 %v50
    %v52 = vpop.xlane.xlu0 %51
    %v53 = vmul.f32 %v49, %v40
    %v54 = vmul.f32 %v52, %v40
    %v55 = vadd.f32 %v53, 1e-05
    %v56 = vadd.f32 %v54, 1e-05
    %v57 = vrsqrt.pop %v55
    %v58 = vmul.f32 %v57, %v55
    %v59 = vmul.f32 %v58, %v57
    %v60 = vmul.f32 0.5, %v59
    %v61 = vsub.f32 1.5, %v60
    %v62 = vmul.f32 %v57, %v61
    %vm63 = vweird.f32 %v55
    %vm64 = vweird.f32 %v57
    %vm65 = vmor %vm63, %vm64
    %v66 = vsel %vm65, %v57, %v62
    %v67 = vrsqrt.pop %v56
    %v68 = vmul.f32 %v67, %v56
    %v69 = vmul.f32 %v68, %v67
    %v70 = vmul.f32 0.5, %v69
    %v71 = vsub.f32 1.5, %v70
    %v72 = vmul.f32 %v67, %v71
    %vm73 = vweird.f32 %v56
    %vm74 = vweird.f32 %v67
    %vm75 = vmor %vm73, %vm74
    %v76 = vsel %vm75, %v67, %v72
    %v77 = vmul.f32 %v43, %v66
    %v78 = vmul.f32 %v44, %v76
    %v79 = vld [vmem:[%s1] sm:$0x1]
    %v81 = vperm.slane %v79, 0
    %v83 = vmul.f32 %v77, %v81
    %v84 = vmul.f32 %v78, %v81
    %v85 = vld [vmem:[%s2] sm:$0x1]
    %v87 = vperm.slane %v85, 0
    %v89 = vadd.f32 %v83, %v87
    %v90 = vadd.f32 %v84, %v87
    %v91 = vpack.c.bf16 %v89, %v89
    %v92 = vpack.c.bf16 %v90, %v90
    %vm93 = vcmask 257024
    %94 = vst.msk [vmem:[#allocation2] sm:$0xf] %vm93, %v91
    %95 = vst.msk [vmem:[#allocation2 + $0x4] sm:$0xf] %vm93, %v92
  $region25: #{multitask_esm2_forward.11} parent=0 // pred_fallthru
    _
  %v96 = vld [vmem:[#allocation2] sm:$0xf]
  %v97 = vld [vmem:[#allocation2 + $0x4] sm:$0xf]
  %v98 = vld [vmem:[%s3] sm:$0xf]
  %v99 = vld [vmem:[%s3 + $0x4] sm:$0xf]
  %v100 = vld [vmem:[%s3 + $0x8] sm:$0xf]
  %v101 = vld [vmem:[%s3 + $0xc] sm:$0xf]
  %v102 = vld [vmem:[%s4] sm:$0x1]
  %v104 = vperm.slane %v102, 0
  %v108 = vunpack.c.l.b16 %v96
  %v109 = vunpack.c.l.b16 %v97
  %v110 = vpack.c.b16 %v109, %v108
  %v115 = vunpack.c.l.b16 %v98
  %v116 = vunpack.c.l.b16 %v99
  %v117 = vunpack.c.l.b16 %v100
  %v118 = vunpack.c.l.b16 %v101
  %v119 = vpack.c.b16 %v116, %v115
  %v120 = vpack.c.b16 %v118, %v117
  %vm123 = vcmask 261120
  %v125 = vsel %vm123, %v110, 0
  %127 = vmatpush.bf16.msra.mxu0 0
  %128 = vmatpush.bf16.msra.mxu0 0
  %129 = vmatpush.bf16.msra.mxu0 0
  %130 = vmatpush.bf16.msra.mxu0 0
  %131 = vmatpush.bf16.msra.mxu0 0
  %132 = vmatpush.bf16.msra.mxu0 0
  %133 = vmatpush.bf16.msra.mxu0 %v120
  %134 = vmatpush.bf16.msra.mxu0 %v119
  %135 = vmatmul.bf16.gmra.mxu0 %v125
  %v136 = vpop.f32.mrf.mxu0
  %v137 = vadd.f32 %v104, %v136
  %v138 = vpop.f32.mrf.mxu0
  %v139 = vadd.f32 %v104, %v138
  %140 = vdwg.mxu0
  %v141 = vpack.c.bf16 %v137, %v137
  %v142 = vpack.c.bf16 %v139, %v139
  %vm143 = vcmask 781312
  %144 = vst.msk [vmem:[%s5] sm:$0xf] %vm143, %v141
  %145 = vst.msk [vmem:[%s5 + $0x4] sm:$0xf] %vm143, %v142
  // Predicated region
  $region26: #{multitask_esm2_forward.11} parent=0 // pred_check
    _
  $region27: #{multitask_esm2_forward.11} parent=0 // pred_check_branch
    %147 = sbr.rel (0) target = $region29
  $region28: #{multitask_esm2_forward.11} parent=0 // pred_region
    _
  $region29: #{multitask_esm2_forward.11} parent=0 // pred_fallthru
    _
  // Predicated region
  $region30: #{multitask_esm2_forward.11} parent=0 // pred_check
    _
  $region31: #{multitask_esm2_forward.11} parent=0 // pred_check_branch
    %149 = sbr.rel (0) target = $region33
  $region32: #{multitask_esm2_forward.11} parent=0 // pred_region
    _
  $region33: #{multitask_esm2_forward.11} parent=0 // pred_fallthru
    _

// kernel: multitask_esm2_forward.14
$region0: #{multitask_esm2_forward.14}
  #allocation0 [shape = 'u32[]', space=smem, size = 0x4, offset = 0x4, fixed_abs, tag = 'smem constant byte address 0x4 - core index']
  #allocation1 [shape = 'u32[72,128]{1,0:T(1,128)}', space=vmem, size = 0x9000, scoped, tag = 'internal scratch']
  #allocation2 [shape = 'bf16[16,32]{1,0:T(8,128)(2,1)}', space=vmem, size = 0x1000, scoped, tag = 'scratch operand']
  %s0 = inlined_call_operand.vmem [shape: f32[16,32], index: 0, kind: input, shape index: {}]
  %s1 = inlined_call_operand.vmem [shape: f32[1,32], index: 1, kind: input, shape index: {}]
  %s2 = inlined_call_operand.vmem [shape: f32[1,32], index: 2, kind: input, shape index: {}]
  %s3 = inlined_call_operand.vmem [shape: bf16[32,64], index: 3, kind: input, shape index: {}]
  %s4 = inlined_call_operand.vmem [shape: f32[1,64], index: 4, kind: input, shape index: {}]
  %s5 = inlined_call_operand.vmem [shape: bf16[16,64], index: 5, kind: output, shape index: {}]
  %s6 = sld [smem:[#allocation0]]
  $region34: #{multitask_esm2_forward.14} parent=0
    _
  %s8 = ssub.s32 1, %s6
  %s9 = scalar_select 0, %s8, %s6
  // Predicated region
  $region2: #{multitask_esm2_forward.14} parent=0 // pred_check
    _
  $region3: #{multitask_esm2_forward.14} parent=0 // pred_check_branch
    %11 = sbr.rel (0) target = $region5
  $region4: #{multitask_esm2_forward.14} parent=0 // pred_region
    _
  $region5: #{multitask_esm2_forward.14} parent=0 // pred_fallthru
    _
  // Predicated region
  $region6: #{multitask_esm2_forward.14} parent=0 // pred_check
    _
  $region7: #{multitask_esm2_forward.14} parent=0 // pred_check_branch
    %13 = sbr.rel (0) target = $region9
  $region8: #{multitask_esm2_forward.14} parent=0 // pred_region
    _
  $region9: #{multitask_esm2_forward.14} parent=0 // pred_fallthru
    _
  // Predicated region
  $region10: #{multitask_esm2_forward.14} parent=0 // pred_check
    _
  $region11: #{multitask_esm2_forward.14} parent=0 // pred_check_branch
    %15 = sbr.rel (0) target = $region13
  $region12: #{multitask_esm2_forward.14} parent=0 // pred_region
    _
  $region13: #{multitask_esm2_forward.14} parent=0 // pred_fallthru
    _
  // Predicated region
  $region14: #{multitask_esm2_forward.14} parent=0 // pred_check
    _
  $region15: #{multitask_esm2_forward.14} parent=0 // pred_check_branch
    %17 = sbr.rel (0) target = $region17
  $region16: #{multitask_esm2_forward.14} parent=0 // pred_region
    _
  $region17: #{multitask_esm2_forward.14} parent=0 // pred_fallthru
    _
  // Predicated region
  $region18: #{multitask_esm2_forward.14} parent=0 // pred_check
    _
  $region19: #{multitask_esm2_forward.14} parent=0 // pred_check_branch
    %19 = sbr.rel (0) target = $region21
  $region20: #{multitask_esm2_forward.14} parent=0 // pred_region
    _
  $region21: #{multitask_esm2_forward.14} parent=0 // pred_fallthru
    _
  %p21 = scmp.eq.s32.totalorder 0, 0
  // Predicated region
  $region22: #{multitask_esm2_forward.14} parent=0 // pred_check
    %p22 = pneg %p21
  $region23: #{multitask_esm2_forward.14} parent=0 // pred_check_branch
    %24 = sbr.rel (%p22) target = $region25
  $region24: #{multitask_esm2_forward.14} parent=0 // pred_region
    %v25 = vld [vmem:[%s0] sm:$0xff]
    %v26 = vld [vmem:[%s0 + $0x8] sm:$0xff]
    %vm27 = vcmask 261120
    %v28 = vsel %vm27, %v25, 0.0
    %29 = vadd.xlane.f32.xlu0 %v28
    %v30 = vpop.xlane.xlu0 %29
    %v31 = vsel %vm27, %v26, 0.0
    %32 = vadd.xlane.f32.xlu0 %v31
    %v33 = vpop.xlane.xlu0 %32
    %v34 = vrcp.pop 32.0
    %v35 = vmul.f32 32.0, %v34
    %v36 = vsub.f32 1.0, %v35
    %v37 = vmul.f32 %v34, %v36
    %v38 = vadd.f32 %v34, %v37
    %vm39 = vweird.f32 %v34
    %v40 = vsel %vm39, %v34, %v38
    %v41 = vmul.f32 %v30, %v40
    %v42 = vmul.f32 %v33, %v40
    %v43 = vsub.f32 %v25, %v41
    %v44 = vsub.f32 %v26, %v42
    %v45 = vmul.f32 %v43, %v43
    %v46 = vmul.f32 %v44, %v44
    %v47 = vsel %vm27, %v45, 0.0
    %48 = vadd.xlane.f32.xlu0 %v47
    %v49 = vpop.xlane.xlu0 %48
    %v50 = vsel %vm27, %v46, 0.0
    %51 = vadd.xlane.f32.xlu0 %v50
    %v52 = vpop.xlane.xlu0 %51
    %v53 = vmul.f32 %v49, %v40
    %v54 = vmul.f32 %v52, %v40
    %v55 = vadd.f32 %v53, 1e-05
    %v56 = vadd.f32 %v54, 1e-05
    %v57 = vrsqrt.pop %v55
    %v58 = vmul.f32 %v57, %v55
    %v59 = vmul.f32 %v58, %v57
    %v60 = vmul.f32 0.5, %v59
    %v61 = vsub.f32 1.5, %v60
    %v62 = vmul.f32 %v57, %v61
    %vm63 = vweird.f32 %v55
    %vm64 = vweird.f32 %v57
    %vm65 = vmor %vm63, %vm64
    %v66 = vsel %vm65, %v57, %v62
    %v67 = vrsqrt.pop %v56
    %v68 = vmul.f32 %v67, %v56
    %v69 = vmul.f32 %v68, %v67
    %v70 = vmul.f32 0.5, %v69
    %v71 = vsub.f32 1.5, %v70
    %v72 = vmul.f32 %v67, %v71
    %vm73 = vweird.f32 %v56
    %vm74 = vweird.f32 %v67
    %vm75 = vmor %vm73, %vm74
    %v76 = vsel %vm75, %v67, %v72
    %v77 = vmul.f32 %v43, %v66
    %v78 = vmul.f32 %v44, %v76
    %v79 = vld [vmem:[%s1] sm:$0x1]
    %v81 = vperm.slane %v79, 0
    %v83 = vmul.f32 %v77, %v81
    %v84 = vmul.f32 %v78, %v81
    %v85 = vld [vmem:[%s2] sm:$0x1]
    %v87 = vperm.slane %v85, 0
    %v89 = vadd.f32 %v83, %v87
    %v90 = vadd.f32 %v84, %v87
    %v91 = vpack.c.bf16 %v89, %v89
    %v92 = vpack.c.bf16 %v90, %v90
    %vm93 = vcmask 257024
    %94 = vst.msk [vmem:[#allocation2] sm:$0xf] %vm93, %v91
    %95 = vst.msk [vmem:[#allocation2 + $0x4] sm:$0xf] %vm93, %v92
  $region25: #{multitask_esm2_forward.14} parent=0 // pred_fallthru
    _
  %v96 = vld [vmem:[#allocation2] sm:$0xf]
  %v97 = vld [vmem:[#allocation2 + $0x4] sm:$0xf]
  %v98 = vld [vmem:[%s3] sm:$0xf]
  %v99 = vld [vmem:[%s3 + $0x4] sm:$0xf]
  %v100 = vld [vmem:[%s3 + $0x8] sm:$0xf]
  %v101 = vld [vmem:[%s3 + $0xc] sm:$0xf]
  %v102 = vld [vmem:[%s4] sm:$0x1]
  %v104 = vperm.slane %v102, 0
  %v108 = vunpack.c.l.b16 %v96
  %v109 = vunpack.c.l.b16 %v97
  %v110 = vpack.c.b16 %v109, %v108
  %v115 = vunpack.c.l.b16 %v98
  %v116 = vunpack.c.l.b16 %v99
  %v117 = vunpack.c.l.b16 %v100
  %v118 = vunpack.c.l.b16 %v101
  %v119 = vpack.c.b16 %v116, %v115
  %v120 = vpack.c.b16 %v118, %v117
  %vm123 = vcmask 261120
  %v125 = vsel %vm123, %v110, 0
  %127 = vmatpush.bf16.msra.mxu0 0
  %128 = vmatpush.bf16.msra.mxu0 0
  %129 = vmatpush.bf16.msra.mxu0 0
  %130 = vmatpush.bf16.msra.mxu0 0
  %131 = vmatpush.bf16.msra.mxu0 0
  %132 = vmatpush.bf16.msra.mxu0 0
  %133 = vmatpush.bf16.msra.mxu0 %v120
  %134 = vmatpush.bf16.msra.mxu0 %v119
  %135 = vmatmul.bf16.gmra.mxu0 %v125
  %v136 = vpop.f32.mrf.mxu0
  %v137 = vadd.f32 %v104, %v136
  %v138 = vpop.f32.mrf.mxu0
  %v139 = vadd.f32 %v104, %v138
  %140 = vdwg.mxu0
  %v141 = vmul.f32 %v137, 0.5
  %v142 = vmul.f32 %v139, 0.5
  %v143 = vmul.f32 %v137, 0.70710677
  %v144 = vmul.f32 %v139, 0.70710677
  %vm145 = vcmp.ge.f32.partialorder %v143, 0.0
  %vm146 = vcmp.ge.f32.partialorder %v144, 0.0
  %v147 = vsel %vm145, 1.0, -1.0
  %v148 = vsel %vm146, 1.0, -1.0
  %v149 = vand.u32 2147483647, %v143
  %v150 = vand.u32 2147483647, %v144
  %v151 = vmul.f32 %v149, 0.3275911
  %v152 = vmul.f32 %v150, 0.3275911
  %v153 = vadd.f32 %v151, 1.0
  %v154 = vadd.f32 %v152, 1.0
  %v155 = vrcp.pop %v153
  %v156 = vmul.f32 %v153, %v155
  %v157 = vsub.f32 1.0, %v156
  %v158 = vmul.f32 %v155, %v157
  %v159 = vadd.f32 %v155, %v158
  %vm160 = vweird.f32 %v153
  %vm161 = vweird.f32 %v155
  %vm162 = vmor %vm160, %vm161
  %v163 = vsel %vm162, %v155, %v159
  %v164 = vand.u32 2147483647, %v153
  %vm165 = vcmp.eq.f32.partialorder %v164, 8.507059e+37
  %v166 = vand.u32 %v153, 2147483648
  %v167 = vor.u32 1.1754944e-38, %v166
  %v168 = vsel %vm165, %v167, %v163
  %v169 = vmul.f32 1.0, %v168
  %v170 = vrcp.pop %v154
  %v171 = vmul.f32 %v154, %v170
  %v172 = vsub.f32 1.0, %v171
  %v173 = vmul.f32 %v170, %v172
  %v174 = vadd.f32 %v170, %v173
  %vm175 = vweird.f32 %v154
  %vm176 = vweird.f32 %v170
  %vm177 = vmor %vm175, %vm176
  %v178 = vsel %vm177, %v170, %v174
  %v179 = vand.u32 2147483647, %v154
  %vm180 = vcmp.eq.f32.partialorder %v179, 8.507059e+37
  %v181 = vand.u32 %v154, 2147483648
  %v182 = vor.u32 1.1754944e-38, %v181
  %v183 = vsel %vm180, %v182, %v178
  %v184 = vmul.f32 1.0, %v183
  %v185 = vmul.f32 %v169, 1.0614054
  %v186 = vmul.f32 %v184, 1.0614054
  %v187 = vadd.f32 %v185, -1.4531521
  %v188 = vadd.f32 %v186, -1.4531521
  %v189 = vmul.f32 %v187, %v169
  %v190 = vmul.f32 %v188, %v184
  %v191 = vadd.f32 %v189, 1.4214138
  %v192 = vadd.f32 %v190, 1.4214138
  %v193 = vmul.f32 %v191, %v169
  %v194 = vmul.f32 %v192, %v184
  %v195 = vadd.f32 %v193, -0.28449672
  %v196 = vadd.f32 %v194, -0.28449672
  %v197 = vmul.f32 %v195, %v169
  %v198 = vmul.f32 %v196, %v184
  %v199 = vadd.f32 %v197, 0.2548296
  %v200 = vadd.f32 %v198, 0.2548296
  %v201 = vmul.f32 %v199, %v169
  %v202 = vmul.f32 %v200, %v184
  %v203 = vsub.f32 0.0, %v149
  %v204 = vsub.f32 0.0, %v150
  %v205 = vmul.f32 %v203, %v149
  %v206 = vmul.f32 %v204, %v150
  %v207 = vmul.f32 %v205, 1.442695
  %v208 = vpow.pop %v207
  %v209 = vmul.f32 %v206, 1.442695
  %v210 = vpow.pop %v209
  %v211 = vmul.f32 %v201, %v208
  %v212 = vmul.f32 %v202, %v210
  %v213 = vsub.f32 1.0, %v211
  %v214 = vsub.f32 1.0, %v212
  %v215 = vmul.f32 %v147, %v213
  %v216 = vmul.f32 %v148, %v214
  %v217 = vadd.f32 %v215, 1.0
  %v218 = vadd.f32 %v216, 1.0
  %v219 = vmul.f32 %v141, %v217
  %v220 = vmul.f32 %v142, %v218
  %v221 = vpack.c.bf16 %v219, %v219
  %v222 = vpack.c.bf16 %v220, %v220
  %vm223 = vcmask 519168
  %224 = vst.msk [vmem:[%s5] sm:$0xf] %vm223, %v221
  %225 = vst.msk [vmem:[%s5 + $0x4] sm:$0xf] %vm223, %v222
  // Predicated region
  $region26: #{multitask_esm2_forward.14} parent=0 // pred_check
    _
  $region27: #{multitask_esm2_forward.14} parent=0 // pred_check_branch
    %227 = sbr.rel (0) target = $region29
  $region28: #{multitask_esm2_forward.14} parent=0 // pred_region
    _
  $region29: #{multitask_esm2_forward.14} parent=0 // pred_fallthru
    _
  // Predicated region
  $region30: #{multitask_esm2_forward.14} parent=0 // pred_check
    _
  $region31: #{multitask_esm2_forward.14} parent=0 // pred_check_branch
    %229 = sbr.rel (0) target = $region33
  $region32: #{multitask_esm2_forward.14} parent=0 // pred_region
    _
  $region33: #{multitask_esm2_forward.14} parent=0 // pred_fallthru
    _

// kernel: multitask_esm2_forward.12
$region0: #{multitask_esm2_forward.12}
  #allocation0 [shape = 'u32[]', space=smem, size = 0x4, offset = 0x4, fixed_abs, tag = 'smem constant byte address 0x4 - core index']
  #allocation1 [shape = 'u32[72,128]{1,0:T(1,128)}', space=vmem, size = 0x9000, scoped, tag = 'internal scratch']
  %s0 = inlined_call_operand.vmem [shape: bf16[2,8,96], index: 0, kind: input, shape index: {}]
  %s1 = inlined_call_operand.vmem [shape: f32[2,1,8], index: 1, kind: input, shape index: {}]
  %s2 = inlined_call_operand.vmem [shape: f32[8,32], index: 2, kind: input, shape index: {}]
  %s3 = inlined_call_operand.vmem [shape: f32[8,32], index: 3, kind: input, shape index: {}]
  %s4 = inlined_call_operand.vmem [shape: bf16[32,32], index: 4, kind: input, shape index: {}]
  %s5 = inlined_call_operand.vmem [shape: bf16[2,8,32], index: 5, kind: output, shape index: {}]
  %s6 = sld [smem:[#allocation0]]
  $region53: #{multitask_esm2_forward.12} parent=0
    _
  %s8 = ssub.s32 1, %s6
  %s9 = scalar_select 0, %s8, %s6
  loop: start=0, step=1, limit=4
  $region2: #{multitask_esm2_forward.12} parent=0 // loop_pre_header
    _
  $region3: #{multitask_esm2_forward.12} parent=0 // loop_header
    %s11 = sphi 0, %s15
    %p12 = scmp.ge.s32.totalorder %s11, 4
    %s18 = sphi 0, %s30
    %s19 = sphi 0, %s26
    %s20 = sphi 0, %s18
    %s21 = sphi 0, %s19
    %s22 = sphi 0, %s20
    %s23 = sphi 0, %s21
    %s35 = sphi 0, %s37
    %s38 = sphi 0, %s35
    %s39 = sphi 0, %s38
    %s55 = sphi 0, %s39
    %s61 = sphi 0, %s63
    %s64 = sphi 0, %s61
    %s65 = sphi 0, %s64
    %s81 = sphi 0, %s65
    %s85 = sphi 0, %s85
    %s87 = sphi 0, %s85
    %s88 = sphi 0, %s87
    %s102 = sphi 0, %s88
    %s106 = sphi 0, %s106
    %s108 = sphi 0, %s106
    %s109 = sphi 0, %s108
    %s123 = sphi 0, %s109
    %s127 = sphi 0, %s127
    %s129 = sphi 0, %s127
    %s130 = sphi 0, %s129
    %s144 = sphi 0, %s130
    %s152 = sphi 0, %s154
    %s155 = sphi 0, %s152
    %s156 = sphi 0, %s155
    %s172 = sphi 0, %s156
  $region4: #{multitask_esm2_forward.12} parent=0 // loop_header_branch
    %14 = sbr.rel (%p12) target = $region8
  $region5: #{multitask_esm2_forward.12} parent=0 // loop_body
    %s16 = ssub.s32 %s11, 1
    %s17 = ssub.s32 %s11, 2
    %s24 = sadd.s32 1, %s19
    %p25 = scmp.ge.s32.totalorder %s24, 1
    %s26 = scalar_select %p25, 0, %s24
    %s27 = sadd.s32 1, %s18
    %s28 = scalar_select %p25, %s27, %s18
    %p29 = scmp.ge.s32.totalorder %s28, 2
    %s30 = scalar_select %p29, 0, %s28
    %s31 = ssub.s32 %s18, %s30
    %s32 = ssub.s32 %s19, %s26
    %s33 = sor.u32 %s31, %s32
    %p34 = scmp.eq.s32.totalorder %s33, 0
    %s36 = sadd.s32 %s35, 1
    %s37 = scalar_select %p34, %s35, %s36
    %p40 = pneg %p34
    %p41 = scmp.eq.s32.totalorder %s11, 1
    %p42 = por %p40, %p41
    %p43 = scmp.ne.s32.totalorder %s35, %s38
    %p44 = scmp.eq.s32.totalorder %s11, 0
    %p45 = por %p43, %p44
    %p46 = scmp.ne.s32.totalorder %s35, %s38
    %p47 = scmp.eq.s32.totalorder %s16, 1
    %p48 = por %p46, %p47
    %p49 = scmp.ne.s32.totalorder %s38, %s39
    %p50 = scmp.eq.s32.totalorder %s16, 0
    %p51 = por %p49, %p50
    %p52 = scmp.ne.s32.totalorder %s38, %s39
    %p53 = scmp.eq.s32.totalorder %s17, 1
    %p54 = por %p52, %p53
    %p56 = scmp.ne.s32.totalorder %s39, %s55
    %p57 = scmp.eq.s32.totalorder %s17, 0
    %p58 = por %p56, %p57
    %s59 = ssub.s32 %s18, %s30
    %p60 = scmp.eq.s32.totalorder %s59, 0
    %s62 = sadd.s32 %s61, 1
    %s63 = scalar_select %p60, %s61, %s62
    %p66 = pneg %p60
    %p67 = scmp.eq.s32.totalorder %s11, 1
    %p68 = por %p66, %p67
    %p69 = scmp.ne.s32.totalorder %s61, %s64
    %p70 = scmp.eq.s32.totalorder %s11, 0
    %p71 = por %p69, %p70
    %p72 = scmp.ne.s32.totalorder %s61, %s64
    %p73 = scmp.eq.s32.totalorder %s16, 1
    %p74 = por %p72, %p73
    %p75 = scmp.ne.s32.totalorder %s64, %s65
    %p76 = scmp.eq.s32.totalorder %s16, 0
    %p77 = por %p75, %p76
    %p78 = scmp.ne.s32.totalorder %s64, %s65
    %p79 = scmp.eq.s32.totalorder %s17, 1
    %p80 = por %p78, %p79
    %p82 = scmp.ne.s32.totalorder %s65, %s81
    %p83 = scmp.eq.s32.totalorder %s17, 0
    %p84 = por %p82, %p83
    %s86 = sadd.s32 %s85, 1
    %p89 = scmp.eq.s32.totalorder %s11, 1
    %p90 = scmp.ne.s32.totalorder %s85, %s87
    %p91 = scmp.eq.s32.totalorder %s11, 0
    %p92 = por %p90, %p91
    %p93 = scmp.ne.s32.totalorder %s85, %s87
    %p94 = scmp.eq.s32.totalorder %s16, 1
    %p95 = por %p93, %p94
    %p96 = scmp.ne.s32.totalorder %s87, %s88
    %p97 = scmp.eq.s32.totalorder %s16, 0
    %p98 = por %p96, %p97
    %p99 = scmp.ne.s32.totalorder %s87, %s88
    %p100 = scmp.eq.s32.totalorder %s17, 1
    %p101 = por %p99, %p100
    %p103 = scmp.ne.s32.totalorder %s88, %s102
    %p104 = scmp.eq.s32.totalorder %s17, 0
    %p105 = por %p103, %p104
    %s107 = sadd.s32 %s106, 1
    %p110 = scmp.eq.s32.totalorder %s11, 1
    %p111 = scmp.ne.s32.totalorder %s106, %s108
    %p112 = scmp.eq.s32.totalorder %s11, 0
    %p113 = por %p111, %p112
    %p114 = scmp.ne.s32.totalorder %s106, %s108
    %p115 = scmp.eq.s32.totalorder %s16, 1
    %p116 = por %p114, %p115
    %p117 = scmp.ne.s32.totalorder %s108, %s109
    %p118 = scmp.eq.s32.totalorder %s16, 0
    %p119 = por %p117, %p118
    %p120 = scmp.ne.s32.totalorder %s108, %s109
    %p121 = scmp.eq.s32.totalorder %s17, 1
    %p122 = por %p120, %p121
    %p124 = scmp.ne.s32.totalorder %s109, %s123
    %p125 = scmp.eq.s32.totalorder %s17, 0
    %p126 = por %p124, %p125
    %s128 = sadd.s32 %s127, 1
    %p131 = scmp.eq.s32.totalorder %s11, 1
    %p132 = scmp.ne.s32.totalorder %s127, %s129
    %p133 = scmp.eq.s32.totalorder %s11, 0
    %p134 = por %p132, %p133
    %p135 = scmp.ne.s32.totalorder %s127, %s129
    %p136 = scmp.eq.s32.totalorder %s16, 1
    %p137 = por %p135, %p136
    %p138 = scmp.ne.s32.totalorder %s129, %s130
    %p139 = scmp.eq.s32.totalorder %s16, 0
    %p140 = por %p138, %p139
    %p141 = scmp.ne.s32.totalorder %s129, %s130
    %p142 = scmp.eq.s32.totalorder %s17, 1
    %p143 = por %p141, %p142
    %p145 = scmp.ne.s32.totalorder %s130, %s144
    %p146 = scmp.eq.s32.totalorder %s17, 0
    %p147 = por %p145, %p146
    %s148 = ssub.s32 %s18, %s30
    %s149 = ssub.s32 %s19, %s26
    %s150 = sor.u32 %s148, %s149
    %p151 = scmp.eq.s32.totalorder %s150, 0
    %s153 = sadd.s32 %s152, 1
    %s154 = scalar_select %p151, %s152, %s153
    %p157 = pneg %p151
    %p158 = scmp.eq.s32.totalorder %s11, 1
    %p159 = por %p157, %p158
    %p160 = scmp.ne.s32.totalorder %s152, %s155
    %p161 = scmp.eq.s32.totalorder %s11, 0
    %p162 = por %p160, %p161
    %p163 = scmp.ne.s32.totalorder %s152, %s155
    %p164 = scmp.eq.s32.totalorder %s16, 1
    %p165 = por %p163, %p164
    %p166 = scmp.ne.s32.totalorder %s155, %s156
    %p167 = scmp.eq.s32.totalorder %s16, 0
    %p168 = por %p166, %p167
    %p169 = scmp.ne.s32.totalorder %s155, %s156
    %p170 = scmp.eq.s32.totalorder %s17, 1
    %p171 = por %p169, %p170
    %p173 = scmp.ne.s32.totalorder %s156, %s172
    %p174 = scmp.eq.s32.totalorder %s17, 0
    %p175 = por %p173, %p174
    %p176 = scmp.le.s32.totalorder 1, %s11
    %p177 = scmp.lt.s32.totalorder %s11, 3
    %p178 = pnand %p176, %p177
    %p179 = pneg %p178
    // Predicated region
    $region9: #{multitask_esm2_forward.12} parent=5 // pred_check
      _
    $region10: #{multitask_esm2_forward.12} parent=5 // pred_check_branch
      %181 = sbr.rel (%p178) target = $region12
    $region11: #{multitask_esm2_forward.12} parent=5 // pred_region
      %s182 = ssub.s32 %s11, 1
      // Predicated region
      $region13: #{multitask_esm2_forward.12} parent=11 // pred_check
        %p183 = pneg %p98
      $region14: #{multitask_esm2_forward.12} parent=11 // pred_check_branch
        %185 = sbr.rel (%p183) target = $region16
      $region15: #{multitask_esm2_forward.12} parent=11 // pred_region
        _
      $region16: #{multitask_esm2_forward.12} parent=11 // pred_fallthru
        _
      // Predicated region
      $region17: #{multitask_esm2_forward.12} parent=11 // pred_check
        %p186 = pneg %p119
      $region18: #{multitask_esm2_forward.12} parent=11 // pred_check_branch
        %188 = sbr.rel (%p186) target = $region20
      $region19: #{multitask_esm2_forward.12} parent=11 // pred_region
        _
      $region20: #{multitask_esm2_forward.12} parent=11 // pred_fallthru
        _
      // Predicated region
      $region21: #{multitask_esm2_forward.12} parent=11 // pred_check
        %p189 = pneg %p140
      $region22: #{multitask_esm2_forward.12} parent=11 // pred_check_branch
        %191 = sbr.rel (%p189) target = $region24
      $region23: #{multitask_esm2_forward.12} parent=11 // pred_region
        _
      $region24: #{multitask_esm2_forward.12} parent=11 // pred_fallthru
        _
    $region12: #{multitask_esm2_forward.12} parent=5 // pred_fallthru
      _
    %p192 = scmp.lt.s32.totalorder %s11, 2
    // Predicated region
    $region25: #{multitask_esm2_forward.12} parent=5 // pred_check
      %p193 = pneg %p192
    $region26: #{multitask_esm2_forward.12} parent=5 // pred_check_branch
      %195 = sbr.rel (%p193) target = $region28
    $region27: #{multitask_esm2_forward.12} parent=5 // pred_region
      // Predicated region
      $region29: #{multitask_esm2_forward.12} parent=27 // pred_check
        %p196 = pneg %p45
      $region30: #{multitask_esm2_forward.12} parent=27 // pred_check_branch
        %198 = sbr.rel (%p196) target = $region32
      $region31: #{multitask_esm2_forward.12} parent=27 // pred_region
        %p199 = scmp.lt.s32.totalorder %s18, 1
        %s200 = scalar_select %p199, %s18, 1
        %p201 = scmp.lt.s32.totalorder %s19, 0
        %s202 = scalar_select %p201, %s19, 0
        %s203 = sadd.s32 %s202, %s200
        %s204 = smul.addr %s203, 4
        %s205 = scalar_lea.vmem %s0, %s204
      $region32: #{multitask_esm2_forward.12} parent=27 // pred_fallthru
        _
      // Predicated region
      $region33: #{multitask_esm2_forward.12} parent=27 // pred_check
        %p206 = pneg %p71
      $region34: #{multitask_esm2_forward.12} parent=27 // pred_check_branch
        %208 = sbr.rel (%p206) target = $region36
      $region35: #{multitask_esm2_forward.12} parent=27 // pred_region
        %p209 = scmp.lt.s32.totalorder %s18, 1
        %s210 = scalar_select %p209, %s18, 1
        %s211 = scalar_lea.vmem %s1, %s210
      $region36: #{multitask_esm2_forward.12} parent=27 // pred_fallthru
        _
    $region28: #{multitask_esm2_forward.12} parent=5 // pred_fallthru
      _
    %p212 = scmp.le.s32.totalorder 1, %s11
    %p213 = scmp.lt.s32.totalorder %s11, 3
    %p214 = pnand %p212, %p213
    %p215 = pneg %p214
    // Predicated region
    $region37: #{multitask_esm2_forward.12} parent=5 // pred_check
      _
    $region38: #{multitask_esm2_forward.12} parent=5 // pred_check_branch
      %217 = sbr.rel (%p214) target = $region40
    $region39: #{multitask_esm2_forward.12} parent=5 // pred_region
      %s218 = ssub.s32 %s11, 1
      %p219 = scmp.lt.s32.totalorder %s20, 1
      %s220 = scalar_select %p219, %s20, 1
      %p221 = scmp.lt.s32.totalorder %s21, 0
      %s222 = scalar_select %p221, %s21, 0
      %s223 = sadd.s32 %s222, %s220
      %s224 = smul.addr %s223, 4
      %s225 = scalar_lea.vmem %s0, %s224
      %p226 = pneg %p51
      %p227 = pneg %p48
      %p228 = scmp.lt.s32.totalorder %s20, 1
      %s229 = scalar_select %p228, %s20, 1
      %s230 = scalar_lea.vmem %s1, %s229
      %p231 = pneg %p77
      %p232 = pneg %p74
      %p233 = pneg %p98
      %p234 = pneg %p95
      %p235 = pneg %p119
      %p236 = pneg %p116
      %p237 = pneg %p140
      %p238 = pneg %p137
      %p239 = pneg %p168
      %p240 = pneg %p165
      %p241 = scmp.lt.s32.totalorder %s20, 1
      %s242 = scalar_select %p241, %s20, 1
      %p243 = scmp.lt.s32.totalorder %s21, 0
      %s244 = scalar_select %p243, %s21, 0
      %s245 = sadd.s32 %s244, %s242
      %s246 = smul.addr %s245, 4
      %s247 = scalar_lea.vmem %s5, %s246
      %p248 = scmp.lt.s32.totalorder %s20, 1
      %s249 = scalar_select %p248, %s20, 1
      %p250 = scmp.lt.s32.totalorder %s21, 0
      %s251 = scalar_select %p250, %s21, 0
      %s252 = sadd.s32 %s251, %s249
      %s253 = smul.addr %s252, 4
      %s254 = scalar_lea.vmem %s0, %s253
      %p255 = scmp.lt.s32.totalorder %s20, 1
      %s256 = scalar_select %p255, %s20, 1
      %s257 = scalar_lea.vmem %s1, %s256
      %p258 = scmp.lt.s32.totalorder %s20, 1
      %s259 = scalar_select %p258, %s20, 1
      %p260 = scmp.lt.s32.totalorder %s21, 0
      %s261 = scalar_select %p260, %s21, 0
      %s262 = sadd.s32 %s261, %s259
      %s263 = smul.addr %s262, 4
      %s264 = scalar_lea.vmem %s5, %s263
      %v266 = vld [vmem:[%s254] sm:$0xf]
      %v267 = vunpack.c.l.bf16 %v266
      %v268 = vmul.f32 %v267, 0.35355338
      %v269 = vld [vmem:[%s2] sm:$0xff]
      %v270 = vld [vmem:[%s3] sm:$0xff]
      %v271 = vld [vmem:[%s4] sm:$0xf]
      %v272 = vld [vmem:[%s4 + $0x4] sm:$0xf]
      %v273 = vld [vmem:[%s4 + $0x8] sm:$0xf]
      %v274 = vld [vmem:[%s4 + $0xc] sm:$0xf]
      %v275 = vld [vmem:[%s257] sm:$0x1]
      %v276 = vpack.c.bf16 %v268, %v268
      %v281 = vunpack.c.l.b16 %v271
      %v282 = vunpack.c.l.b16 %v272
      %v283 = vunpack.c.l.b16 %v273
      %v284 = vunpack.c.l.b16 %v274
      %v285 = vpack.c.b16 %v282, %v281
      %v286 = vpack.c.b16 %v284, %v283
      %vm289 = vcmask 261120
      %v291 = vsel %vm289, %v276, 0
      %293 = vmatpush.bf16.msra.mxu0 0
      %294 = vmatpush.bf16.msra.mxu0 0
      %295 = vmatpush.bf16.msra.mxu0 0
      %296 = vmatpush.bf16.msra.mxu0 0
      %297 = vmatpush.bf16.msra.mxu0 0
      %298 = vmatpush.bf16.msra.mxu0 0
      %299 = vmatpush.bf16.msra.mxu0 %v286
      %300 = vmatpush.bf16.msra.mxu0 %v285
      %301 = vmatmul.bf16.gmra.mxu0 %v291
      %v302 = vpop.f32.mrf.mxu0
      %v303 = vadd.f32 0.0, %v302
      %v304 = vpop.f32.mrf.mxu0
      %305 = vdwg.mxu0
      %v307 = vunpack.c.l.b16 %v266
      %v308 = vpack.c.b16 %v307, %v307
      %309 = vrot.lane.b32.xlu0 %v308, 96
      %v310 = vpop.permute.xlu0 %309
      %v312 = vsel %vm289, %v310, 0
      %314 = vmatpush.bf16.msra.mxu0 0
      %315 = vmatpush.bf16.msra.mxu0 0
      %316 = vmatpush.bf16.msra.mxu0 0
      %317 = vmatpush.bf16.msra.mxu0 0
      %318 = vmatpush.bf16.msra.mxu0 0
      %319 = vmatpush.bf16.msra.mxu0 0
      %320 = vmatpush.bf16.msra.mxu0 %v286
      %321 = vmatpush.bf16.msra.mxu0 %v285
      %322 = vmatmul.bf16.gmra.mxu0 %v312
      %v323 = vpop.f32.mrf.mxu0
      %v324 = vadd.f32 0.0, %v323
      %v325 = vpop.f32.mrf.mxu0
      %326 = vdwg.mxu0
      %v327 = vmul.f32 %v268, %v269
      %v328 = vmul.f32 %v303, %v270
      %v329 = vadd.f32 %v327, %v328
      %v330 = vpack.c.bf16 %v329, %v329
      %332 = vrot.lane.b32.xlu0 %v269, 32
      %v333 = vpop.permute.xlu0 %332
      %v335 = vmul.f32 %v267, %v333
      %v336 = vmul.f32 %v324, %v270
      %338 = vrot.lane.b32.xlu0 %v336, 32
      %v339 = vpop.permute.xlu0 %338
      %v341 = vadd.f32 %v335, %v339
      %v342 = vpack.c.bf16 %v341, %v341
      %v344 = vperm.slane %v275, 0
      %v347 = vunpack.c.l.b16 %v342
      %v348 = vpack.c.b16 %v347, %v347
      %349 = vrot.lane.b32.xlu0 %v348, 96
      %v350 = vpop.permute.xlu0 %349
      %vm351 = vcmask 64512
      %v353 = vsel %vm351, %v330, 0
      %v356 = vsel %vm351, %v350, 0
      %358 = vmatpush.bf16.xpose.msra.mxu0 0
      %359 = vmatpush.bf16.xpose.msra.mxu0 0
      %360 = vmatpush.bf16.xpose.msra.mxu0 0
      %361 = vmatpush.bf16.xpose.msra.mxu0 0
      %362 = vmatpush.bf16.xpose.msra.mxu0 0
      %363 = vmatpush.bf16.xpose.msra.mxu0 0
      %364 = vmatpush.bf16.xpose.msra.mxu0 0
      %365 = vmatpush.bf16.xpose.msra.mxu0 %v356
      %366 = vmatmul.bf16.gmra.mxu0 %v353
      %v367 = vpop.f32.mrf.mxu0
      %v368 = vadd.f32 %v344, %v367
      %v369 = vpop.f32.mrf.mxu0
      %370 = vdwg.mxu0
      %v371 = vsel %vm351, %v368, -inf
      %372 = vmax.xlane.f32.xlu0 %v371
      %v373 = vpop.xlane.xlu0 %372
      %v374 = vsub.f32 %v368, %v373
      %v375 = vmul.f32 %v374, 1.442695
      %v376 = vpow.pop %v375
      %v377 = vsel %vm351, %v376, 0.0
      %378 = vadd.xlane.f32.xlu0 %v377
      %v379 = vpop.xlane.xlu0 %378
      %v380 = vrcp.pop %v379
      %v381 = vmul.f32 %v376, %v380
      %v382 = vpack.c.bf16 %v381, %v381
      %383 = vrot.lane.b32.xlu0 %v308, 64
      %v384 = vpop.permute.xlu0 %383
      %v386 = vsel %vm351, %v382, 0
      %vm388 = vcmask 1043456
      %v390 = vsel %vm388, %v384, 0
      %392 = vmatpush.bf16.msra.mxu0 0
      %393 = vmatpush.bf16.msra.mxu0 0
      %394 = vmatpush.bf16.msra.mxu0 0
      %395 = vmatpush.bf16.msra.mxu0 0
      %396 = vmatpush.bf16.msra.mxu0 0
      %397 = vmatpush.bf16.msra.mxu0 0
      %398 = vmatpush.bf16.msra.mxu0 0
      %399 = vmatpush.bf16.msra.mxu0 %v390
      %400 = vmatmul.bf16.gmra.mxu0 %v386
      %v401 = vpop.f32.mrf.mxu0
      %v402 = vadd.f32 0.0, %v401
      %v403 = vpop.f32.mrf.mxu0
      %404 = vdwg.mxu0
      %v406 = vunpack.c.l.b16 %v330
      %v407 = vpack.c.b16 %v406, %v406
      %408 = vrot.lane.b32.xlu0 %v407, 120
      %v409 = vpop.permute.xlu0 %408
      %410 = vrot.lane.b32.xlu0 %v348, 88
      %v411 = vpop.permute.xlu0 %410
      %v413 = vsel %vm351, %v409, 0
      %v416 = vsel %vm351, %v411, 0
      %418 = vmatpush.bf16.xpose.msra.mxu0 0
      %419 = vmatpush.bf16.xpose.msra.mxu0 0
      %420 = vmatpush.bf16.xpose.msra.mxu0 0
      %421 = vmatpush.bf16.xpose.msra.mxu0 0
      %422 = vmatpush.bf16.xpose.msra.mxu0 0
      %423 = vmatpush.bf16.xpose.msra.mxu0 0
      %424 = vmatpush.bf16.xpose.msra.mxu0 0
      %425 = vmatpush.bf16.xpose.msra.mxu0 %v416
      %426 = vmatmul.bf16.gmra.mxu0 %v413
      %v427 = vpop.f32.mrf.mxu0
      %v428 = vadd.f32 %v344, %v427
      %v429 = vpop.f32.mrf.mxu0
      %430 = vdwg.mxu0
      %v431 = vsel %vm351, %v428, -inf
      %432 = vmax.xlane.f32.xlu0 %v431
      %v433 = vpop.xlane.xlu0 %432
      %v434 = vsub.f32 %v428, %v433
      %v435 = vmul.f32 %v434, 1.442695
      %v436 = vpow.pop %v435
      %v437 = vsel %vm351, %v436, 0.0
      %438 = vadd.xlane.f32.xlu0 %v437
      %v439 = vpop.xlane.xlu0 %438
      %v440 = vrcp.pop %v439
      %v441 = vmul.f32 %v436, %v440
      %v442 = vpack.c.bf16 %v441, %v441
      %443 = vrot.lane.b32.xlu0 %v308, 56
      %v444 = vpop.permute.xlu0 %443
      %v446 = vsel %vm351, %v442, 0
      %v449 = vsel %vm388, %v444, 0
      %451 = vmatpush.bf16.msra.mxu0 0
      %452 = vmatpush.bf16.msra.mxu0 0
      %453 = vmatpush.bf16.msra.mxu0 0
      %454 = vmatpush.bf16.msra.mxu0 0
      %455 = vmatpush.bf16.msra.mxu0 0
      %456 = vmatpush.bf16.msra.mxu0 0
      %457 = vmatpush.bf16.msra.mxu0 0
      %458 = vmatpush.bf16.msra.mxu0 %v449
      %459 = vmatmul.bf16.gmra.mxu0 %v446
      %v460 = vpop.f32.mrf.mxu0
      %v461 = vadd.f32 0.0, %v460
      %v462 = vpop.f32.mrf.mxu0
      %463 = vdwg.mxu0
      %464 = vrot.lane.b32.xlu0 %v407, 112
      %v465 = vpop.permute.xlu0 %464
      %466 = vrot.lane.b32.xlu0 %v348, 80
      %v467 = vpop.permute.xlu0 %466
      %v469 = vsel %vm351, %v465, 0
      %v472 = vsel %vm351, %v467, 0
      %474 = vmatpush.bf16.xpose.msra.mxu0 0
      %475 = vmatpush.bf16.xpose.msra.mxu0 0
      %476 = vmatpush.bf16.xpose.msra.mxu0 0
      %477 = vmatpush.bf16.xpose.msra.mxu0 0
      %478 = vmatpush.bf16.xpose.msra.mxu0 0
      %479 = vmatpush.bf16.xpose.msra.mxu0 0
      %480 = vmatpush.bf16.xpose.msra.mxu0 0
      %481 = vmatpush.bf16.xpose.msra.mxu0 %v472
      %482 = vmatmul.bf16.gmra.mxu0 %v469
      %v483 = vpop.f32.mrf.mxu0
      %v484 = vadd.f32 %v344, %v483
      %v485 = vpop.f32.mrf.mxu0
      %486 = vdwg.mxu0
      %v487 = vsel %vm351, %v484, -inf
      %488 = vmax.xlane.f32.xlu0 %v487
      %v489 = vpop.xlane.xlu0 %488
      %v490 = vsub.f32 %v484, %v489
      %v491 = vmul.f32 %v490, 1.442695
      %v492 = vpow.pop %v491
      %v493 = vsel %vm351, %v492, 0.0
      %494 = vadd.xlane.f32.xlu0 %v493
      %v495 = vpop.xlane.xlu0 %494
      %v496 = vrcp.pop %v495
      %v497 = vmul.f32 %v492, %v496
      %v498 = vpack.c.bf16 %v497, %v497
      %499 = vrot.lane.b32.xlu0 %v308, 48
      %v500 = vpop.permute.xlu0 %499
      %v502 = vsel %vm351, %v498, 0
      %v505 = vsel %vm388, %v500, 0
      %507 = vmatpush.bf16.msra.mxu0 0
      %508 = vmatpush.bf16.msra.mxu0 0
      %509 = vmatpush.bf16.msra.mxu0 0
      %510 = vmatpush.bf16.msra.mxu0 0
      %511 = vmatpush.bf16.msra.mxu0 0
      %512 = vmatpush.bf16.msra.mxu0 0
      %513 = vmatpush.bf16.msra.mxu0 0
      %514 = vmatpush.bf16.msra.mxu0 %v505
      %515 = vmatmul.bf16.gmra.mxu0 %v502
      %v516 = vpop.f32.mrf.mxu0
      %v517 = vadd.f32 0.0, %v516
      %v518 = vpop.f32.mrf.mxu0
      %519 = vdwg.mxu0
      %520 = vrot.lane.b32.xlu0 %v407, 104
      %v521 = vpop.permute.xlu0 %520
      %522 = vrot.lane.b32.xlu0 %v348, 72
      %v523 = vpop.permute.xlu0 %522
      %v525 = vsel %vm351, %v521, 0
      %v528 = vsel %vm351, %v523, 0
      %530 = vmatpush.bf16.xpose.msra.mxu0 0
      %531 = vmatpush.bf16.xpose.msra.mxu0 0
      %532 = vmatpush.bf16.xpose.msra.mxu0 0
      %533 = vmatpush.bf16.xpose.msra.mxu0 0
      %534 = vmatpush.bf16.xpose.msra.mxu0 0
      %535 = vmatpush.bf16.xpose.msra.mxu0 0
      %536 = vmatpush.bf16.xpose.msra.mxu0 0
      %537 = vmatpush.bf16.xpose.msra.mxu0 %v528
      %538 = vmatmul.bf16.gmra.mxu0 %v525
      %v539 = vpop.f32.mrf.mxu0
      %v540 = vadd.f32 %v344, %v539
      %v541 = vpop.f32.mrf.mxu0
      %542 = vdwg.mxu0
      %v543 = vsel %vm351, %v540, -inf
      %544 = vmax.xlane.f32.xlu0 %v543
      %v545 = vpop.xlane.xlu0 %544
      %v546 = vsub.f32 %v540, %v545
      %v547 = vmul.f32 %v546, 1.442695
      %v548 = vpow.pop %v547
      %v549 = vsel %vm351, %v548, 0.0
      %550 = vadd.xlane.f32.xlu0 %v549
      %v551 = vpop.xlane.xlu0 %550
      %v552 = vrcp.pop %v551
      %v553 = vmul.f32 %v548, %v552
      %v554 = vpack.c.bf16 %v553, %v553
      %555 = vrot.lane.b32.xlu0 %v308, 40
      %v556 = vpop.permute.xlu0 %555
      %v558 = vsel %vm351, %v554, 0
      %v561 = vsel %vm388, %v556, 0
      %563 = vmatpush.bf16.msra.mxu0 0
      %564 = vmatpush.bf16.msra.mxu0 0
      %565 = vmatpush.bf16.msra.mxu0 0
      %566 = vmatpush.bf16.msra.mxu0 0
      %567 = vmatpush.bf16.msra.mxu0 0
      %568 = vmatpush.bf16.msra.mxu0 0
      %569 = vmatpush.bf16.msra.mxu0 0
      %570 = vmatpush.bf16.msra.mxu0 %v561
      %571 = vmatmul.bf16.gmra.mxu0 %v558
      %v572 = vpop.f32.mrf.mxu0
      %v573 = vadd.f32 0.0, %v572
      %v574 = vpop.f32.mrf.mxu0
      %575 = vdwg.mxu0
      %577 = vrot.lane.b32.xlu0 %v461, 8
      %v578 = vpop.permute.xlu0 %577
      %581 = vrot.lane.b32.xlu0 %v517, 16
      %v582 = vpop.permute.xlu0 %581
      %585 = vrot.lane.b32.xlu0 %v573, 24
      %v586 = vpop.permute.xlu0 %585
      %v588 = vsel %vm351, %v402, %v578
      %vm589 = vcmask 130048
      %v590 = vsel %vm589, %v588, %v582
      %vm591 = vcmask 195584
      %v592 = vsel %vm591, %v590, %v586
      %v593 = vpack.c.bf16 %v592, %v592
      %vm594 = vcmask 257024
      %595 = vst.msk [vmem:[%s264] sm:$0xf] %vm594, %v593
      %p596 = scmp.lt.s32.totalorder %s20, 1
      %s597 = scalar_select %p596, %s20, 1
      %p598 = scmp.lt.s32.totalorder %s21, 0
      %s599 = scalar_select %p598, %s21, 0
      %s600 = sadd.s32 %s599, %s597
      %s601 = smul.addr %s600, 4
      %s602 = scalar_lea.vmem %s5, %s601
      // Predicated region
      $region41: #{multitask_esm2_forward.12} parent=39 // pred_check
        %p603 = pneg %p165
      $region42: #{multitask_esm2_forward.12} parent=39 // pred_check_branch
        %605 = sbr.rel (%p603) target = $region44
      $region43: #{multitask_esm2_forward.12} parent=39 // pred_region
        _
      $region44: #{multitask_esm2_forward.12} parent=39 // pred_fallthru
        _
    $region40: #{multitask_esm2_forward.12} parent=5 // pred_fallthru
      _
    %p606 = scmp.le.s32.totalorder 2, %s11
    // Predicated region
    $region45: #{multitask_esm2_forward.12} parent=5 // pred_check
      %p607 = pneg %p606
    $region46: #{multitask_esm2_forward.12} parent=5 // pred_check_branch
      %609 = sbr.rel (%p607) target = $region48
    $region47: #{multitask_esm2_forward.12} parent=5 // pred_region
      %s610 = ssub.s32 %s11, 2
      // Predicated region
      $region49: #{multitask_esm2_forward.12} parent=47 // pred_check
        %p611 = pneg %p171
      $region50: #{multitask_esm2_forward.12} parent=47 // pred_check_branch
        %613 = sbr.rel (%p611) target = $region52
      $region51: #{multitask_esm2_forward.12} parent=47 // pred_region
        %p614 = scmp.lt.s32.totalorder %s22, 1
        %s615 = scalar_select %p614, %s22, 1
        %p616 = scmp.lt.s32.totalorder %s23, 0
        %s617 = scalar_select %p616, %s23, 0
        %s618 = sadd.s32 %s617, %s615
        %s619 = smul.addr %s618, 4
        %s620 = scalar_lea.vmem %s5, %s619
      $region52: #{multitask_esm2_forward.12} parent=47 // pred_fallthru
        _
    $region48: #{multitask_esm2_forward.12} parent=5 // pred_fallthru
      _
  $region6: #{multitask_esm2_forward.12} parent=0 // loop_footer
    %s15 = sadd.s32 1, %s11
  $region7: #{multitask_esm2_forward.12} parent=0 // loop_footer_branch
    %10 = sbr.rel target = $region3
  $region8: #{multitask_esm2_forward.12} parent=0 // loop_exit
    _

// kernel: multitask_esm2_forward.15
$region0: #{multitask_esm2_forward.15}
  #allocation0 [shape = 'u32[]', space=smem, size = 0x4, offset = 0x4, fixed_abs, tag = 'smem constant byte address 0x4 - core index']
  #allocation1 [shape = 'u32[72,128]{1,0:T(1,128)}', space=vmem, size = 0x9000, scoped, tag = 'internal scratch']
  #allocation2 [shape = 'f32[16,32]{1,0:T(8,128)}', space=vmem, size = 0x2000, scoped, tag = 'scratch operand']
  %s0 = inlined_call_operand.vmem [shape: bf16[16,64], index: 0, kind: input, shape index: {}]
  %s1 = inlined_call_operand.vmem [shape: bf16[64,32], index: 1, kind: input, shape index: {}]
  %s2 = inlined_call_operand.vmem [shape: f32[1,32], index: 2, kind: input, shape index: {}]
  %s3 = inlined_call_operand.vmem [shape: f32[16,32], index: 3, kind: input, shape index: {}]
  %s4 = inlined_call_operand.vmem [shape: f32[16,32], index: 4, kind: output, shape index: {}]
  %s5 = sld [smem:[#allocation0]]
  $region34: #{multitask_esm2_forward.15} parent=0
    _
  %s7 = ssub.s32 1, %s5
  %s8 = scalar_select 0, %s7, %s5
  // Predicated region
  $region2: #{multitask_esm2_forward.15} parent=0 // pred_check
    _
  $region3: #{multitask_esm2_forward.15} parent=0 // pred_check_branch
    %10 = sbr.rel (0) target = $region5
  $region4: #{multitask_esm2_forward.15} parent=0 // pred_region
    _
  $region5: #{multitask_esm2_forward.15} parent=0 // pred_fallthru
    _
  // Predicated region
  $region6: #{multitask_esm2_forward.15} parent=0 // pred_check
    _
  $region7: #{multitask_esm2_forward.15} parent=0 // pred_check_branch
    %12 = sbr.rel (0) target = $region9
  $region8: #{multitask_esm2_forward.15} parent=0 // pred_region
    _
  $region9: #{multitask_esm2_forward.15} parent=0 // pred_fallthru
    _
  // Predicated region
  $region10: #{multitask_esm2_forward.15} parent=0 // pred_check
    _
  $region11: #{multitask_esm2_forward.15} parent=0 // pred_check_branch
    %14 = sbr.rel (0) target = $region13
  $region12: #{multitask_esm2_forward.15} parent=0 // pred_region
    _
  $region13: #{multitask_esm2_forward.15} parent=0 // pred_fallthru
    _
  // Predicated region
  $region14: #{multitask_esm2_forward.15} parent=0 // pred_check
    _
  $region15: #{multitask_esm2_forward.15} parent=0 // pred_check_branch
    %16 = sbr.rel (0) target = $region17
  $region16: #{multitask_esm2_forward.15} parent=0 // pred_region
    _
  $region17: #{multitask_esm2_forward.15} parent=0 // pred_fallthru
    _
  %p18 = scmp.eq.s32.totalorder 0, 0
  // Predicated region
  $region18: #{multitask_esm2_forward.15} parent=0 // pred_check
    %p19 = pneg %p18
  $region19: #{multitask_esm2_forward.15} parent=0 // pred_check_branch
    %21 = sbr.rel (%p19) target = $region21
  $region20: #{multitask_esm2_forward.15} parent=0 // pred_region
    %vm22 = vcmask 261120
    %23 = vst.msk [vmem:[#allocation2] sm:$0xff] %vm22, 0.0
    %24 = vst.msk [vmem:[#allocation2 + $0x8] sm:$0xff] %vm22, 0.0
  $region21: #{multitask_esm2_forward.15} parent=0 // pred_fallthru
    _
  %v25 = vld [vmem:[#allocation2] sm:$0xff]
  %v26 = vld [vmem:[#allocation2 + $0x8] sm:$0xff]
  %v27 = vld [vmem:[%s0] sm:$0xf]
  %v28 = vld [vmem:[%s0 + $0x4] sm:$0xf]
  %v29 = vld [vmem:[%s1] sm:$0xf]
  %v30 = vld [vmem:[%s1 + $0x4] sm:$0xf]
  %v31 = vld [vmem:[%s1 + $0x8] sm:$0xf]
  %v32 = vld [vmem:[%s1 + $0xc] sm:$0xf]
  %v33 = vld [vmem:[%s1 + $0x10] sm:$0xf]
  %v34 = vld [vmem:[%s1 + $0x14] sm:$0xf]
  %v35 = vld [vmem:[%s1 + $0x18] sm:$0xf]
  %v36 = vld [vmem:[%s1 + $0x1c] sm:$0xf]
  %v39 = vunpack.c.l.b16 %v27
  %v40 = vunpack.c.l.b16 %v28
  %v41 = vpack.c.b16 %v40, %v39
  %v50 = vunpack.c.l.b16 %v29
  %v51 = vunpack.c.l.b16 %v30
  %v52 = vunpack.c.l.b16 %v31
  %v53 = vunpack.c.l.b16 %v32
  %v54 = vunpack.c.l.b16 %v33
  %v55 = vunpack.c.l.b16 %v34
  %v56 = vunpack.c.l.b16 %v35
  %v57 = vunpack.c.l.b16 %v36
  %v58 = vpack.c.b16 %v51, %v50
  %v59 = vpack.c.b16 %v53, %v52
  %v60 = vpack.c.b16 %v55, %v54
  %v61 = vpack.c.b16 %v57, %v56
  %vm66 = vcmask 523264
  %v68 = vsel %vm66, %v41, 0
  %70 = vmatpush.bf16.msra.mxu0 0
  %71 = vmatpush.bf16.msra.mxu0 0
  %72 = vmatpush.bf16.msra.mxu0 0
  %73 = vmatpush.bf16.msra.mxu0 0
  %74 = vmatpush.bf16.msra.mxu0 %v61
  %75 = vmatpush.bf16.msra.mxu0 %v60
  %76 = vmatpush.bf16.msra.mxu0 %v59
  %77 = vmatpush.bf16.msra.mxu0 %v58
  %78 = vmatmul.bf16.gmra.mxu0 %v68
  %v79 = vpop.f32.mrf.mxu0
  %v80 = vadd.f32 0.0, %v79
  %v81 = vpop.f32.mrf.mxu0
  %v82 = vadd.f32 0.0, %v81
  %83 = vdwg.mxu0
  %v84 = vadd.f32 %v25, %v80
  %v85 = vadd.f32 %v26, %v82
  %vm86 = vcmask 261120
  %87 = vst.msk [vmem:[#allocation2] sm:$0xff] %vm86, %v84
  %88 = vst.msk [vmem:[#allocation2 + $0x8] sm:$0xff] %vm86, %v85
  // Predicated region
  $region22: #{multitask_esm2_forward.15} parent=0 // pred_check
    %p89 = pneg %p18
  $region23: #{multitask_esm2_forward.15} parent=0 // pred_check_branch
    %91 = sbr.rel (%p89) target = $region25
  $region24: #{multitask_esm2_forward.15} parent=0 // pred_region
    %v92 = vld [vmem:[#allocation2] sm:$0xff]
    %v93 = vld [vmem:[#allocation2 + $0x8] sm:$0xff]
    %v94 = vld [vmem:[%s2] sm:$0x1]
    %v96 = vperm.slane %v94, 0
    %v98 = vadd.f32 %v92, %v96
    %v99 = vadd.f32 %v93, %v96
    %v100 = vld [vmem:[%s3] sm:$0xff]
    %v101 = vld [vmem:[%s3 + $0x8] sm:$0xff]
    %v102 = vadd.f32 %v98, %v100
    %v103 = vadd.f32 %v99, %v101
    %104 = vst.msk [vmem:[%s4] sm:$0xff] %vm86, %v102
    %105 = vst.msk [vmem:[%s4 + $0x8] sm:$0xff] %vm86, %v103
  $region25: #{multitask_esm2_forward.15} parent=0 // pred_fallthru
    _
  // Predicated region
  $region26: #{multitask_esm2_forward.15} parent=0 // pred_check
    _
  $region27: #{multitask_esm2_forward.15} parent=0 // pred_check_branch
    %107 = sbr.rel (0) target = $region29
  $region28: #{multitask_esm2_forward.15} parent=0 // pred_region
    _
  $region29: #{multitask_esm2_forward.15} parent=0 // pred_fallthru
    _
  // Predicated region
  $region30: #{multitask_esm2_forward.15} parent=0 // pred_check
    _
  $region31: #{multitask_esm2_forward.15} parent=0 // pred_check_branch
    %109 = sbr.rel (0) target = $region33
  $region32: #{multitask_esm2_forward.15} parent=0 // pred_region
    _
  $region33: #{multitask_esm2_forward.15} parent=0 // pred_fallthru
    _

// kernel: multitask_esm2_forward.21
$region0: #{multitask_esm2_forward.21}
  #allocation0 [shape = 'u32[]', space=smem, size = 0x4, offset = 0x4, fixed_abs, tag = 'smem constant byte address 0x4 - core index']
  #allocation1 [shape = 'u32[72,128]{1,0:T(1,128)}', space=vmem, size = 0x9000, scoped, tag = 'internal scratch']
  %s0 = inlined_call_operand.vmem [shape: f32[2,32], index: 0, kind: input, shape index: {}]
  %s1 = inlined_call_operand.vmem [shape: f32[1,32], index: 1, kind: input, shape index: {}]
  %s2 = inlined_call_operand.vmem [shape: f32[1,32], index: 2, kind: input, shape index: {}]
  %s3 = inlined_call_operand.vmem [shape: bf16[32,768], index: 3, kind: input, shape index: {}]
  %s4 = inlined_call_operand.vmem [shape: f32[1,768], index: 4, kind: input, shape index: {}]
  %s5 = inlined_call_operand.vmem [shape: bf16[768,5], index: 5, kind: input, shape index: {}]
  %s6 = inlined_call_operand.vmem [shape: f32[1,5], index: 6, kind: input, shape index: {}]
  %s7 = inlined_call_operand.vmem [shape: f32[2,5], index: 7, kind: output, shape index: {}]
  %s8 = sld [smem:[#allocation0]]
  $region38: #{multitask_esm2_forward.21} parent=0
    _
  %s10 = ssub.s32 1, %s8
  %s11 = scalar_select 0, %s10, %s8
  // Predicated region
  $region2: #{multitask_esm2_forward.21} parent=0 // pred_check
    _
  $region3: #{multitask_esm2_forward.21} parent=0 // pred_check_branch
    %13 = sbr.rel (0) target = $region5
  $region4: #{multitask_esm2_forward.21} parent=0 // pred_region
    _
  $region5: #{multitask_esm2_forward.21} parent=0 // pred_fallthru
    _
  // Predicated region
  $region6: #{multitask_esm2_forward.21} parent=0 // pred_check
    _
  $region7: #{multitask_esm2_forward.21} parent=0 // pred_check_branch
    %15 = sbr.rel (0) target = $region9
  $region8: #{multitask_esm2_forward.21} parent=0 // pred_region
    _
  $region9: #{multitask_esm2_forward.21} parent=0 // pred_fallthru
    _
  // Predicated region
  $region10: #{multitask_esm2_forward.21} parent=0 // pred_check
    _
  $region11: #{multitask_esm2_forward.21} parent=0 // pred_check_branch
    %17 = sbr.rel (0) target = $region13
  $region12: #{multitask_esm2_forward.21} parent=0 // pred_region
    _
  $region13: #{multitask_esm2_forward.21} parent=0 // pred_fallthru
    _
  // Predicated region
  $region14: #{multitask_esm2_forward.21} parent=0 // pred_check
    _
  $region15: #{multitask_esm2_forward.21} parent=0 // pred_check_branch
    %19 = sbr.rel (0) target = $region17
  $region16: #{multitask_esm2_forward.21} parent=0 // pred_region
    _
  $region17: #{multitask_esm2_forward.21} parent=0 // pred_fallthru
    _
  // Predicated region
  $region18: #{multitask_esm2_forward.21} parent=0 // pred_check
    _
  $region19: #{multitask_esm2_forward.21} parent=0 // pred_check_branch
    %21 = sbr.rel (0) target = $region21
  $region20: #{multitask_esm2_forward.21} parent=0 // pred_region
    _
  $region21: #{multitask_esm2_forward.21} parent=0 // pred_fallthru
    _
  // Predicated region
  $region22: #{multitask_esm2_forward.21} parent=0 // pred_check
    _
  $region23: #{multitask_esm2_forward.21} parent=0 // pred_check_branch
    %23 = sbr.rel (0) target = $region25
  $region24: #{multitask_esm2_forward.21} parent=0 // pred_region
    _
  $region25: #{multitask_esm2_forward.21} parent=0 // pred_fallthru
    _
  // Predicated region
  $region26: #{multitask_esm2_forward.21} parent=0 // pred_check
    _
  $region27: #{multitask_esm2_forward.21} parent=0 // pred_check_branch
    %25 = sbr.rel (0) target = $region29
  $region28: #{multitask_esm2_forward.21} parent=0 // pred_region
    _
  $region29: #{multitask_esm2_forward.21} parent=0 // pred_fallthru
    _
  %v27 = vld [vmem:[%s0] sm:$0x3]
  %vm28 = vcmask 254976
  %v29 = vsel %vm28, %v27, 0.0
  %30 = vadd.xlane.f32.xlu0 %v29
  %v31 = vpop.xlane.xlu0 %30
  %v32 = vrcp.pop 32.0
  %v33 = vmul.f32 32.0, %v32
  %v34 = vsub.f32 1.0, %v33
  %v35 = vmul.f32 %v32, %v34
  %v36 = vadd.f32 %v32, %v35
  %vm37 = vweird.f32 %v32
  %v38 = vsel %vm37, %v32, %v36
  %v39 = vmul.f32 %v31, %v38
  %v40 = vsub.f32 %v27, %v39
  %v41 = vmul.f32 %v40, %v40
  %v42 = vsel %vm28, %v41, 0.0
  %43 = vadd.xlane.f32.xlu0 %v42
  %v44 = vpop.xlane.xlu0 %43
  %v45 = vmul.f32 %v44, %v38
  %v46 = vadd.f32 %v45, 1e-05
  %v47 = vrsqrt.pop %v46
  %v48 = vmul.f32 %v47, %v46
  %v49 = vmul.f32 %v48, %v47
  %v50 = vmul.f32 0.5, %v49
  %v51 = vsub.f32 1.5, %v50
  %v52 = vmul.f32 %v47, %v51
  %vm53 = vweird.f32 %v46
  %vm54 = vweird.f32 %v47
  %vm55 = vmor %vm53, %vm54
  %v56 = vsel %vm55, %v47, %v52
  %v57 = vmul.f32 %v40, %v56
  %v58 = vld [vmem:[%s1] sm:$0x1]
  %v60 = vperm.slane %v58, 0
  %v62 = vmul.f32 %v57, %v60
  %v63 = vld [vmem:[%s2] sm:$0x1]
  %v65 = vperm.slane %v63, 0
  %v67 = vadd.f32 %v62, %v65
  %v68 = vpack.c.bf16 %v67, %v67
  %v69 = vld [vmem:[%s3] sm:$0xff]
  %v70 = vld [vmem:[%s3 + $0x8] sm:$0xff]
  %v71 = vld [vmem:[%s3 + $0x10] sm:$0xff]
  %v72 = vld [vmem:[%s3 + $0x18] sm:$0xff]
  %v73 = vld [vmem:[%s3 + $0x20] sm:$0xff]
  %v74 = vld [vmem:[%s3 + $0x28] sm:$0xff]
  %v75 = vld [vmem:[%s3 + $0x30] sm:$0xff]
  %v76 = vld [vmem:[%s3 + $0x38] sm:$0xff]
  %v77 = vld [vmem:[%s3 + $0x40] sm:$0xff]
  %v78 = vld [vmem:[%s3 + $0x48] sm:$0xff]
  %v79 = vld [vmem:[%s3 + $0x50] sm:$0xff]
  %v80 = vld [vmem:[%s3 + $0x58] sm:$0xff]
  %v81 = vld [vmem:[%s4] sm:$0x3f]
  %v83 = vperm.slane %v81, 0
  %v84 = vperm.slane %v81, 1
  %v85 = vperm.slane %v81, 2
  %v86 = vperm.slane %v81, 3
  %v87 = vperm.slane %v81, 4
  %v88 = vperm.slane %v81, 5
  %v107 = vunpack.c.l.b16 %v69
  %v108 = vunpack.c.h.b16 %v69
  %v109 = vunpack.c.l.b16 %v70
  %v110 = vunpack.c.h.b16 %v70
  %v111 = vunpack.c.l.b16 %v71
  %v112 = vunpack.c.h.b16 %v71
  %v113 = vunpack.c.l.b16 %v72
  %v114 = vunpack.c.h.b16 %v72
  %v115 = vunpack.c.l.b16 %v73
  %v116 = vunpack.c.h.b16 %v73
  %v117 = vunpack.c.l.b16 %v74
  %v118 = vunpack.c.h.b16 %v74
  %v119 = vunpack.c.l.b16 %v75
  %v120 = vunpack.c.h.b16 %v75
  %v121 = vunpack.c.l.b16 %v76
  %v122 = vunpack.c.h.b16 %v76
  %v123 = vunpack.c.l.b16 %v77
  %v124 = vunpack.c.h.b16 %v77
  %v125 = vunpack.c.l.b16 %v78
  %v126 = vunpack.c.h.b16 %v78
  %v127 = vunpack.c.l.b16 %v79
  %v128 = vunpack.c.h.b16 %v79
  %v129 = vunpack.c.l.b16 %v80
  %v130 = vunpack.c.h.b16 %v80
  %v131 = vpack.c.b16 %v113, %v107
  %v132 = vpack.c.b16 %v114, %v108
  %v133 = vpack.c.b16 %v115, %v109
  %v134 = vpack.c.b16 %v116, %v110
  %v135 = vpack.c.b16 %v117, %v111
  %v136 = vpack.c.b16 %v118, %v112
  %v137 = vpack.c.b16 %v125, %v119
  %v138 = vpack.c.b16 %v126, %v120
  %v139 = vpack.c.b16 %v127, %v121
  %v140 = vpack.c.b16 %v128, %v122
  %v141 = vpack.c.b16 %v129, %v123
  %v142 = vpack.c.b16 %v130, %v124
  %vm155 = vcmask 261120
  %v157 = vsel %vm155, %v68, 0
  %159 = vmatpush.bf16.msra.mxu0 0
  %160 = vmatpush.bf16.msra.mxu0 0
  %161 = vmatpush.bf16.msra.mxu0 0
  %162 = vmatpush.bf16.msra.mxu0 0
  %163 = vmatpush.bf16.msra.mxu0 0
  %164 = vmatpush.bf16.msra.mxu0 0
  %165 = vmatpush.bf16.msra.mxu0 %v137
  %166 = vmatpush.bf16.msra.mxu0 %v131
  %167 = vmatmul.bf16.gmra.mxu0 %v157
  %v168 = vpop.f32.mrf.mxu0
  %v169 = vadd.f32 %v83, %v168
  %v170 = vpop.f32.mrf.mxu0
  %171 = vdwg.mxu0
  %172 = vmatpush.bf16.msra.mxu0 0
  %173 = vmatpush.bf16.msra.mxu0 0
  %174 = vmatpush.bf16.msra.mxu0 0
  %175 = vmatpush.bf16.msra.mxu0 0
  %176 = vmatpush.bf16.msra.mxu0 0
  %177 = vmatpush.bf16.msra.mxu0 0
  %178 = vmatpush.bf16.msra.mxu0 %v138
  %179 = vmatpush.bf16.msra.mxu0 %v132
  %180 = vmatmul.bf16.gmra.mxu0 %v157
  %v181 = vpop.f32.mrf.mxu0
  %v182 = vadd.f32 %v84, %v181
  %v183 = vpop.f32.mrf.mxu0
  %184 = vdwg.mxu0
  %185 = vmatpush.bf16.msra.mxu0 0
  %186 = vmatpush.bf16.msra.mxu0 0
  %187 = vmatpush.bf16.msra.mxu0 0
  %188 = vmatpush.bf16.msra.mxu0 0
  %189 = vmatpush.bf16.msra.mxu0 0
  %190 = vmatpush.bf16.msra.mxu0 0
  %191 = vmatpush.bf16.msra.mxu0 %v139
  %192 = vmatpush.bf16.msra.mxu0 %v133
  %193 = vmatmul.bf16.gmra.mxu0 %v157
  %v194 = vpop.f32.mrf.mxu0
  %v195 = vadd.f32 %v85, %v194
  %v196 = vpop.f32.mrf.mxu0
  %197 = vdwg.mxu0
  %198 = vmatpush.bf16.msra.mxu0 0
  %199 = vmatpush.bf16.msra.mxu0 0
  %200 = vmatpush.bf16.msra.mxu0 0
  %201 = vmatpush.bf16.msra.mxu0 0
  %202 = vmatpush.bf16.msra.mxu0 0
  %203 = vmatpush.bf16.msra.mxu0 0
  %204 = vmatpush.bf16.msra.mxu0 %v140
  %205 = vmatpush.bf16.msra.mxu0 %v134
  %206 = vmatmul.bf16.gmra.mxu0 %v157
  %v207 = vpop.f32.mrf.mxu0
  %v208 = vadd.f32 %v86, %v207
  %v209 = vpop.f32.mrf.mxu0
  %210 = vdwg.mxu0
  %211 = vmatpush.bf16.msra.mxu0 0
  %212 = vmatpush.bf16.msra.mxu0 0
  %213 = vmatpush.bf16.msra.mxu0 0
  %214 = vmatpush.bf16.msra.mxu0 0
  %215 = vmatpush.bf16.msra.mxu0 0
  %216 = vmatpush.bf16.msra.mxu0 0
  %217 = vmatpush.bf16.msra.mxu0 %v141
  %218 = vmatpush.bf16.msra.mxu0 %v135
  %219 = vmatmul.bf16.gmra.mxu0 %v157
  %v220 = vpop.f32.mrf.mxu0
  %v221 = vadd.f32 %v87, %v220
  %v222 = vpop.f32.mrf.mxu0
  %223 = vdwg.mxu0
  %224 = vmatpush.bf16.msra.mxu0 0
  %225 = vmatpush.bf16.msra.mxu0 0
  %226 = vmatpush.bf16.msra.mxu0 0
  %227 = vmatpush.bf16.msra.mxu0 0
  %228 = vmatpush.bf16.msra.mxu0 0
  %229 = vmatpush.bf16.msra.mxu0 0
  %230 = vmatpush.bf16.msra.mxu0 %v142
  %231 = vmatpush.bf16.msra.mxu0 %v136
  %232 = vmatmul.bf16.gmra.mxu0 %v157
  %v233 = vpop.f32.mrf.mxu0
  %v234 = vadd.f32 %v88, %v233
  %v235 = vpop.f32.mrf.mxu0
  %236 = vdwg.mxu0
  %v237 = vmax.f32 %v169, 0.0
  %v238 = vmax.f32 %v182, 0.0
  %v239 = vmax.f32 %v195, 0.0
  %v240 = vmax.f32 %v208, 0.0
  %v241 = vmax.f32 %v221, 0.0
  %v242 = vmax.f32 %v234, 0.0
  %v243 = vpack.c.bf16 %v237, %v237
  %v244 = vpack.c.bf16 %v238, %v238
  %v245 = vpack.c.bf16 %v239, %v239
  %v246 = vpack.c.bf16 %v240, %v240
  %v247 = vpack.c.bf16 %v241, %v241
  %v248 = vpack.c.bf16 %v242, %v242
  %v249 = vld [vmem:[%s5] sm:$0xf]
  %v250 = vld [vmem:[%s5 + $0x4] sm:$0xf]
  %v251 = vld [vmem:[%s5 + $0x8] sm:$0xf]
  %v252 = vld [vmem:[%s5 + $0xc] sm:$0xf]
  %v253 = vld [vmem:[%s5 + $0x10] sm:$0xf]
  %v254 = vld [vmem:[%s5 + $0x14] sm:$0xf]
  %v255 = vld [vmem:[%s5 + $0x18] sm:$0xf]
  %v256 = vld [vmem:[%s5 + $0x1c] sm:$0xf]
  %v257 = vld [vmem:[%s5 + $0x20] sm:$0xf]
  %v258 = vld [vmem:[%s5 + $0x24] sm:$0xf]
  %v259 = vld [vmem:[%s5 + $0x28] sm:$0xf]
  %v260 = vld [vmem:[%s5 + $0x2c] sm:$0xf]
  %v261 = vld [vmem:[%s5 + $0x30] sm:$0xf]
  %v262 = vld [vmem:[%s5 + $0x34] sm:$0xf]
  %v263 = vld [vmem:[%s5 + $0x38] sm:$0xf]
  %v264 = vld [vmem:[%s5 + $0x3c] sm:$0xf]
  %v265 = vld [vmem:[%s5 + $0x40] sm:$0xf]
  %v266 = vld [vmem:[%s5 + $0x44] sm:$0xf]
  %v267 = vld [vmem:[%s5 + $0x48] sm:$0xf]
  %v268 = vld [vmem:[%s5 + $0x4c] sm:$0xf]
  %v269 = vld [vmem:[%s5 + $0x50] sm:$0xf]
  %v270 = vld [vmem:[%s5 + $0x54] sm:$0xf]
  %v271 = vld [vmem:[%s5 + $0x58] sm:$0xf]
  %v272 = vld [vmem:[%s5 + $0x5c] sm:$0xf]
  %v273 = vld [vmem:[%s5 + $0x60] sm:$0xf]
  %v274 = vld [vmem:[%s5 + $0x64] sm:$0xf]
  %v275 = vld [vmem:[%s5 + $0x68] sm:$0xf]
  %v276 = vld [vmem:[%s5 + $0x6c] sm:$0xf]
  %v277 = vld [vmem:[%s5 + $0x70] sm:$0xf]
  %v278 = vld [vmem:[%s5 + $0x74] sm:$0xf]
  %v279 = vld [vmem:[%s5 + $0x78] sm:$0xf]
  %v280 = vld [vmem:[%s5 + $0x7c] sm:$0xf]
  %v281 = vld [vmem:[%s5 + $0x80] sm:$0xf]
  %v282 = vld [vmem:[%s5 + $0x84] sm:$0xf]
  %v283 = vld [vmem:[%s5 + $0x88] sm:$0xf]
  %v284 = vld [vmem:[%s5 + $0x8c] sm:$0xf]
  %v285 = vld [vmem:[%s5 + $0x90] sm:$0xf]
  %v286 = vld [vmem:[%s5 + $0x94] sm:$0xf]
  %v287 = vld [vmem:[%s5 + $0x98] sm:$0xf]
  %v288 = vld [vmem:[%s5 + $0x9c] sm:$0xf]
  %v289 = vld [vmem:[%s5 + $0xa0] sm:$0xf]
  %v290 = vld [vmem:[%s5 + $0xa4] sm:$0xf]
  %v291 = vld [vmem:[%s5 + $0xa8] sm:$0xf]
  %v292 = vld [vmem:[%s5 + $0xac] sm:$0xf]
  %v293 = vld [vmem:[%s5 + $0xb0] sm:$0xf]
  %v294 = vld [vmem:[%s5 + $0xb4] sm:$0xf]
  %v295 = vld [vmem:[%s5 + $0xb8] sm:$0xf]
  %v296 = vld [vmem:[%s5 + $0xbc] sm:$0xf]
  %v297 = vld [vmem:[%s5 + $0xc0] sm:$0xf]
  %v298 = vld [vmem:[%s5 + $0xc4] sm:$0xf]
  %v299 = vld [vmem:[%s5 + $0xc8] sm:$0xf]
  %v300 = vld [vmem:[%s5 + $0xcc] sm:$0xf]
  %v301 = vld [vmem:[%s5 + $0xd0] sm:$0xf]
  %v302 = vld [vmem:[%s5 + $0xd4] sm:$0xf]
  %v303 = vld [vmem:[%s5 + $0xd8] sm:$0xf]
  %v304 = vld [vmem:[%s5 + $0xdc] sm:$0xf]
  %v305 = vld [vmem:[%s5 + $0xe0] sm:$0xf]
  %v306 = vld [vmem:[%s5 + $0xe4] sm:$0xf]
  %v307 = vld [vmem:[%s5 + $0xe8] sm:$0xf]
  %v308 = vld [vmem:[%s5 + $0xec] sm:$0xf]
  %v309 = vld [vmem:[%s5 + $0xf0] sm:$0xf]
  %v310 = vld [vmem:[%s5 + $0xf4] sm:$0xf]
  %v311 = vld [vmem:[%s5 + $0xf8] sm:$0xf]
  %v312 = vld [vmem:[%s5 + $0xfc] sm:$0xf]
  %v313 = vld [vmem:[%s5 + $0x100] sm:$0xf]
  %v314 = vld [vmem:[%s5 + $0x104] sm:$0xf]
  %v315 = vld [vmem:[%s5 + $0x108] sm:$0xf]
  %v316 = vld [vmem:[%s5 + $0x10c] sm:$0xf]
  %v317 = vld [vmem:[%s5 + $0x110] sm:$0xf]
  %v318 = vld [vmem:[%s5 + $0x114] sm:$0xf]
  %v319 = vld [vmem:[%s5 + $0x118] sm:$0xf]
  %v320 = vld [vmem:[%s5 + $0x11c] sm:$0xf]
  %v321 = vld [vmem:[%s5 + $0x120] sm:$0xf]
  %v322 = vld [vmem:[%s5 + $0x124] sm:$0xf]
  %v323 = vld [vmem:[%s5 + $0x128] sm:$0xf]
  %v324 = vld [vmem:[%s5 + $0x12c] sm:$0xf]
  %v325 = vld [vmem:[%s5 + $0x130] sm:$0xf]
  %v326 = vld [vmem:[%s5 + $0x134] sm:$0xf]
  %v327 = vld [vmem:[%s5 + $0x138] sm:$0xf]
  %v328 = vld [vmem:[%s5 + $0x13c] sm:$0xf]
  %v329 = vld [vmem:[%s5 + $0x140] sm:$0xf]
  %v330 = vld [vmem:[%s5 + $0x144] sm:$0xf]
  %v331 = vld [vmem:[%s5 + $0x148] sm:$0xf]
  %v332 = vld [vmem:[%s5 + $0x14c] sm:$0xf]
  %v333 = vld [vmem:[%s5 + $0x150] sm:$0xf]
  %v334 = vld [vmem:[%s5 + $0x154] sm:$0xf]
  %v335 = vld [vmem:[%s5 + $0x158] sm:$0xf]
  %v336 = vld [vmem:[%s5 + $0x15c] sm:$0xf]
  %v337 = vld [vmem:[%s5 + $0x160] sm:$0xf]
  %v338 = vld [vmem:[%s5 + $0x164] sm:$0xf]
  %v339 = vld [vmem:[%s5 + $0x168] sm:$0xf]
  %v340 = vld [vmem:[%s5 + $0x16c] sm:$0xf]
  %v341 = vld [vmem:[%s5 + $0x170] sm:$0xf]
  %v342 = vld [vmem:[%s5 + $0x174] sm:$0xf]
  %v343 = vld [vmem:[%s5 + $0x178] sm:$0xf]
  %v344 = vld [vmem:[%s5 + $0x17c] sm:$0xf]
  %v345 = vld [vmem:[%s6] sm:$0x1]
  %v347 = vperm.slane %v345, 0
  %v445 = vunpack.c.l.b16 %v249
  %v446 = vunpack.c.l.b16 %v250
  %v447 = vunpack.c.l.b16 %v251
  %v448 = vunpack.c.l.b16 %v252
  %v449 = vunpack.c.l.b16 %v253
  %v450 = vunpack.c.l.b16 %v254
  %v451 = vunpack.c.l.b16 %v255
  %v452 = vunpack.c.l.b16 %v256
  %v453 = vunpack.c.l.b16 %v257
  %v454 = vunpack.c.l.b16 %v258
  %v455 = vunpack.c.l.b16 %v259
  %v456 = vunpack.c.l.b16 %v260
  %v457 = vunpack.c.l.b16 %v261
  %v458 = vunpack.c.l.b16 %v262
  %v459 = vunpack.c.l.b16 %v263
  %v460 = vunpack.c.l.b16 %v264
  %v461 = vunpack.c.l.b16 %v265
  %v462 = vunpack.c.l.b16 %v266
  %v463 = vunpack.c.l.b16 %v267
  %v464 = vunpack.c.l.b16 %v268
  %v465 = vunpack.c.l.b16 %v269
  %v466 = vunpack.c.l.b16 %v270
  %v467 = vunpack.c.l.b16 %v271
  %v468 = vunpack.c.l.b16 %v272
  %v469 = vunpack.c.l.b16 %v273
  %v470 = vunpack.c.l.b16 %v274
  %v471 = vunpack.c.l.b16 %v275
  %v472 = vunpack.c.l.b16 %v276
  %v473 = vunpack.c.l.b16 %v277
  %v474 = vunpack.c.l.b16 %v278
  %v475 = vunpack.c.l.b16 %v279
  %v476 = vunpack.c.l.b16 %v280
  %v477 = vunpack.c.l.b16 %v281
  %v478 = vunpack.c.l.b16 %v282
  %v479 = vunpack.c.l.b16 %v283
  %v480 = vunpack.c.l.b16 %v284
  %v481 = vunpack.c.l.b16 %v285
  %v482 = vunpack.c.l.b16 %v286
  %v483 = vunpack.c.l.b16 %v287
  %v484 = vunpack.c.l.b16 %v288
  %v485 = vunpack.c.l.b16 %v289
  %v486 = vunpack.c.l.b16 %v290
  %v487 = vunpack.c.l.b16 %v291
  %v488 = vunpack.c.l.b16 %v292
  %v489 = vunpack.c.l.b16 %v293
  %v490 = vunpack.c.l.b16 %v294
  %v491 = vunpack.c.l.b16 %v295
  %v492 = vunpack.c.l.b16 %v296
  %v493 = vunpack.c.l.b16 %v297
  %v494 = vunpack.c.l.b16 %v298
  %v495 = vunpack.c.l.b16 %v299
  %v496 = vunpack.c.l.b16 %v300
  %v497 = vunpack.c.l.b16 %v301
  %v498 = vunpack.c.l.b16 %v302
  %v499 = vunpack.c.l.b16 %v303
  %v500 = vunpack.c.l.b16 %v304
  %v501 = vunpack.c.l.b16 %v305
  %v502 = vunpack.c.l.b16 %v306
  %v503 = vunpack.c.l.b16 %v307
  %v504 = vunpack.c.l.b16 %v308
  %v505 = vunpack.c.l.b16 %v309
  %v506 = vunpack.c.l.b16 %v310
  %v507 = vunpack.c.l.b16 %v311
  %v508 = vunpack.c.l.b16 %v312
  %v509 = vunpack.c.l.b16 %v313
  %v510 = vunpack.c.l.b16 %v314
  %v511 = vunpack.c.l.b16 %v315
  %v512 = vunpack.c.l.b16 %v316
  %v513 = vunpack.c.l.b16 %v317
  %v514 = vunpack.c.l.b16 %v318
  %v515 = vunpack.c.l.b16 %v319
  %v516 = vunpack.c.l.b16 %v320
  %v517 = vunpack.c.l.b16 %v321
  %v518 = vunpack.c.l.b16 %v322
  %v519 = vunpack.c.l.b16 %v323
  %v520 = vunpack.c.l.b16 %v324
  %v521 = vunpack.c.l.b16 %v325
  %v522 = vunpack.c.l.b16 %v326
  %v523 = vunpack.c.l.b16 %v327
  %v524 = vunpack.c.l.b16 %v328
  %v525 = vunpack.c.l.b16 %v329
  %v526 = vunpack.c.l.b16 %v330
  %v527 = vunpack.c.l.b16 %v331
  %v528 = vunpack.c.l.b16 %v332
  %v529 = vunpack.c.l.b16 %v333
  %v530 = vunpack.c.l.b16 %v334
  %v531 = vunpack.c.l.b16 %v335
  %v532 = vunpack.c.l.b16 %v336
  %v533 = vunpack.c.l.b16 %v337
  %v534 = vunpack.c.l.b16 %v338
  %v535 = vunpack.c.l.b16 %v339
  %v536 = vunpack.c.l.b16 %v340
  %v537 = vunpack.c.l.b16 %v341
  %v538 = vunpack.c.l.b16 %v342
  %v539 = vunpack.c.l.b16 %v343
  %v540 = vunpack.c.l.b16 %v344
  %v541 = vpack.c.b16 %v446, %v445
  %v542 = vpack.c.b16 %v448, %v447
  %v543 = vpack.c.b16 %v450, %v449
  %v544 = vpack.c.b16 %v452, %v451
  %v545 = vpack.c.b16 %v454, %v453
  %v546 = vpack.c.b16 %v456, %v455
  %v547 = vpack.c.b16 %v458, %v457
  %v548 = vpack.c.b16 %v460, %v459
  %v549 = vpack.c.b16 %v462, %v461
  %v550 = vpack.c.b16 %v464, %v463
  %v551 = vpack.c.b16 %v466, %v465
  %v552 = vpack.c.b16 %v468, %v467
  %v553 = vpack.c.b16 %v470, %v469
  %v554 = vpack.c.b16 %v472, %v471
  %v555 = vpack.c.b16 %v474, %v473
  %v556 = vpack.c.b16 %v476, %v475
  %v557 = vpack.c.b16 %v478, %v477
  %v558 = vpack.c.b16 %v480, %v479
  %v559 = vpack.c.b16 %v482, %v481
  %v560 = vpack.c.b16 %v484, %v483
  %v561 = vpack.c.b16 %v486, %v485
  %v562 = vpack.c.b16 %v488, %v487
  %v563 = vpack.c.b16 %v490, %v489
  %v564 = vpack.c.b16 %v492, %v491
  %v565 = vpack.c.b16 %v494, %v493
  %v566 = vpack.c.b16 %v496, %v495
  %v567 = vpack.c.b16 %v498, %v497
  %v568 = vpack.c.b16 %v500, %v499
  %v569 = vpack.c.b16 %v502, %v501
  %v570 = vpack.c.b16 %v504, %v503
  %v571 = vpack.c.b16 %v506, %v505
  %v572 = vpack.c.b16 %v508, %v507
  %v573 = vpack.c.b16 %v510, %v509
  %v574 = vpack.c.b16 %v512, %v511
  %v575 = vpack.c.b16 %v514, %v513
  %v576 = vpack.c.b16 %v516, %v515
  %v577 = vpack.c.b16 %v518, %v517
  %v578 = vpack.c.b16 %v520, %v519
  %v579 = vpack.c.b16 %v522, %v521
  %v580 = vpack.c.b16 %v524, %v523
  %v581 = vpack.c.b16 %v526, %v525
  %v582 = vpack.c.b16 %v528, %v527
  %v583 = vpack.c.b16 %v530, %v529
  %v584 = vpack.c.b16 %v532, %v531
  %v585 = vpack.c.b16 %v534, %v533
  %v586 = vpack.c.b16 %v536, %v535
  %v587 = vpack.c.b16 %v538, %v537
  %v588 = vpack.c.b16 %v540, %v539
  %637 = vmatpush.bf16.msra.mxu0 %v548
  %638 = vmatpush.bf16.msra.mxu0 %v547
  %639 = vmatpush.bf16.msra.mxu0 %v546
  %640 = vmatpush.bf16.msra.mxu0 %v545
  %641 = vmatpush.bf16.msra.mxu0 %v544
  %642 = vmatpush.bf16.msra.mxu0 %v543
  %643 = vmatpush.bf16.msra.mxu0 %v542
  %644 = vmatpush.bf16.msra.mxu0 %v541
  %645 = vmatmul.bf16.gmra.mxu0 %v243
  %v646 = vpop.f32.mrf.mxu0
  %v647 = vadd.f32 %v347, %v646
  %v648 = vpop.f32.mrf.mxu0
  %649 = vdwg.mxu0
  %650 = vmatpush.bf16.msra.mxu0 %v556
  %651 = vmatpush.bf16.msra.mxu0 %v555
  %652 = vmatpush.bf16.msra.mxu0 %v554
  %653 = vmatpush.bf16.msra.mxu0 %v553
  %654 = vmatpush.bf16.msra.mxu0 %v552
  %655 = vmatpush.bf16.msra.mxu0 %v551
  %656 = vmatpush.bf16.msra.mxu0 %v550
  %657 = vmatpush.bf16.msra.mxu0 %v549
  %658 = vmatmul.bf16.gmra.mxu0 %v244
  %v659 = vpop.f32.mrf.mxu0
  %v660 = vadd.f32 %v647, %v659
  %v661 = vpop.f32.mrf.mxu0
  %662 = vdwg.mxu0
  %663 = vmatpush.bf16.msra.mxu0 %v564
  %664 = vmatpush.bf16.msra.mxu0 %v563
  %665 = vmatpush.bf16.msra.mxu0 %v562
  %666 = vmatpush.bf16.msra.mxu0 %v561
  %667 = vmatpush.bf16.msra.mxu0 %v560
  %668 = vmatpush.bf16.msra.mxu0 %v559
  %669 = vmatpush.bf16.msra.mxu0 %v558
  %670 = vmatpush.bf16.msra.mxu0 %v557
  %671 = vmatmul.bf16.gmra.mxu0 %v245
  %v672 = vpop.f32.mrf.mxu0
  %v673 = vadd.f32 %v660, %v672
  %v674 = vpop.f32.mrf.mxu0
  %675 = vdwg.mxu0
  %676 = vmatpush.bf16.msra.mxu0 %v572
  %677 = vmatpush.bf16.msra.mxu0 %v571
  %678 = vmatpush.bf16.msra.mxu0 %v570
  %679 = vmatpush.bf16.msra.mxu0 %v569
  %680 = vmatpush.bf16.msra.mxu0 %v568
  %681 = vmatpush.bf16.msra.mxu0 %v567
  %682 = vmatpush.bf16.msra.mxu0 %v566
  %683 = vmatpush.bf16.msra.mxu0 %v565
  %684 = vmatmul.bf16.gmra.mxu0 %v246
  %v685 = vpop.f32.mrf.mxu0
  %v686 = vadd.f32 %v673, %v685
  %v687 = vpop.f32.mrf.mxu0
  %688 = vdwg.mxu0
  %689 = vmatpush.bf16.msra.mxu0 %v580
  %690 = vmatpush.bf16.msra.mxu0 %v579
  %691 = vmatpush.bf16.msra.mxu0 %v578
  %692 = vmatpush.bf16.msra.mxu0 %v577
  %693 = vmatpush.bf16.msra.mxu0 %v576
  %694 = vmatpush.bf16.msra.mxu0 %v575
  %695 = vmatpush.bf16.msra.mxu0 %v574
  %696 = vmatpush.bf16.msra.mxu0 %v573
  %697 = vmatmul.bf16.gmra.mxu0 %v247
  %v698 = vpop.f32.mrf.mxu0
  %v699 = vadd.f32 %v686, %v698
  %v700 = vpop.f32.mrf.mxu0
  %701 = vdwg.mxu0
  %702 = vmatpush.bf16.msra.mxu0 %v588
  %703 = vmatpush.bf16.msra.mxu0 %v587
  %704 = vmatpush.bf16.msra.mxu0 %v586
  %705 = vmatpush.bf16.msra.mxu0 %v585
  %706 = vmatpush.bf16.msra.mxu0 %v584
  %707 = vmatpush.bf16.msra.mxu0 %v583
  %708 = vmatpush.bf16.msra.mxu0 %v582
  %709 = vmatpush.bf16.msra.mxu0 %v581
  %710 = vmatmul.bf16.gmra.mxu0 %v248
  %v711 = vpop.f32.mrf.mxu0
  %v712 = vadd.f32 %v699, %v711
  %v713 = vpop.f32.mrf.mxu0
  %714 = vdwg.mxu0
  %vm715 = vcmask 33792
  %716 = vst.msk [vmem:[%s7] sm:$0x3] %vm715, %v712
  // Predicated region
  $region30: #{multitask_esm2_forward.21} parent=0 // pred_check
    _
  $region31: #{multitask_esm2_forward.21} parent=0 // pred_check_branch
    %718 = sbr.rel (0) target = $region33
  $region32: #{multitask_esm2_forward.21} parent=0 // pred_region
    _
  $region33: #{multitask_esm2_forward.21} parent=0 // pred_fallthru
    _
  // Predicated region
  $region34: #{multitask_esm2_forward.21} parent=0 // pred_check
    _
  $region35: #{multitask_esm2_forward.21} parent=0 // pred_check_branch
    %720 = sbr.rel (0) target = $region37
  $region36: #{multitask_esm2_forward.21} parent=0 // pred_region
    _
  $region37: #{multitask_esm2_forward.21} parent=0 // pred_fallthru
    _

</llo_original>
